<compile_context>
chip_gen: v5e
topology: v5e:2x2
jax: 0.10.0
libtpu: 0.0.40
codegen_flags: <defaults>
</compile_context>

<pallas_src>
import numpy as np
import jax
import jax.numpy as jnp
from jax import lax
from jax.experimental import pallas as pl
from jax.experimental.pallas import tpu as pltpu

# Scoped-VMEM budget: per-step footprint of the fused kernel stays ~10 MiB for
# the default config, comfortably inside v7x's 64 MiB physical VMEM.
_VMEM_LIMIT = 32 * 1024 * 1024


def _round_up(n, m):
    return ((n + m - 1) // m) * m


# --------------------- Pallas kernel: tiled matmul+BN+ReLU -------------------
# Used for stage 1 (Conv2d 1->32): im2col is negligible there (Cin == 1), so a
# plain row-tiled matmul with folded BN + ReLU is the right tool.

def _mm_bn_relu_kernel(x_ref, w_ref, s_ref, t_ref, o_ref):
    acc = jnp.dot(x_ref[...], w_ref[...], preferred_element_type=jnp.float32)
    o_ref[...] = jnp.maximum(acc * s_ref[...] + t_ref[...], 0.0).astype(o_ref.dtype)


def matmul_bn_relu(x, w, s, t, *, row_tile=512):
    """relu((x @ w) * s + t).  x:(N,K) bf16, w:(K,C) bf16, s/t:(1,C) f32 -> (N,C) bf16."""
    N, K = x.shape
    C = w.shape[1]
    tn = min(row_tile, _round_up(N, 8))
    Np = _round_up(N, tn)
    xp = jnp.pad(x, ((0, Np - N), (0, 0)))
    out = pl.pallas_call(
        _mm_bn_relu_kernel,
        out_shape=jax.ShapeDtypeStruct((Np, C), jnp.bfloat16),
        grid=(Np // tn,),
        in_specs=[
            pl.BlockSpec((tn, K), lambda i: (i, 0)),
            pl.BlockSpec((K, C), lambda i: (0, 0)),
            pl.BlockSpec((1, C), lambda i: (0, 0)),
            pl.BlockSpec((1, C), lambda i: (0, 0)),
        ],
        out_specs=pl.BlockSpec((tn, C), lambda i: (i, 0)),
        compiler_params=pltpu.CompilerParams(
            dimension_semantics=("parallel",),
            vmem_limit_bytes=_VMEM_LIMIT),
    )(xp, w, s, t)
    return out[:N]


# ------------- Pallas kernel: fused conv2(5x5) + BN + ReLU + grouped 1x1 -----
# One grid step handles one batch element and one tile of output time steps.
# The 25 conv taps are accumulated in VMEM (batched matmuls over the small
# height dim), then the grouped 1x1 conv is applied as a dense block-diagonal
# matmul so the single HBM store is lane-dense along output_dim.

def _fused_stage23_kernel(x_ref, w2_ref, s2_ref, t2_ref, wd_ref, s3_ref, t3_ref, o_ref):
    # x_ref : (1, 10*Hq, tw, 32) bf16  -- kj-shifted / height-phase-split padded act.
    # w2_ref: (25, H2, 32, 64)   bf16  -- conv-2 taps (broadcast over H2)
    # wd_ref: (H2, 64, O)        bf16  -- block-diagonal grouped-1x1 weights
    # s*/t* : folded BatchNorm scale/shift, f32
    # o_ref : (1, tw, O)         f32
    H2 = wd_ref.shape[0]
    Hq = x_ref.shape[1] // 10
    tw = o_ref.shape[1]
    C2 = w2_ref.shape[3]
    O = o_ref.shape[2]

    xblk = x_ref[0]          # (10*Hq, tw, 32)
    w2 = w2_ref[...]         # (25, H2, 32, 64)
    wd = wd_ref[...]         # (H2, 64, O)

    # ---- stage 2: 5x5 conv, stride (2, sw), as 25 in-VMEM shifted batched matmuls ----
    acc = jnp.zeros((H2, tw, C2), jnp.float32)
    for ki in range(5):
        p, dq = ki % 2, ki // 2
        for kj in range(5):
            tap = ki * 5 + kj
            r0 = (2 * kj + p) * Hq + dq              # static row offset
            xs = xblk[r0:r0 + H2]                    # (H2, tw, 32) bf16
            acc = acc + lax.dot_general(
                xs, w2[tap],
                dimension_numbers=(((2,), (1,)), ((0,), (0,))),
                preferred_element_type=jnp.float32)  # (H2, tw, 64)
    a2 = jnp.maximum(acc * s2_ref[...] + t2_ref[...], 0.0).astype(jnp.bfloat16)

    # ---- stage 3: grouped 1x1 conv as dense block-diagonal matmul + BN + ReLU ----
    out = jnp.zeros((tw, O), jnp.float32)
    for h in range(H2):
        out = out + jnp.dot(a2[h], wd[h], preferred_element_type=jnp.float32)
    out = jnp.maximum(out * s3_ref[...] + t3_ref[...], 0.0)
    o_ref[0] = out.astype(o_ref.dtype)


def fused_conv_bn_relu_x2(y1, w2b, s2, t2, wd, s3, t3, *, stride_w, seq_out,
                          time_tile=256):
    """Fused [Conv2d 32->64 (5x5, stride (2, stride_w)) + BN + ReLU] followed by
    [grouped 1x1 Conv1d (block-diag) + BN + ReLU].  y1: (B, H1, W1, 32) bf16.
    Returns (B, seq_out, O) f32, i.e. the module's final output layout."""
    B, H1, W1, C1 = y1.shape
    H2, _, O = wd.shape
    Hq = H2 + 2
    Hpad = 2 * Hq
    tw = min(time_tile, _round_up(seq_out, 8))
    W2p = _round_up(seq_out, tw)
    Wpad = stride_w * (W2p - 1) + 5
    right_pad = max(2, Wpad - 2 - W1)

    # zero-pad (conv padding=2 plus tile alignment), all in bf16
    y1p = jnp.pad(y1, ((0, 0), (2, Hpad - 2 - H1), (2, right_pad), (0, 0)))

    # kj-shifted, width-strided, height-phase-split views of the activation so
    # the kernel only needs static unit-stride slices.
    # TODO(synk): these 5 shifted views are the only remaining materialized
    # intermediate (~5x the stage-1 activation, bf16); removing them entirely
    # needs halo windows (pl.Element offsets or manual make_async_copy).
    views = []
    for kj in range(5):
        for ph in range(2):
            views.append(
                y1p[:, ph:Hpad:2,
                    kj:kj + stride_w * (W2p - 1) + 1:stride_w, :])
    x5 = jnp.concatenate(views, axis=1)              # (B, 10*Hq, W2p, 32) bf16

    out = pl.pallas_call(
        _fused_stage23_kernel,
        out_shape=jax.ShapeDtypeStruct((B, W2p, O), jnp.float32),
        grid=(B, W2p // tw),
        in_specs=[
            pl.BlockSpec((1, 10 * Hq, tw, C1), lambda b, w: (b, 0, w, 0)),
            pl.BlockSpec(w2b.shape, lambda b, w: (0, 0, 0, 0)),
            pl.BlockSpec(s2.shape, lambda b, w: (0, 0, 0)),
            pl.BlockSpec(t2.shape, lambda b, w: (0, 0, 0)),
            pl.BlockSpec(wd.shape, lambda b, w: (0, 0, 0)),
            pl.BlockSpec(s3.shape, lambda b, w: (0, 0)),
            pl.BlockSpec(t3.shape, lambda b, w: (0, 0)),
        ],
        out_specs=pl.BlockSpec((1, tw, O), lambda b, w: (b, w, 0)),
        compiler_params=pltpu.CompilerParams(
            dimension_semantics=("parallel", "parallel"),
            vmem_limit_bytes=_VMEM_LIMIT),
    )(x5, w2b, s2, t2, wd, s3, t3)
    return out[:, :seq_out, :]


# ------------------------------ JAX glue ------------------------------------

def _im2col(x_bhwc, kh, kw, sh, sw, ph, pw):
    """Conv patches; patch feature order is (ki, kj, c) to match OIHW weights."""
    x = jnp.pad(x_bhwc, ((0, 0), (ph, ph), (pw, pw), (0, 0)))
    B, Hp, Wp, C = x.shape
    Ho = (Hp - kh) // sh + 1
    Wo = (Wp - kw) // sw + 1
    cols = []
    for i in range(kh):
        for j in range(kw):
            cols.append(x[:, i:i + sh * Ho:sh, j:j + sw * Wo:sw, :])
    p = jnp.stack(cols, axis=3)                       # (B, Ho, Wo, kh*kw, C)
    return p.reshape(B, Ho, Wo, kh * kw * C), Ho, Wo


def _bn_fold(gamma, beta, mean, var, bias=None, eps=1e-5):
    """Fold eval-mode BatchNorm (+ optional conv bias) into scale/shift."""
    s = gamma / jnp.sqrt(var + eps)
    b = bias if bias is not None else 0.0
    t = (b - mean) * s + beta
    return s, t


# ------------------------------- Module -------------------------------------

class Conv2DLayerPallas:
    def __init__(self, input_dim=40, output_dim=512, stride=1, groups=8,
                 key=jax.random.PRNGKey(0)):
        self.input_dim = input_dim
        self.output_dim = output_dim
        self.stride = stride
        concat_channels = int(np.ceil(input_dim / 4) * 64)
        real_group = 196.0 * input_dim / (1625 - 5 * input_dim)
        if int(2 ** np.ceil(np.log2(real_group))) > groups:
            groups = min(int(2 ** np.ceil(np.log2(real_group))), 64)
        self.groups = groups
        self.concat_channels = concat_channels
        assert concat_channels % groups == 0 and output_dim % groups == 0

        ks = jax.random.split(key, 12)

        def nrm(k, shape, scale=0.1):
            return (scale * jax.random.normal(k, shape)).astype(jnp.float32)

        # conv1 / layer 1: Conv2d(1, 32, 5, stride=(2,1), padding=(2,2)) + BN2d + ReLU
        self.w1 = nrm(ks[0], (32, 1, 5, 5))
        self.b1 = nrm(ks[1], (32,))
        self.g1 = 1.0 + nrm(ks[2], (32,), 0.05)
        self.be1 = nrm(ks[3], (32,), 0.05)
        self.m1 = nrm(ks[4], (32,), 0.05)
        self.v1 = 1.0 + jnp.abs(nrm(ks[5], (32,), 0.05))
        # conv1 / layer 2: Conv2d(32, 64, 5, stride=(2, stride), padding=(2,2)) + BN2d + ReLU
        self.w2 = nrm(ks[6], (64, 32, 5, 5), 0.05)
        self.b2 = nrm(ks[7], (64,))
        self.g2 = 1.0 + nrm(ks[8], (64,), 0.05)
        self.be2 = nrm(ks[9], (64,), 0.05)
        self.m2 = nrm(ks[10], (64,), 0.05)
        self.v2 = 1.0 + jnp.abs(nrm(ks[11], (64,), 0.05))
        # conv2: Conv1d(concat, output_dim, k=1, groups, bias=False) + BN1d + ReLU
        ks2 = jax.random.split(jax.random.fold_in(key, 1), 5)
        self.w3 = nrm(ks2[0], (output_dim, concat_channels // groups, 1), 0.05)
        self.g3 = 1.0 + nrm(ks2[1], (output_dim,), 0.05)
        self.be3 = nrm(ks2[2], (output_dim,), 0.05)
        self.m3 = nrm(ks2[3], (output_dim,), 0.05)
        self.v3 = 1.0 + jnp.abs(nrm(ks2[4], (output_dim,), 0.05))

    def __call__(self, x):
        # x: (B, T, F) float32
        B, T, F = x.shape
        assert F == self.input_dim
        # PyTorch: unsqueeze(1).transpose(2,3) -> (B, 1, F, T); channels-last (B, F, T, 1)
        h = jnp.transpose(x, (0, 2, 1))[..., None]

        # --- stage 1: Conv2d(1->32, 5x5, stride=(2,1), pad=(2,2)) + BN + ReLU ---
        p, H1, W1 = _im2col(h, 5, 5, 2, 1, 2, 2)              # (B, H1, W1, 25)
        patches = p.reshape(B * H1 * W1, 25)
        patches = jnp.pad(patches, ((0, 0), (0, 7))).astype(jnp.bfloat16)   # K 25->32
        w1m = jnp.transpose(self.w1, (2, 3, 1, 0)).reshape(25, 32)
        w1m = jnp.pad(w1m, ((0, 7), (0, 0))).astype(jnp.bfloat16)
        s1, t1 = _bn_fold(self.g1, self.be1, self.m1, self.v1, self.b1)
        y1 = matmul_bn_relu(patches, w1m, s1.reshape(1, 32), t1.reshape(1, 32))
        y1 = y1.reshape(B, H1, W1, 32)                         # bf16 activation

        # --- stages 2+3 fused in one pallas_call ---
        H2 = self.concat_channels // 64                        # = ceil(H1/2)
        sw = self.stride
        W2 = (W1 - 1) // sw + 1

        # conv-2 weights as 25 taps (OIHW -> [tap, Cin, Cout]), broadcast over H2
        w2t = jnp.transpose(self.w2, (2, 3, 1, 0)).reshape(25, 32, 64)
        w2b = jnp.broadcast_to(w2t[:, None, :, :],
                               (25, H2, 32, 64)).astype(jnp.bfloat16)
        s2, t2 = _bn_fold(self.g2, self.be2, self.m2, self.v2, self.b2)

        # grouped 1x1 conv -> dense block-diagonal (Cc, O), rows reordered to the
        # (h2, c2) flatten used in-kernel; lane-dense output of width O.
        G, O = self.groups, self.output_dim
        Cc = 64 * H2
        Cg, Og = Cc // G, O // G
        w3 = self.w3[:, :, 0]                                  # (O, Cg)
        wdense = jnp.zeros((Cc, O), jnp.float32)
        for g in range(G):
            wdense = wdense.at[g * Cg:(g + 1) * Cg, g * Og:(g + 1) * Og].set(
                w3[g * Og:(g + 1) * Og, :].T)
        wd = jnp.transpose(wdense.reshape(64, H2, O), (1, 0, 2)).astype(jnp.bfloat16)
        s3, t3 = _bn_fold(self.g3, self.be3, self.m3, self.v3)

        return fused_conv_bn_relu_x2(
            y1, w2b, s2.reshape(1, 1, 64), t2.reshape(1, 1, 64),
            wd, s3.reshape(1, O), t3.reshape(1, O),
            stride_w=sw, seq_out=W2)


# ------------------------ pure-JAX reference (lax conv) ----------------------

def reference_forward(layer, x):
    x4 = jnp.transpose(x[:, None, :, :], (0, 1, 3, 2))   # (B, 1, F, T), NCHW

    def bn(y, g, b, m, v, eps=1e-5):
        shp = (1, -1) + (1,) * (y.ndim - 2)
        return g.reshape(shp) * (y - m.reshape(shp)) / jnp.sqrt(v.reshape(shp) + eps) + b.reshape(shp)

    y = lax.conv_general_dilated(x4, layer.w1, (2, 1), [(2, 2), (2, 2)],
                                 dimension_numbers=('NCHW', 'OIHW', 'NCHW'))
    y = jnp.maximum(bn(y + layer.b1[None, :, None, None],
                       layer.g1, layer.be1, layer.m1, layer.v1), 0.0)
    y = lax.conv_general_dilated(y, layer.w2, (2, layer.stride), [(2, 2), (2, 2)],
                                 dimension_numbers=('NCHW', 'OIHW', 'NCHW'))
    y = jnp.maximum(bn(y + layer.b2[None, :, None, None],
                       layer.g2, layer.be2, layer.m2, layer.v2), 0.0)
    Bx, C, H2, Tx = y.shape
    y = y.reshape(Bx, C * H2, Tx)
    y = lax.conv_general_dilated(y, layer.w3, (1,), [(0, 0)],
                                 dimension_numbers=('NCH', 'OIH', 'NCH'),
                                 feature_group_count=layer.groups)
    y = jnp.maximum(bn(y, layer.g3, layer.be3, layer.m3, layer.v3), 0.0)
    return jnp.transpose(y, (0, 2, 1))


if __name__ == "__main__":
    key = jax.random.PRNGKey(0)
    kx, kp = jax.random.split(key)
    B, T, F = 2, 16, 16          # small shapes: (batch, seq_len, input_features)
    layer = Conv2DLayerPallas(input_dim=F, output_dim=64, stride=1, groups=8, key=kp)
    x = jax.random.normal(kx, (B, T, F), dtype=jnp.float32)

    out = jax.block_until_ready(jax.jit(layer.__call__)(x))
    ref = jax.block_until_ready(reference_forward(layer, x))

    assert out.shape == (B, T, 64), out.shape
    # bf16 matmul operands (f32 accumulation) -> looser tolerance than pure f32.
    assert bool(jnp.allclose(out, ref, rtol=5e-2, atol=3e-2)), "mismatch vs reference"
    print("KERNEL_OK")
</pallas_src>

<mosaic_0001>
module attributes {stable_mosaic.version = 11 : i64} {
  func.func @_mm_bn_relu_kernel(%arg0: i32, %arg1: memref<256x32xbf16, #tpu.memory_space<vmem>>, %arg2: memref<32x32xbf16, #tpu.memory_space<vmem>>, %arg3: memref<1x32xf32, #tpu.memory_space<vmem>>, %arg4: memref<1x32xf32, #tpu.memory_space<vmem>>, %arg5: memref<256x32xbf16, #tpu.memory_space<vmem>>) attributes {dimension_semantics = [#tpu.dimension_semantics<parallel>], iteration_bounds = array<i64: 1>, scalar_prefetch = 0 : i64, scratch_operands = 0 : i64, tpu.core_type = #tpu.core_type<tc>, window_params = [{transform_indices = @transform_0, window_bounds = array<i64: 256, 32>}, {pipeline_mode = #tpu.pipeline_mode<synchronous>, transform_indices = @transform_1, window_bounds = array<i64: 32, 32>}, {pipeline_mode = #tpu.pipeline_mode<synchronous>, transform_indices = @transform_2, window_bounds = array<i64: 1, 32>}, {pipeline_mode = #tpu.pipeline_mode<synchronous>, transform_indices = @transform_3, window_bounds = array<i64: 1, 32>}, {transform_indices = @transform_4, window_bounds = array<i64: 256, 32>}]} {
    %c0 = arith.constant 0 : index
    %c0_0 = arith.constant 0 : index
    %0 = vector.load %arg1[%c0, %c0_0] : memref<256x32xbf16, #tpu.memory_space<vmem>>, vector<256x32xbf16>
    %c0_1 = arith.constant 0 : index
    %c0_2 = arith.constant 0 : index
    %1 = vector.load %arg2[%c0_1, %c0_2] : memref<32x32xbf16, #tpu.memory_space<vmem>>, vector<32x32xbf16>
    %cst = arith.constant dense<0.000000e+00> : vector<256x32xf32>
    %2 = tpu.matmul %0, %1, %cst {dimension_numbers = #tpu.dot_dimension_numbers<[1], [0], [0], [1], [0, 0, 1, 1], [], []>} : vector<256x32xbf16>, vector<32x32xbf16>, vector<256x32xf32> -> vector<256x32xf32>
    %c0_3 = arith.constant 0 : index
    %c0_4 = arith.constant 0 : index
    %3 = vector.load %arg3[%c0_3, %c0_4] : memref<1x32xf32, #tpu.memory_space<vmem>>, vector<1x32xf32>
    %4 = vector.broadcast %3 : vector<1x32xf32> to vector<256x32xf32>
    %5 = arith.mulf %2, %4 : vector<256x32xf32>
    %c0_5 = arith.constant 0 : index
    %c0_6 = arith.constant 0 : index
    %6 = vector.load %arg4[%c0_5, %c0_6] : memref<1x32xf32, #tpu.memory_space<vmem>>, vector<1x32xf32>
    %7 = vector.broadcast %6 : vector<1x32xf32> to vector<256x32xf32>
    %8 = arith.addf %5, %7 : vector<256x32xf32>
    %cst_7 = arith.constant 0.000000e+00 : f32
    %9 = vector.broadcast %cst_7 : f32 to vector<256x32xf32>
    %10 = arith.maximumf %8, %9 : vector<256x32xf32>
    %11 = arith.truncf %10 : vector<256x32xf32> to vector<256x32xbf16>
    %c0_8 = arith.constant 0 : index
    %c0_9 = arith.constant 0 : index
    %12 = vector.load %arg5[%c0_8, %c0_9] : memref<256x32xbf16, #tpu.memory_space<vmem>>, vector<256x32xbf16>
    tpu.vector_store %arg5[%c0_8, %c0_9], %11 {strides = array<i32>} : memref<256x32xbf16, #tpu.memory_space<vmem>>, vector<256x32xbf16>,
    return
  }
  func.func @transform_0(%arg0: i32) -> (i32, i32) {
    %c0_i32 = arith.constant 0 : i32
    %c0_i32_0 = arith.constant 0 : i32
    return %arg0, %c0_i32 : i32, i32
  }
  func.func @transform_1(%arg0: i32) -> (i32, i32) {
    %c0_i32 = arith.constant 0 : i32
    %c0_i32_0 = arith.constant 0 : i32
    %c0_i32_1 = arith.constant 0 : i32
    return %c0_i32, %c0_i32_0 : i32, i32
  }
  func.func @transform_2(%arg0: i32) -> (i32, i32) {
    %c0_i32 = arith.constant 0 : i32
    %c0_i32_0 = arith.constant 0 : i32
    %c0_i32_1 = arith.constant 0 : i32
    return %c0_i32, %c0_i32_0 : i32, i32
  }
  func.func @transform_3(%arg0: i32) -> (i32, i32) {
    %c0_i32 = arith.constant 0 : i32
    %c0_i32_0 = arith.constant 0 : i32
    %c0_i32_1 = arith.constant 0 : i32
    return %c0_i32, %c0_i32_0 : i32, i32
  }
  func.func @transform_4(%arg0: i32) -> (i32, i32) {
    %c0_i32 = arith.constant 0 : i32
    %c0_i32_0 = arith.constant 0 : i32
    return %arg0, %c0_i32 : i32, i32
  }
}

module attributes {stable_mosaic.version = 11 : i64} {
  func.func @_fused_stage23_kernel(%arg0: i32, %arg1: i32, %arg2: memref<1x60x16x32xbf16, #tpu.memory_space<vmem>>, %arg3: memref<25x4x32x64xbf16, #tpu.memory_space<vmem>>, %arg4: memref<1x1x64xf32, #tpu.memory_space<vmem>>, %arg5: memref<1x1x64xf32, #tpu.memory_space<vmem>>, %arg6: memref<4x64x64xbf16, #tpu.memory_space<vmem>>, %arg7: memref<1x64xf32, #tpu.memory_space<vmem>>, %arg8: memref<1x64xf32, #tpu.memory_space<vmem>>, %arg9: memref<1x16x64xf32, #tpu.memory_space<vmem>>) attributes {dimension_semantics = [#tpu.dimension_semantics<parallel>, #tpu.dimension_semantics<parallel>], iteration_bounds = array<i64: 2, 1>, scalar_prefetch = 0 : i64, scratch_operands = 0 : i64, tpu.core_type = #tpu.core_type<tc>, window_params = [{transform_indices = @transform_0, window_bounds = array<i64: 1, 60, 16, 32>}, {pipeline_mode = #tpu.pipeline_mode<synchronous>, transform_indices = @transform_1, window_bounds = array<i64: 25, 4, 32, 64>}, {pipeline_mode = #tpu.pipeline_mode<synchronous>, transform_indices = @transform_2, window_bounds = array<i64: 1, 1, 64>}, {pipeline_mode = #tpu.pipeline_mode<synchronous>, transform_indices = @transform_3, window_bounds = array<i64: 1, 1, 64>}, {pipeline_mode = #tpu.pipeline_mode<synchronous>, transform_indices = @transform_4, window_bounds = array<i64: 4, 64, 64>}, {pipeline_mode = #tpu.pipeline_mode<synchronous>, transform_indices = @transform_5, window_bounds = array<i64: 1, 64>}, {pipeline_mode = #tpu.pipeline_mode<synchronous>, transform_indices = @transform_6, window_bounds = array<i64: 1, 64>}, {transform_indices = @transform_7, window_bounds = array<i64: 1, 16, 64>}]} {
    %c0 = arith.constant 0 : index
    %c0_0 = arith.constant 0 : index
    %c0_1 = arith.constant 0 : index
    %c0_2 = arith.constant 0 : index
    %0 = vector.load %arg2[%c0, %c0_0, %c0_1, %c0_2] : memref<1x60x16x32xbf16, #tpu.memory_space<vmem>>, vector<1x60x16x32xbf16>
    %1 = vector.shape_cast %0 : vector<1x60x16x32xbf16> to vector<60x16x32xbf16>
    %c0_3 = arith.constant 0 : index
    %c0_4 = arith.constant 0 : index
    %c0_5 = arith.constant 0 : index
    %c0_6 = arith.constant 0 : index
    %2 = vector.load %arg3[%c0_3, %c0_4, %c0_5, %c0_6] : memref<25x4x32x64xbf16, #tpu.memory_space<vmem>>, vector<25x4x32x64xbf16>
    %c0_7 = arith.constant 0 : index
    %c0_8 = arith.constant 0 : index
    %c0_9 = arith.constant 0 : index
    %3 = vector.load %arg6[%c0_7, %c0_8, %c0_9] : memref<4x64x64xbf16, #tpu.memory_space<vmem>>, vector<4x64x64xbf16>
    %cst = arith.constant 0.000000e+00 : f32
    %4 = vector.broadcast %cst : f32 to vector<4x16x64xf32>
    %5 = vector.extract_strided_slice %1 {offsets = [0, 0, 0], sizes = [4, 16, 32], strides = [1, 1, 1]} : vector<60x16x32xbf16> to vector<4x16x32xbf16>
    %6 = vector.extract_strided_slice %2 {offsets = [0, 0, 0, 0], sizes = [1, 4, 32, 64], strides = [1, 1, 1, 1]} : vector<25x4x32x64xbf16> to vector<1x4x32x64xbf16>
    %7 = vector.shape_cast %6 : vector<1x4x32x64xbf16> to vector<4x32x64xbf16>
    %cst_10 = arith.constant dense<0.000000e+00> : vector<4x16x64xf32>
    %8 = tpu.matmul %5, %7, %cst_10 {dimension_numbers = #tpu.dot_dimension_numbers<[2], [1], [1], [2], [0, 0, 0, 1, 1, 2], [0], [0]>} : vector<4x16x32xbf16>, vector<4x32x64xbf16>, vector<4x16x64xf32> -> vector<4x16x64xf32>
    %9 = arith.addf %4, %8 : vector<4x16x64xf32>
    %10 = vector.extract_strided_slice %1 {offsets = [12, 0, 0], sizes = [4, 16, 32], strides = [1, 1, 1]} : vector<60x16x32xbf16> to vector<4x16x32xbf16>
    %11 = vector.extract_strided_slice %2 {offsets = [1, 0, 0, 0], sizes = [1, 4, 32, 64], strides = [1, 1, 1, 1]} : vector<25x4x32x64xbf16> to vector<1x4x32x64xbf16>
    %12 = vector.shape_cast %11 : vector<1x4x32x64xbf16> to vector<4x32x64xbf16>
    %cst_11 = arith.constant dense<0.000000e+00> : vector<4x16x64xf32>
    %13 = tpu.matmul %10, %12, %cst_11 {dimension_numbers = #tpu.dot_dimension_numbers<[2], [1], [1], [2], [0, 0, 0, 1, 1, 2], [0], [0]>} : vector<4x16x32xbf16>, vector<4x32x64xbf16>, vector<4x16x64xf32> -> vector<4x16x64xf32>
    %14 = arith.addf %9, %13 : vector<4x16x64xf32>
    %15 = vector.extract_strided_slice %1 {offsets = [24, 0, 0], sizes = [4, 16, 32], strides = [1, 1, 1]} : vector<60x16x32xbf16> to vector<4x16x32xbf16>
    %16 = vector.extract_strided_slice %2 {offsets = [2, 0, 0, 0], sizes = [1, 4, 32, 64], strides = [1, 1, 1, 1]} : vector<25x4x32x64xbf16> to vector<1x4x32x64xbf16>
    %17 = vector.shape_cast %16 : vector<1x4x32x64xbf16> to vector<4x32x64xbf16>
    %cst_12 = arith.constant dense<0.000000e+00> : vector<4x16x64xf32>
    %18 = tpu.matmul %15, %17, %cst_12 {dimension_numbers = #tpu.dot_dimension_numbers<[2], [1], [1], [2], [0, 0, 0, 1, 1, 2], [0], [0]>} : vector<4x16x32xbf16>, vector<4x32x64xbf16>, vector<4x16x64xf32> -> vector<4x16x64xf32>
    %19 = arith.addf %14, %18 : vector<4x16x64xf32>
    %20 = vector.extract_strided_slice %1 {offsets = [36, 0, 0], sizes = [4, 16, 32], strides = [1, 1, 1]} : vector<60x16x32xbf16> to vector<4x16x32xbf16>
    %21 = vector.extract_strided_slice %2 {offsets = [3, 0, 0, 0], sizes = [1, 4, 32, 64], strides = [1, 1, 1, 1]} : vector<25x4x32x64xbf16> to vector<1x4x32x64xbf16>
    %22 = vector.shape_cast %21 : vector<1x4x32x64xbf16> to vector<4x32x64xbf16>
    %cst_13 = arith.constant dense<0.000000e+00> : vector<4x16x64xf32>
    %23 = tpu.matmul %20, %22, %cst_13 {dimension_numbers = #tpu.dot_dimension_numbers<[2], [1], [1], [2], [0, 0, 0, 1, 1, 2], [0], [0]>} : vector<4x16x32xbf16>, vector<4x32x64xbf16>, vector<4x16x64xf32> -> vector<4x16x64xf32>
    %24 = arith.addf %19, %23 : vector<4x16x64xf32>
    %25 = vector.extract_strided_slice %1 {offsets = [48, 0, 0], sizes = [4, 16, 32], strides = [1, 1, 1]} : vector<60x16x32xbf16> to vector<4x16x32xbf16>
    %26 = vector.extract_strided_slice %2 {offsets = [4, 0, 0, 0], sizes = [1, 4, 32, 64], strides = [1, 1, 1, 1]} : vector<25x4x32x64xbf16> to vector<1x4x32x64xbf16>
    %27 = vector.shape_cast %26 : vector<1x4x32x64xbf16> to vector<4x32x64xbf16>
    %cst_14 = arith.constant dense<0.000000e+00> : vector<4x16x64xf32>
    %28 = tpu.matmul %25, %27, %cst_14 {dimension_numbers = #tpu.dot_dimension_numbers<[2], [1], [1], [2], [0, 0, 0, 1, 1, 2], [0], [0]>} : vector<4x16x32xbf16>, vector<4x32x64xbf16>, vector<4x16x64xf32> -> vector<4x16x64xf32>
    %29 = arith.addf %24, %28 : vector<4x16x64xf32>
    %30 = vector.extract_strided_slice %1 {offsets = [6, 0, 0], sizes = [4, 16, 32], strides = [1, 1, 1]} : vector<60x16x32xbf16> to vector<4x16x32xbf16>
    %31 = vector.extract_strided_slice %2 {offsets = [5, 0, 0, 0], sizes = [1, 4, 32, 64], strides = [1, 1, 1, 1]} : vector<25x4x32x64xbf16> to vector<1x4x32x64xbf16>
    %32 = vector.shape_cast %31 : vector<1x4x32x64xbf16> to vector<4x32x64xbf16>
    %cst_15 = arith.constant dense<0.000000e+00> : vector<4x16x64xf32>
    %33 = tpu.matmul %30, %32, %cst_15 {dimension_numbers = #tpu.dot_dimension_numbers<[2], [1], [1], [2], [0, 0, 0, 1, 1, 2], [0], [0]>} : vector<4x16x32xbf16>, vector<4x32x64xbf16>, vector<4x16x64xf32> -> vector<4x16x64xf32>
    %34 = arith.addf %29, %33 : vector<4x16x64xf32>
    %35 = vector.extract_strided_slice %1 {offsets = [18, 0, 0], sizes = [4, 16, 32], strides = [1, 1, 1]} : vector<60x16x32xbf16> to vector<4x16x32xbf16>
    %36 = vector.extract_strided_slice %2 {offsets = [6, 0, 0, 0], sizes = [1, 4, 32, 64], strides = [1, 1, 1, 1]} : vector<25x4x32x64xbf16> to vector<1x4x32x64xbf16>
    %37 = vector.shape_cast %36 : vector<1x4x32x64xbf16> to vector<4x32x64xbf16>
    %cst_16 = arith.constant dense<0.000000e+00> : vector<4x16x64xf32>
    %38 = tpu.matmul %35, %37, %cst_16 {dimension_numbers = #tpu.dot_dimension_numbers<[2], [1], [1], [2], [0, 0, 0, 1, 1, 2], [0], [0]>} : vector<4x16x32xbf16>, vector<4x32x64xbf16>, vector<4x16x64xf32> -> vector<4x16x64xf32>
    %39 = arith.addf %34, %38 : vector<4x16x64xf32>
    %40 = vector.extract_strided_slice %1 {offsets = [30, 0, 0], sizes = [4, 16, 32], strides = [1, 1, 1]} : vector<60x16x32xbf16> to vector<4x16x32xbf16>
    %41 = vector.extract_strided_slice %2 {offsets = [7, 0, 0, 0], sizes = [1, 4, 32, 64], strides = [1, 1, 1, 1]} : vector<25x4x32x64xbf16> to vector<1x4x32x64xbf16>
    %42 = vector.shape_cast %41 : vector<1x4x32x64xbf16> to vector<4x32x64xbf16>
    %cst_17 = arith.constant dense<0.000000e+00> : vector<4x16x64xf32>
    %43 = tpu.matmul %40, %42, %cst_17 {dimension_numbers = #tpu.dot_dimension_numbers<[2], [1], [1], [2], [0, 0, 0, 1, 1, 2], [0], [0]>} : vector<4x16x32xbf16>, vector<4x32x64xbf16>, vector<4x16x64xf32> -> vector<4x16x64xf32>
    %44 = arith.addf %39, %43 : vector<4x16x64xf32>
    %45 = vector.extract_strided_slice %1 {offsets = [42, 0, 0], sizes = [4, 16, 32], strides = [1, 1, 1]} : vector<60x16x32xbf16> to vector<4x16x32xbf16>
    %46 = vector.extract_strided_slice %2 {offsets = [8, 0, 0, 0], sizes = [1, 4, 32, 64], strides = [1, 1, 1, 1]} : vector<25x4x32x64xbf16> to vector<1x4x32x64xbf16>
    %47 = vector.shape_cast %46 : vector<1x4x32x64xbf16> to vector<4x32x64xbf16>
    %cst_18 = arith.constant dense<0.000000e+00> : vector<4x16x64xf32>
    %48 = tpu.matmul %45, %47, %cst_18 {dimension_numbers = #tpu.dot_dimension_numbers<[2], [1], [1], [2], [0, 0, 0, 1, 1, 2], [0], [0]>} : vector<4x16x32xbf16>, vector<4x32x64xbf16>, vector<4x16x64xf32> -> vector<4x16x64xf32>
    %49 = arith.addf %44, %48 : vector<4x16x64xf32>
    %50 = vector.extract_strided_slice %1 {offsets = [54, 0, 0], sizes = [4, 16, 32], strides = [1, 1, 1]} : vector<60x16x32xbf16> to vector<4x16x32xbf16>
    %51 = vector.extract_strided_slice %2 {offsets = [9, 0, 0, 0], sizes = [1, 4, 32, 64], strides = [1, 1, 1, 1]} : vector<25x4x32x64xbf16> to vector<1x4x32x64xbf16>
    %52 = vector.shape_cast %51 : vector<1x4x32x64xbf16> to vector<4x32x64xbf16>
    %cst_19 = arith.constant dense<0.000000e+00> : vector<4x16x64xf32>
    %53 = tpu.matmul %50, %52, %cst_19 {dimension_numbers = #tpu.dot_dimension_numbers<[2], [1], [1], [2], [0, 0, 0, 1, 1, 2], [0], [0]>} : vector<4x16x32xbf16>, vector<4x32x64xbf16>, vector<4x16x64xf32> -> vector<4x16x64xf32>
    %54 = arith.addf %49, %53 : vector<4x16x64xf32>
    %55 = vector.extract_strided_slice %1 {offsets = [1, 0, 0], sizes = [4, 16, 32], strides = [1, 1, 1]} : vector<60x16x32xbf16> to vector<4x16x32xbf16>
    %56 = vector.extract_strided_slice %2 {offsets = [10, 0, 0, 0], sizes = [1, 4, 32, 64], strides = [1, 1, 1, 1]} : vector<25x4x32x64xbf16> to vector<1x4x32x64xbf16>
    %57 = vector.shape_cast %56 : vector<1x4x32x64xbf16> to vector<4x32x64xbf16>
    %cst_20 = arith.constant dense<0.000000e+00> : vector<4x16x64xf32>
    %58 = tpu.matmul %55, %57, %cst_20 {dimension_numbers = #tpu.dot_dimension_numbers<[2], [1], [1], [2], [0, 0, 0, 1, 1, 2], [0], [0]>} : vector<4x16x32xbf16>, vector<4x32x64xbf16>, vector<4x16x64xf32> -> vector<4x16x64xf32>
    %59 = arith.addf %54, %58 : vector<4x16x64xf32>
    %60 = vector.extract_strided_slice %1 {offsets = [13, 0, 0], sizes = [4, 16, 32], strides = [1, 1, 1]} : vector<60x16x32xbf16> to vector<4x16x32xbf16>
    %61 = vector.extract_strided_slice %2 {offsets = [11, 0, 0, 0], sizes = [1, 4, 32, 64], strides = [1, 1, 1, 1]} : vector<25x4x32x64xbf16> to vector<1x4x32x64xbf16>
    %62 = vector.shape_cast %61 : vector<1x4x32x64xbf16> to vector<4x32x64xbf16>
    %cst_21 = arith.constant dense<0.000000e+00> : vector<4x16x64xf32>
    %63 = tpu.matmul %60, %62, %cst_21 {dimension_numbers = #tpu.dot_dimension_numbers<[2], [1], [1], [2], [0, 0, 0, 1, 1, 2], [0], [0]>} : vector<4x16x32xbf16>, vector<4x32x64xbf16>, vector<4x16x64xf32> -> vector<4x16x64xf32>
    %64 = arith.addf %59, %63 : vector<4x16x64xf32>
    %65 = vector.extract_strided_slice %1 {offsets = [25, 0, 0], sizes = [4, 16, 32], strides = [1, 1, 1]} : vector<60x16x32xbf16> to vector<4x16x32xbf16>
    %66 = vector.extract_strided_slice %2 {offsets = [12, 0, 0, 0], sizes = [1, 4, 32, 64], strides = [1, 1, 1, 1]} : vector<25x4x32x64xbf16> to vector<1x4x32x64xbf16>
    %67 = vector.shape_cast %66 : vector<1x4x32x64xbf16> to vector<4x32x64xbf16>
    %cst_22 = arith.constant dense<0.000000e+00> : vector<4x16x64xf32>
    %68 = tpu.matmul %65, %67, %cst_22 {dimension_numbers = #tpu.dot_dimension_numbers<[2], [1], [1], [2], [0, 0, 0, 1, 1, 2], [0], [0]>} : vector<4x16x32xbf16>, vector<4x32x64xbf16>, vector<4x16x64xf32> -> vector<4x16x64xf32>
    %69 = arith.addf %64, %68 : vector<4x16x64xf32>
    %70 = vector.extract_strided_slice %1 {offsets = [37, 0, 0], sizes = [4, 16, 32], strides = [1, 1, 1]} : vector<60x16x32xbf16> to vector<4x16x32xbf16>
    %71 = vector.extract_strided_slice %2 {offsets = [13, 0, 0, 0], sizes = [1, 4, 32, 64], strides = [1, 1, 1, 1]} : vector<25x4x32x64xbf16> to vector<1x4x32x64xbf16>
    %72 = vector.shape_cast %71 : vector<1x4x32x64xbf16> to vector<4x32x64xbf16>
    %cst_23 = arith.constant dense<0.000000e+00> : vector<4x16x64xf32>
    %73 = tpu.matmul %70, %72, %cst_23 {dimension_numbers = #tpu.dot_dimension_numbers<[2], [1], [1], [2], [0, 0, 0, 1, 1, 2], [0], [0]>} : vector<4x16x32xbf16>, vector<4x32x64xbf16>, vector<4x16x64xf32> -> vector<4x16x64xf32>
    %74 = arith.addf %69, %73 : vector<4x16x64xf32>
    %75 = vector.extract_strided_slice %1 {offsets = [49, 0, 0], sizes = [4, 16, 32], strides = [1, 1, 1]} : vector<60x16x32xbf16> to vector<4x16x32xbf16>
    %76 = vector.extract_strided_slice %2 {offsets = [14, 0, 0, 0], sizes = [1, 4, 32, 64], strides = [1, 1, 1, 1]} : vector<25x4x32x64xbf16> to vector<1x4x32x64xbf16>
    %77 = vector.shape_cast %76 : vector<1x4x32x64xbf16> to vector<4x32x64xbf16>
    %cst_24 = arith.constant dense<0.000000e+00> : vector<4x16x64xf32>
    %78 = tpu.matmul %75, %77, %cst_24 {dimension_numbers = #tpu.dot_dimension_numbers<[2], [1], [1], [2], [0, 0, 0, 1, 1, 2], [0], [0]>} : vector<4x16x32xbf16>, vector<4x32x64xbf16>, vector<4x16x64xf32> -> vector<4x16x64xf32>
    %79 = arith.addf %74, %78 : vector<4x16x64xf32>
    %80 = vector.extract_strided_slice %1 {offsets = [7, 0, 0], sizes = [4, 16, 32], strides = [1, 1, 1]} : vector<60x16x32xbf16> to vector<4x16x32xbf16>
    %81 = vector.extract_strided_slice %2 {offsets = [15, 0, 0, 0], sizes = [1, 4, 32, 64], strides = [1, 1, 1, 1]} : vector<25x4x32x64xbf16> to vector<1x4x32x64xbf16>
    %82 = vector.shape_cast %81 : vector<1x4x32x64xbf16> to vector<4x32x64xbf16>
    %cst_25 = arith.constant dense<0.000000e+00> : vector<4x16x64xf32>
    %83 = tpu.matmul %80, %82, %cst_25 {dimension_numbers = #tpu.dot_dimension_numbers<[2], [1], [1], [2], [0, 0, 0, 1, 1, 2], [0], [0]>} : vector<4x16x32xbf16>, vector<4x32x64xbf16>, vector<4x16x64xf32> -> vector<4x16x64xf32>
    %84 = arith.addf %79, %83 : vector<4x16x64xf32>
    %85 = vector.extract_strided_slice %1 {offsets = [19, 0, 0], sizes = [4, 16, 32], strides = [1, 1, 1]} : vector<60x16x32xbf16> to vector<4x16x32xbf16>
    %86 = vector.extract_strided_slice %2 {offsets = [16, 0, 0, 0], sizes = [1, 4, 32, 64], strides = [1, 1, 1, 1]} : vector<25x4x32x64xbf16> to vector<1x4x32x64xbf16>
    %87 = vector.shape_cast %86 : vector<1x4x32x64xbf16> to vector<4x32x64xbf16>
    %cst_26 = arith.constant dense<0.000000e+00> : vector<4x16x64xf32>
    %88 = tpu.matmul %85, %87, %cst_26 {dimension_numbers = #tpu.dot_dimension_numbers<[2], [1], [1], [2], [0, 0, 0, 1, 1, 2], [0], [0]>} : vector<4x16x32xbf16>, vector<4x32x64xbf16>, vector<4x16x64xf32> -> vector<4x16x64xf32>
    %89 = arith.addf %84, %88 : vector<4x16x64xf32>
    %90 = vector.extract_strided_slice %1 {offsets = [31, 0, 0], sizes = [4, 16, 32], strides = [1, 1, 1]} : vector<60x16x32xbf16> to vector<4x16x32xbf16>
    %91 = vector.extract_strided_slice %2 {offsets = [17, 0, 0, 0], sizes = [1, 4, 32, 64], strides = [1, 1, 1, 1]} : vector<25x4x32x64xbf16> to vector<1x4x32x64xbf16>
    %92 = vector.shape_cast %91 : vector<1x4x32x64xbf16> to vector<4x32x64xbf16>
    %cst_27 = arith.constant dense<0.000000e+00> : vector<4x16x64xf32>
    %93 = tpu.matmul %90, %92, %cst_27 {dimension_numbers = #tpu.dot_dimension_numbers<[2], [1], [1], [2], [0, 0, 0, 1, 1, 2], [0], [0]>} : vector<4x16x32xbf16>, vector<4x32x64xbf16>, vector<4x16x64xf32> -> vector<4x16x64xf32>
    %94 = arith.addf %89, %93 : vector<4x16x64xf32>
    %95 = vector.extract_strided_slice %1 {offsets = [43, 0, 0], sizes = [4, 16, 32], strides = [1, 1, 1]} : vector<60x16x32xbf16> to vector<4x16x32xbf16>
    %96 = vector.extract_strided_slice %2 {offsets = [18, 0, 0, 0], sizes = [1, 4, 32, 64], strides = [1, 1, 1, 1]} : vector<25x4x32x64xbf16> to vector<1x4x32x64xbf16>
    %97 = vector.shape_cast %96 : vector<1x4x32x64xbf16> to vector<4x32x64xbf16>
    %cst_28 = arith.constant dense<0.000000e+00> : vector<4x16x64xf32>
    %98 = tpu.matmul %95, %97, %cst_28 {dimension_numbers = #tpu.dot_dimension_numbers<[2], [1], [1], [2], [0, 0, 0, 1, 1, 2], [0], [0]>} : vector<4x16x32xbf16>, vector<4x32x64xbf16>, vector<4x16x64xf32> -> vector<4x16x64xf32>
    %99 = arith.addf %94, %98 : vector<4x16x64xf32>
    %100 = vector.extract_strided_slice %1 {offsets = [55, 0, 0], sizes = [4, 16, 32], strides = [1, 1, 1]} : vector<60x16x32xbf16> to vector<4x16x32xbf16>
    %101 = vector.extract_strided_slice %2 {offsets = [19, 0, 0, 0], sizes = [1, 4, 32, 64], strides = [1, 1, 1, 1]} : vector<25x4x32x64xbf16> to vector<1x4x32x64xbf16>
    %102 = vector.shape_cast %101 : vector<1x4x32x64xbf16> to vector<4x32x64xbf16>
    %cst_29 = arith.constant dense<0.000000e+00> : vector<4x16x64xf32>
    %103 = tpu.matmul %100, %102, %cst_29 {dimension_numbers = #tpu.dot_dimension_numbers<[2], [1], [1], [2], [0, 0, 0, 1, 1, 2], [0], [0]>} : vector<4x16x32xbf16>, vector<4x32x64xbf16>, vector<4x16x64xf32> -> vector<4x16x64xf32>
    %104 = arith.addf %99, %103 : vector<4x16x64xf32>
    %105 = vector.extract_strided_slice %1 {offsets = [2, 0, 0], sizes = [4, 16, 32], strides = [1, 1, 1]} : vector<60x16x32xbf16> to vector<4x16x32xbf16>
    %106 = vector.extract_strided_slice %2 {offsets = [20, 0, 0, 0], sizes = [1, 4, 32, 64], strides = [1, 1, 1, 1]} : vector<25x4x32x64xbf16> to vector<1x4x32x64xbf16>
    %107 = vector.shape_cast %106 : vector<1x4x32x64xbf16> to vector<4x32x64xbf16>
    %cst_30 = arith.constant dense<0.000000e+00> : vector<4x16x64xf32>
    %108 = tpu.matmul %105, %107, %cst_30 {dimension_numbers = #tpu.dot_dimension_numbers<[2], [1], [1], [2], [0, 0, 0, 1, 1, 2], [0], [0]>} : vector<4x16x32xbf16>, vector<4x32x64xbf16>, vector<4x16x64xf32> -> vector<4x16x64xf32>
    %109 = arith.addf %104, %108 : vector<4x16x64xf32>
    %110 = vector.extract_strided_slice %1 {offsets = [14, 0, 0], sizes = [4, 16, 32], strides = [1, 1, 1]} : vector<60x16x32xbf16> to vector<4x16x32xbf16>
    %111 = vector.extract_strided_slice %2 {offsets = [21, 0, 0, 0], sizes = [1, 4, 32, 64], strides = [1, 1, 1, 1]} : vector<25x4x32x64xbf16> to vector<1x4x32x64xbf16>
    %112 = vector.shape_cast %111 : vector<1x4x32x64xbf16> to vector<4x32x64xbf16>
    %cst_31 = arith.constant dense<0.000000e+00> : vector<4x16x64xf32>
    %113 = tpu.matmul %110, %112, %cst_31 {dimension_numbers = #tpu.dot_dimension_numbers<[2], [1], [1], [2], [0, 0, 0, 1, 1, 2], [0], [0]>} : vector<4x16x32xbf16>, vector<4x32x64xbf16>, vector<4x16x64xf32> -> vector<4x16x64xf32>
    %114 = arith.addf %109, %113 : vector<4x16x64xf32>
    %115 = vector.extract_strided_slice %1 {offsets = [26, 0, 0], sizes = [4, 16, 32], strides = [1, 1, 1]} : vector<60x16x32xbf16> to vector<4x16x32xbf16>
    %116 = vector.extract_strided_slice %2 {offsets = [22, 0, 0, 0], sizes = [1, 4, 32, 64], strides = [1, 1, 1, 1]} : vector<25x4x32x64xbf16> to vector<1x4x32x64xbf16>
    %117 = vector.shape_cast %116 : vector<1x4x32x64xbf16> to vector<4x32x64xbf16>
    %cst_32 = arith.constant dense<0.000000e+00> : vector<4x16x64xf32>
    %118 = tpu.matmul %115, %117, %cst_32 {dimension_numbers = #tpu.dot_dimension_numbers<[2], [1], [1], [2], [0, 0, 0, 1, 1, 2], [0], [0]>} : vector<4x16x32xbf16>, vector<4x32x64xbf16>, vector<4x16x64xf32> -> vector<4x16x64xf32>
    %119 = arith.addf %114, %118 : vector<4x16x64xf32>
    %120 = vector.extract_strided_slice %1 {offsets = [38, 0, 0], sizes = [4, 16, 32], strides = [1, 1, 1]} : vector<60x16x32xbf16> to vector<4x16x32xbf16>
    %121 = vector.extract_strided_slice %2 {offsets = [23, 0, 0, 0], sizes = [1, 4, 32, 64], strides = [1, 1, 1, 1]} : vector<25x4x32x64xbf16> to vector<1x4x32x64xbf16>
    %122 = vector.shape_cast %121 : vector<1x4x32x64xbf16> to vector<4x32x64xbf16>
    %cst_33 = arith.constant dense<0.000000e+00> : vector<4x16x64xf32>
    %123 = tpu.matmul %120, %122, %cst_33 {dimension_numbers = #tpu.dot_dimension_numbers<[2], [1], [1], [2], [0, 0, 0, 1, 1, 2], [0], [0]>} : vector<4x16x32xbf16>, vector<4x32x64xbf16>, vector<4x16x64xf32> -> vector<4x16x64xf32>
    %124 = arith.addf %119, %123 : vector<4x16x64xf32>
    %125 = vector.extract_strided_slice %1 {offsets = [50, 0, 0], sizes = [4, 16, 32], strides = [1, 1, 1]} : vector<60x16x32xbf16> to vector<4x16x32xbf16>
    %126 = vector.extract_strided_slice %2 {offsets = [24, 0, 0, 0], sizes = [1, 4, 32, 64], strides = [1, 1, 1, 1]} : vector<25x4x32x64xbf16> to vector<1x4x32x64xbf16>
    %127 = vector.shape_cast %126 : vector<1x4x32x64xbf16> to vector<4x32x64xbf16>
    %cst_34 = arith.constant dense<0.000000e+00> : vector<4x16x64xf32>
    %128 = tpu.matmul %125, %127, %cst_34 {dimension_numbers = #tpu.dot_dimension_numbers<[2], [1], [1], [2], [0, 0, 0, 1, 1, 2], [0], [0]>} : vector<4x16x32xbf16>, vector<4x32x64xbf16>, vector<4x16x64xf32> -> vector<4x16x64xf32>
    %129 = arith.addf %124, %128 : vector<4x16x64xf32>
    %c0_35 = arith.constant 0 : index
    %c0_36 = arith.constant 0 : index
    %c0_37 = arith.constant 0 : index
    %130 = vector.load %arg4[%c0_35, %c0_36, %c0_37] : memref<1x1x64xf32, #tpu.memory_space<vmem>>, vector<1x1x64xf32>
    %131 = vector.broadcast %130 : vector<1x1x64xf32> to vector<4x16x64xf32>
    %132 = arith.mulf %129, %131 : vector<4x16x64xf32>
    %c0_38 = arith.constant 0 : index
    %c0_39 = arith.constant 0 : index
    %c0_40 = arith.constant 0 : index
    %133 = vector.load %arg5[%c0_38, %c0_39, %c0_40] : memref<1x1x64xf32, #tpu.memory_space<vmem>>, vector<1x1x64xf32>
    %134 = vector.broadcast %133 : vector<1x1x64xf32> to vector<4x16x64xf32>
    %135 = arith.addf %132, %134 : vector<4x16x64xf32>
    %cst_41 = arith.constant 0.000000e+00 : f32
    %136 = vector.broadcast %cst_41 : f32 to vector<4x16x64xf32>
    %137 = arith.maximumf %135, %136 : vector<4x16x64xf32>
    %138 = arith.truncf %137 : vector<4x16x64xf32> to vector<4x16x64xbf16>
    %cst_42 = arith.constant 0.000000e+00 : f32
    %139 = vector.broadcast %cst_42 : f32 to vector<16x64xf32>
    %140 = vector.extract_strided_slice %138 {offsets = [0, 0, 0], sizes = [1, 16, 64], strides = [1, 1, 1]} : vector<4x16x64xbf16> to vector<1x16x64xbf16>
    %141 = vector.shape_cast %140 : vector<1x16x64xbf16> to vector<16x64xbf16>
    %142 = vector.extract_strided_slice %3 {offsets = [0, 0, 0], sizes = [1, 64, 64], strides = [1, 1, 1]} : vector<4x64x64xbf16> to vector<1x64x64xbf16>
    %143 = vector.shape_cast %142 : vector<1x64x64xbf16> to vector<64x64xbf16>
    %cst_43 = arith.constant dense<0.000000e+00> : vector<16x64xf32>
    %144 = tpu.matmul %141, %143, %cst_43 {dimension_numbers = #tpu.dot_dimension_numbers<[1], [0], [0], [1], [0, 0, 1, 1], [], []>} : vector<16x64xbf16>, vector<64x64xbf16>, vector<16x64xf32> -> vector<16x64xf32>
    %145 = arith.addf %139, %144 : vector<16x64xf32>
    %146 = vector.extract_strided_slice %138 {offsets = [1, 0, 0], sizes = [1, 16, 64], strides = [1, 1, 1]} : vector<4x16x64xbf16> to vector<1x16x64xbf16>
    %147 = vector.shape_cast %146 : vector<1x16x64xbf16> to vector<16x64xbf16>
    %148 = vector.extract_strided_slice %3 {offsets = [1, 0, 0], sizes = [1, 64, 64], strides = [1, 1, 1]} : vector<4x64x64xbf16> to vector<1x64x64xbf16>
    %149 = vector.shape_cast %148 : vector<1x64x64xbf16> to vector<64x64xbf16>
    %cst_44 = arith.constant dense<0.000000e+00> : vector<16x64xf32>
    %150 = tpu.matmul %147, %149, %cst_44 {dimension_numbers = #tpu.dot_dimension_numbers<[1], [0], [0], [1], [0, 0, 1, 1], [], []>} : vector<16x64xbf16>, vector<64x64xbf16>, vector<16x64xf32> -> vector<16x64xf32>
    %151 = arith.addf %145, %150 : vector<16x64xf32>
    %152 = vector.extract_strided_slice %138 {offsets = [2, 0, 0], sizes = [1, 16, 64], strides = [1, 1, 1]} : vector<4x16x64xbf16> to vector<1x16x64xbf16>
    %153 = vector.shape_cast %152 : vector<1x16x64xbf16> to vector<16x64xbf16>
    %154 = vector.extract_strided_slice %3 {offsets = [2, 0, 0], sizes = [1, 64, 64], strides = [1, 1, 1]} : vector<4x64x64xbf16> to vector<1x64x64xbf16>
    %155 = vector.shape_cast %154 : vector<1x64x64xbf16> to vector<64x64xbf16>
    %cst_45 = arith.constant dense<0.000000e+00> : vector<16x64xf32>
    %156 = tpu.matmul %153, %155, %cst_45 {dimension_numbers = #tpu.dot_dimension_numbers<[1], [0], [0], [1], [0, 0, 1, 1], [], []>} : vector<16x64xbf16>, vector<64x64xbf16>, vector<16x64xf32> -> vector<16x64xf32>
    %157 = arith.addf %151, %156 : vector<16x64xf32>
    %158 = vector.extract_strided_slice %138 {offsets = [3, 0, 0], sizes = [1, 16, 64], strides = [1, 1, 1]} : vector<4x16x64xbf16> to vector<1x16x64xbf16>
    %159 = vector.shape_cast %158 : vector<1x16x64xbf16> to vector<16x64xbf16>
    %160 = vector.extract_strided_slice %3 {offsets = [3, 0, 0], sizes = [1, 64, 64], strides = [1, 1, 1]} : vector<4x64x64xbf16> to vector<1x64x64xbf16>
    %161 = vector.shape_cast %160 : vector<1x64x64xbf16> to vector<64x64xbf16>
    %cst_46 = arith.constant dense<0.000000e+00> : vector<16x64xf32>
    %162 = tpu.matmul %159, %161, %cst_46 {dimension_numbers = #tpu.dot_dimension_numbers<[1], [0], [0], [1], [0, 0, 1, 1], [], []>} : vector<16x64xbf16>, vector<64x64xbf16>, vector<16x64xf32> -> vector<16x64xf32>
    %163 = arith.addf %157, %162 : vector<16x64xf32>
    %c0_47 = arith.constant 0 : index
    %c0_48 = arith.constant 0 : index
    %164 = vector.load %arg7[%c0_47, %c0_48] : memref<1x64xf32, #tpu.memory_space<vmem>>, vector<1x64xf32>
    %165 = vector.broadcast %164 : vector<1x64xf32> to vector<16x64xf32>
    %166 = arith.mulf %163, %165 : vector<16x64xf32>
    %c0_49 = arith.constant 0 : index
    %c0_50 = arith.constant 0 : index
    %167 = vector.load %arg8[%c0_49, %c0_50] : memref<1x64xf32, #tpu.memory_space<vmem>>, vector<1x64xf32>
    %168 = vector.broadcast %167 : vector<1x64xf32> to vector<16x64xf32>
    %169 = arith.addf %166, %168 : vector<16x64xf32>
    %cst_51 = arith.constant 0.000000e+00 : f32
    %170 = vector.broadcast %cst_51 : f32 to vector<16x64xf32>
    %171 = arith.maximumf %169, %170 : vector<16x64xf32>
    %c0_52 = arith.constant 0 : index
    %c0_53 = arith.constant 0 : index
    %c0_54 = arith.constant 0 : index
    %172 = vector.load %arg9[%c0_52, %c0_53, %c0_54] : memref<1x16x64xf32, #tpu.memory_space<vmem>>, vector<1x16x64xf32>
    %173 = vector.shape_cast %172 : vector<1x16x64xf32> to vector<16x64xf32>
    %174 = vector.shape_cast %171 : vector<16x64xf32> to vector<1x16x64xf32>
    tpu.vector_store %arg9[%c0_52, %c0_53, %c0_54], %174 {strides = array<i32>} : memref<1x16x64xf32, #tpu.memory_space<vmem>>, vector<1x16x64xf32>,
    return
  }
  func.func @transform_0(%arg0: i32, %arg1: i32) -> (i32, i32, i32, i32) {
    %c0_i32 = arith.constant 0 : i32
    %c0_i32_0 = arith.constant 0 : i32
    %c0_i32_1 = arith.constant 0 : i32
    return %arg0, %c0_i32, %arg1, %c0_i32_0 : i32, i32, i32, i32
  }
  func.func @transform_1(%arg0: i32, %arg1: i32) -> (i32, i32, i32, i32) {
    %c0_i32 = arith.constant 0 : i32
    %c0_i32_0 = arith.constant 0 : i32
    %c0_i32_1 = arith.constant 0 : i32
    %c0_i32_2 = arith.constant 0 : i32
    %c0_i32_3 = arith.constant 0 : i32
    return %c0_i32, %c0_i32_0, %c0_i32_1, %c0_i32_2 : i32, i32, i32, i32
  }
  func.func @transform_2(%arg0: i32, %arg1: i32) -> (i32, i32, i32) {
    %c0_i32 = arith.constant 0 : i32
    %c0_i32_0 = arith.constant 0 : i32
    %c0_i32_1 = arith.constant 0 : i32
    %c0_i32_2 = arith.constant 0 : i32
    return %c0_i32, %c0_i32_0, %c0_i32_1 : i32, i32, i32
  }
  func.func @transform_3(%arg0: i32, %arg1: i32) -> (i32, i32, i32) {
    %c0_i32 = arith.constant 0 : i32
    %c0_i32_0 = arith.constant 0 : i32
    %c0_i32_1 = arith.constant 0 : i32
    %c0_i32_2 = arith.constant 0 : i32
    return %c0_i32, %c0_i32_0, %c0_i32_1 : i32, i32, i32
  }
  func.func @transform_4(%arg0: i32, %arg1: i32) -> (i32, i32, i32) {
    %c0_i32 = arith.constant 0 : i32
    %c0_i32_0 = arith.constant 0 : i32
    %c0_i32_1 = arith.constant 0 : i32
    %c0_i32_2 = arith.constant 0 : i32
    return %c0_i32, %c0_i32_0, %c0_i32_1 : i32, i32, i32
  }
  func.func @transform_5(%arg0: i32, %arg1: i32) -> (i32, i32) {
    %c0_i32 = arith.constant 0 : i32
    %c0_i32_0 = arith.constant 0 : i32
    %c0_i32_1 = arith.constant 0 : i32
    return %c0_i32, %c0_i32_0 : i32, i32
  }
  func.func @transform_6(%arg0: i32, %arg1: i32) -> (i32, i32) {
    %c0_i32 = arith.constant 0 : i32
    %c0_i32_0 = arith.constant 0 : i32
    %c0_i32_1 = arith.constant 0 : i32
    return %c0_i32, %c0_i32_0 : i32, i32
  }
  func.func @transform_7(%arg0: i32, %arg1: i32) -> (i32, i32, i32) {
    %c0_i32 = arith.constant 0 : i32
    %c0_i32_0 = arith.constant 0 : i32
    return %arg0, %arg1, %c0_i32 : i32, i32, i32
  }
}

</mosaic_0001>

<llo_original>
// kernel: a_call__.2
$region0: #{a_call__.2}
  #allocation0 [shape = 'u32[]', space=smem, size = 0x4, offset = 0x4, fixed_abs, tag = 'smem constant byte address 0x4 - core index']
  #allocation1 [shape = 'u32[72,128]{1,0:T(1,128)}', space=vmem, size = 0x9000, scoped, tag = 'internal scratch']
  %s0 = inlined_call_operand.vmem [shape: bf16[256,32], index: 0, kind: input, shape index: {}]
  %s1 = inlined_call_operand.vmem [shape: bf16[32,32], index: 1, kind: input, shape index: {}]
  %s2 = inlined_call_operand.vmem [shape: f32[1,32], index: 2, kind: input, shape index: {}]
  %s3 = inlined_call_operand.vmem [shape: f32[1,32], index: 3, kind: input, shape index: {}]
  %s4 = inlined_call_operand.vmem [shape: bf16[256,32], index: 4, kind: output, shape index: {}]
  %s5 = sld [smem:[#allocation0]]
  $region26: #{a_call__.2} parent=0
    _
  %s7 = ssub.s32 1, %s5
  %s8 = scalar_select 0, %s7, %s5
  // Predicated region
  $region2: #{a_call__.2} parent=0 // pred_check
    _
  $region3: #{a_call__.2} parent=0 // pred_check_branch
    %10 = sbr.rel (0) target = $region5
  $region4: #{a_call__.2} parent=0 // pred_region
    _
  $region5: #{a_call__.2} parent=0 // pred_fallthru
    _
  // Predicated region
  $region6: #{a_call__.2} parent=0 // pred_check
    _
  $region7: #{a_call__.2} parent=0 // pred_check_branch
    %12 = sbr.rel (0) target = $region9
  $region8: #{a_call__.2} parent=0 // pred_region
    _
  $region9: #{a_call__.2} parent=0 // pred_fallthru
    _
  // Predicated region
  $region10: #{a_call__.2} parent=0 // pred_check
    _
  $region11: #{a_call__.2} parent=0 // pred_check_branch
    %14 = sbr.rel (0) target = $region13
  $region12: #{a_call__.2} parent=0 // pred_region
    _
  $region13: #{a_call__.2} parent=0 // pred_fallthru
    _
  // Predicated region
  $region14: #{a_call__.2} parent=0 // pred_check
    _
  $region15: #{a_call__.2} parent=0 // pred_check_branch
    %16 = sbr.rel (0) target = $region17
  $region16: #{a_call__.2} parent=0 // pred_region
    _
  $region17: #{a_call__.2} parent=0 // pred_fallthru
    _
  %v18 = vld [vmem:[%s0] sm:$0xf]
  %v19 = vld [vmem:[%s0 + $0x4] sm:$0xf]
  %v20 = vld [vmem:[%s0 + $0x8] sm:$0xf]
  %v21 = vld [vmem:[%s0 + $0xc] sm:$0xf]
  %v22 = vld [vmem:[%s0 + $0x10] sm:$0xf]
  %v23 = vld [vmem:[%s0 + $0x14] sm:$0xf]
  %v24 = vld [vmem:[%s0 + $0x18] sm:$0xf]
  %v25 = vld [vmem:[%s0 + $0x1c] sm:$0xf]
  %v26 = vld [vmem:[%s0 + $0x20] sm:$0xf]
  %v27 = vld [vmem:[%s0 + $0x24] sm:$0xf]
  %v28 = vld [vmem:[%s0 + $0x28] sm:$0xf]
  %v29 = vld [vmem:[%s0 + $0x2c] sm:$0xf]
  %v30 = vld [vmem:[%s0 + $0x30] sm:$0xf]
  %v31 = vld [vmem:[%s0 + $0x34] sm:$0xf]
  %v32 = vld [vmem:[%s0 + $0x38] sm:$0xf]
  %v33 = vld [vmem:[%s0 + $0x3c] sm:$0xf]
  %v34 = vld [vmem:[%s0 + $0x40] sm:$0xf]
  %v35 = vld [vmem:[%s0 + $0x44] sm:$0xf]
  %v36 = vld [vmem:[%s0 + $0x48] sm:$0xf]
  %v37 = vld [vmem:[%s0 + $0x4c] sm:$0xf]
  %v38 = vld [vmem:[%s0 + $0x50] sm:$0xf]
  %v39 = vld [vmem:[%s0 + $0x54] sm:$0xf]
  %v40 = vld [vmem:[%s0 + $0x58] sm:$0xf]
  %v41 = vld [vmem:[%s0 + $0x5c] sm:$0xf]
  %v42 = vld [vmem:[%s0 + $0x60] sm:$0xf]
  %v43 = vld [vmem:[%s0 + $0x64] sm:$0xf]
  %v44 = vld [vmem:[%s0 + $0x68] sm:$0xf]
  %v45 = vld [vmem:[%s0 + $0x6c] sm:$0xf]
  %v46 = vld [vmem:[%s0 + $0x70] sm:$0xf]
  %v47 = vld [vmem:[%s0 + $0x74] sm:$0xf]
  %v48 = vld [vmem:[%s0 + $0x78] sm:$0xf]
  %v49 = vld [vmem:[%s0 + $0x7c] sm:$0xf]
  %v50 = vld [vmem:[%s1] sm:$0xf]
  %v51 = vld [vmem:[%s1 + $0x4] sm:$0xf]
  %v52 = vld [vmem:[%s1 + $0x8] sm:$0xf]
  %v53 = vld [vmem:[%s1 + $0xc] sm:$0xf]
  %v86 = vunpack.c.l.b16 %v18
  %v87 = vunpack.c.l.b16 %v19
  %v88 = vunpack.c.l.b16 %v20
  %v89 = vunpack.c.l.b16 %v21
  %v90 = vunpack.c.l.b16 %v22
  %v91 = vunpack.c.l.b16 %v23
  %v92 = vunpack.c.l.b16 %v24
  %v93 = vunpack.c.l.b16 %v25
  %v94 = vunpack.c.l.b16 %v26
  %v95 = vunpack.c.l.b16 %v27
  %v96 = vunpack.c.l.b16 %v28
  %v97 = vunpack.c.l.b16 %v29
  %v98 = vunpack.c.l.b16 %v30
  %v99 = vunpack.c.l.b16 %v31
  %v100 = vunpack.c.l.b16 %v32
  %v101 = vunpack.c.l.b16 %v33
  %v102 = vunpack.c.l.b16 %v34
  %v103 = vunpack.c.l.b16 %v35
  %v104 = vunpack.c.l.b16 %v36
  %v105 = vunpack.c.l.b16 %v37
  %v106 = vunpack.c.l.b16 %v38
  %v107 = vunpack.c.l.b16 %v39
  %v108 = vunpack.c.l.b16 %v40
  %v109 = vunpack.c.l.b16 %v41
  %v110 = vunpack.c.l.b16 %v42
  %v111 = vunpack.c.l.b16 %v43
  %v112 = vunpack.c.l.b16 %v44
  %v113 = vunpack.c.l.b16 %v45
  %v114 = vunpack.c.l.b16 %v46
  %v115 = vunpack.c.l.b16 %v47
  %v116 = vunpack.c.l.b16 %v48
  %v117 = vunpack.c.l.b16 %v49
  %v118 = vpack.c.b16 %v87, %v86
  %v119 = vpack.c.b16 %v89, %v88
  %v120 = vpack.c.b16 %v91, %v90
  %v121 = vpack.c.b16 %v93, %v92
  %v122 = vpack.c.b16 %v95, %v94
  %v123 = vpack.c.b16 %v97, %v96
  %v124 = vpack.c.b16 %v99, %v98
  %v125 = vpack.c.b16 %v101, %v100
  %v126 = vpack.c.b16 %v103, %v102
  %v127 = vpack.c.b16 %v105, %v104
  %v128 = vpack.c.b16 %v107, %v106
  %v129 = vpack.c.b16 %v109, %v108
  %v130 = vpack.c.b16 %v111, %v110
  %v131 = vpack.c.b16 %v113, %v112
  %v132 = vpack.c.b16 %v115, %v114
  %v133 = vpack.c.b16 %v117, %v116
  %v138 = vunpack.c.l.b16 %v50
  %v139 = vunpack.c.l.b16 %v51
  %v140 = vunpack.c.l.b16 %v52
  %v141 = vunpack.c.l.b16 %v53
  %v142 = vpack.c.b16 %v139, %v138
  %v143 = vpack.c.b16 %v141, %v140
  %vm146 = vcmask 261120
  %v148 = vsel %vm146, %v118, 0
  %v151 = vsel %vm146, %v119, 0
  %v154 = vsel %vm146, %v120, 0
  %v157 = vsel %vm146, %v121, 0
  %v160 = vsel %vm146, %v122, 0
  %v163 = vsel %vm146, %v123, 0
  %v166 = vsel %vm146, %v124, 0
  %v169 = vsel %vm146, %v125, 0
  %v172 = vsel %vm146, %v126, 0
  %v175 = vsel %vm146, %v127, 0
  %v178 = vsel %vm146, %v128, 0
  %v181 = vsel %vm146, %v129, 0
  %v184 = vsel %vm146, %v130, 0
  %v187 = vsel %vm146, %v131, 0
  %v190 = vsel %vm146, %v132, 0
  %v193 = vsel %vm146, %v133, 0
  %195 = vmatpush.bf16.msra.mxu0 0
  %196 = vmatpush.bf16.msra.mxu0 0
  %197 = vmatpush.bf16.msra.mxu0 0
  %198 = vmatpush.bf16.msra.mxu0 0
  %199 = vmatpush.bf16.msra.mxu0 0
  %200 = vmatpush.bf16.msra.mxu0 0
  %201 = vmatpush.bf16.msra.mxu0 %v143
  %202 = vmatpush.bf16.msra.mxu0 %v142
  %203 = vmatmul.bf16.gmra.mxu0 %v148
  %v204 = vpop.f32.mrf.mxu0
  %v205 = vadd.f32 0.0, %v204
  %v206 = vpop.f32.mrf.mxu0
  %v207 = vadd.f32 0.0, %v206
  %208 = vmatmul.bf16.gmra.mxu0 %v151
  %v209 = vpop.f32.mrf.mxu0
  %v210 = vadd.f32 0.0, %v209
  %v211 = vpop.f32.mrf.mxu0
  %v212 = vadd.f32 0.0, %v211
  %213 = vmatmul.bf16.gmra.mxu0 %v154
  %v214 = vpop.f32.mrf.mxu0
  %v215 = vadd.f32 0.0, %v214
  %v216 = vpop.f32.mrf.mxu0
  %v217 = vadd.f32 0.0, %v216
  %218 = vmatmul.bf16.gmra.mxu0 %v157
  %v219 = vpop.f32.mrf.mxu0
  %v220 = vadd.f32 0.0, %v219
  %v221 = vpop.f32.mrf.mxu0
  %v222 = vadd.f32 0.0, %v221
  %223 = vmatmul.bf16.gmra.mxu0 %v160
  %v224 = vpop.f32.mrf.mxu0
  %v225 = vadd.f32 0.0, %v224
  %v226 = vpop.f32.mrf.mxu0
  %v227 = vadd.f32 0.0, %v226
  %228 = vmatmul.bf16.gmra.mxu0 %v163
  %v229 = vpop.f32.mrf.mxu0
  %v230 = vadd.f32 0.0, %v229
  %v231 = vpop.f32.mrf.mxu0
  %v232 = vadd.f32 0.0, %v231
  %233 = vmatmul.bf16.gmra.mxu0 %v166
  %v234 = vpop.f32.mrf.mxu0
  %v235 = vadd.f32 0.0, %v234
  %v236 = vpop.f32.mrf.mxu0
  %v237 = vadd.f32 0.0, %v236
  %238 = vmatmul.bf16.gmra.mxu0 %v169
  %v239 = vpop.f32.mrf.mxu0
  %v240 = vadd.f32 0.0, %v239
  %v241 = vpop.f32.mrf.mxu0
  %v242 = vadd.f32 0.0, %v241
  %243 = vmatmul.bf16.gmra.mxu0 %v172
  %v244 = vpop.f32.mrf.mxu0
  %v245 = vadd.f32 0.0, %v244
  %v246 = vpop.f32.mrf.mxu0
  %v247 = vadd.f32 0.0, %v246
  %248 = vmatmul.bf16.gmra.mxu0 %v175
  %v249 = vpop.f32.mrf.mxu0
  %v250 = vadd.f32 0.0, %v249
  %v251 = vpop.f32.mrf.mxu0
  %v252 = vadd.f32 0.0, %v251
  %253 = vmatmul.bf16.gmra.mxu0 %v178
  %v254 = vpop.f32.mrf.mxu0
  %v255 = vadd.f32 0.0, %v254
  %v256 = vpop.f32.mrf.mxu0
  %v257 = vadd.f32 0.0, %v256
  %258 = vmatmul.bf16.gmra.mxu0 %v181
  %v259 = vpop.f32.mrf.mxu0
  %v260 = vadd.f32 0.0, %v259
  %v261 = vpop.f32.mrf.mxu0
  %v262 = vadd.f32 0.0, %v261
  %263 = vmatmul.bf16.gmra.mxu0 %v184
  %v264 = vpop.f32.mrf.mxu0
  %v265 = vadd.f32 0.0, %v264
  %v266 = vpop.f32.mrf.mxu0
  %v267 = vadd.f32 0.0, %v266
  %268 = vmatmul.bf16.gmra.mxu0 %v187
  %v269 = vpop.f32.mrf.mxu0
  %v270 = vadd.f32 0.0, %v269
  %v271 = vpop.f32.mrf.mxu0
  %v272 = vadd.f32 0.0, %v271
  %273 = vmatmul.bf16.gmra.mxu0 %v190
  %v274 = vpop.f32.mrf.mxu0
  %v275 = vadd.f32 0.0, %v274
  %v276 = vpop.f32.mrf.mxu0
  %v277 = vadd.f32 0.0, %v276
  %278 = vmatmul.bf16.gmra.mxu0 %v193
  %v279 = vpop.f32.mrf.mxu0
  %v280 = vadd.f32 0.0, %v279
  %v281 = vpop.f32.mrf.mxu0
  %v282 = vadd.f32 0.0, %v281
  %283 = vdwg.mxu0
  %v284 = vld [vmem:[%s2] sm:$0x1]
  %v286 = vperm.slane %v284, 0
  %v288 = vmul.f32 %v205, %v286
  %v289 = vmul.f32 %v207, %v286
  %v290 = vmul.f32 %v210, %v286
  %v291 = vmul.f32 %v212, %v286
  %v292 = vmul.f32 %v215, %v286
  %v293 = vmul.f32 %v217, %v286
  %v294 = vmul.f32 %v220, %v286
  %v295 = vmul.f32 %v222, %v286
  %v296 = vmul.f32 %v225, %v286
  %v297 = vmul.f32 %v227, %v286
  %v298 = vmul.f32 %v230, %v286
  %v299 = vmul.f32 %v232, %v286
  %v300 = vmul.f32 %v235, %v286
  %v301 = vmul.f32 %v237, %v286
  %v302 = vmul.f32 %v240, %v286
  %v303 = vmul.f32 %v242, %v286
  %v304 = vmul.f32 %v245, %v286
  %v305 = vmul.f32 %v247, %v286
  %v306 = vmul.f32 %v250, %v286
  %v307 = vmul.f32 %v252, %v286
  %v308 = vmul.f32 %v255, %v286
  %v309 = vmul.f32 %v257, %v286
  %v310 = vmul.f32 %v260, %v286
  %v311 = vmul.f32 %v262, %v286
  %v312 = vmul.f32 %v265, %v286
  %v313 = vmul.f32 %v267, %v286
  %v314 = vmul.f32 %v270, %v286
  %v315 = vmul.f32 %v272, %v286
  %v316 = vmul.f32 %v275, %v286
  %v317 = vmul.f32 %v277, %v286
  %v318 = vmul.f32 %v280, %v286
  %v319 = vmul.f32 %v282, %v286
  %v320 = vld [vmem:[%s3] sm:$0x1]
  %v322 = vperm.slane %v320, 0
  %v324 = vadd.f32 %v288, %v322
  %v325 = vadd.f32 %v289, %v322
  %v326 = vadd.f32 %v290, %v322
  %v327 = vadd.f32 %v291, %v322
  %v328 = vadd.f32 %v292, %v322
  %v329 = vadd.f32 %v293, %v322
  %v330 = vadd.f32 %v294, %v322
  %v331 = vadd.f32 %v295, %v322
  %v332 = vadd.f32 %v296, %v322
  %v333 = vadd.f32 %v297, %v322
  %v334 = vadd.f32 %v298, %v322
  %v335 = vadd.f32 %v299, %v322
  %v336 = vadd.f32 %v300, %v322
  %v337 = vadd.f32 %v301, %v322
  %v338 = vadd.f32 %v302, %v322
  %v339 = vadd.f32 %v303, %v322
  %v340 = vadd.f32 %v304, %v322
  %v341 = vadd.f32 %v305, %v322
  %v342 = vadd.f32 %v306, %v322
  %v343 = vadd.f32 %v307, %v322
  %v344 = vadd.f32 %v308, %v322
  %v345 = vadd.f32 %v309, %v322
  %v346 = vadd.f32 %v310, %v322
  %v347 = vadd.f32 %v311, %v322
  %v348 = vadd.f32 %v312, %v322
  %v349 = vadd.f32 %v313, %v322
  %v350 = vadd.f32 %v314, %v322
  %v351 = vadd.f32 %v315, %v322
  %v352 = vadd.f32 %v316, %v322
  %v353 = vadd.f32 %v317, %v322
  %v354 = vadd.f32 %v318, %v322
  %v355 = vadd.f32 %v319, %v322
  %v356 = vmax.f32 %v324, 0.0
  %v357 = vmax.f32 %v325, 0.0
  %v358 = vmax.f32 %v326, 0.0
  %v359 = vmax.f32 %v327, 0.0
  %v360 = vmax.f32 %v328, 0.0
  %v361 = vmax.f32 %v329, 0.0
  %v362 = vmax.f32 %v330, 0.0
  %v363 = vmax.f32 %v331, 0.0
  %v364 = vmax.f32 %v332, 0.0
  %v365 = vmax.f32 %v333, 0.0
  %v366 = vmax.f32 %v334, 0.0
  %v367 = vmax.f32 %v335, 0.0
  %v368 = vmax.f32 %v336, 0.0
  %v369 = vmax.f32 %v337, 0.0
  %v370 = vmax.f32 %v338, 0.0
  %v371 = vmax.f32 %v339, 0.0
  %v372 = vmax.f32 %v340, 0.0
  %v373 = vmax.f32 %v341, 0.0
  %v374 = vmax.f32 %v342, 0.0
  %v375 = vmax.f32 %v343, 0.0
  %v376 = vmax.f32 %v344, 0.0
  %v377 = vmax.f32 %v345, 0.0
  %v378 = vmax.f32 %v346, 0.0
  %v379 = vmax.f32 %v347, 0.0
  %v380 = vmax.f32 %v348, 0.0
  %v381 = vmax.f32 %v349, 0.0
  %v382 = vmax.f32 %v350, 0.0
  %v383 = vmax.f32 %v351, 0.0
  %v384 = vmax.f32 %v352, 0.0
  %v385 = vmax.f32 %v353, 0.0
  %v386 = vmax.f32 %v354, 0.0
  %v387 = vmax.f32 %v355, 0.0
  %v388 = vpack.c.bf16 %v356, %v356
  %v389 = vpack.c.bf16 %v357, %v357
  %v390 = vpack.c.bf16 %v358, %v358
  %v391 = vpack.c.bf16 %v359, %v359
  %v392 = vpack.c.bf16 %v360, %v360
  %v393 = vpack.c.bf16 %v361, %v361
  %v394 = vpack.c.bf16 %v362, %v362
  %v395 = vpack.c.bf16 %v363, %v363
  %v396 = vpack.c.bf16 %v364, %v364
  %v397 = vpack.c.bf16 %v365, %v365
  %v398 = vpack.c.bf16 %v366, %v366
  %v399 = vpack.c.bf16 %v367, %v367
  %v400 = vpack.c.bf16 %v368, %v368
  %v401 = vpack.c.bf16 %v369, %v369
  %v402 = vpack.c.bf16 %v370, %v370
  %v403 = vpack.c.bf16 %v371, %v371
  %v404 = vpack.c.bf16 %v372, %v372
  %v405 = vpack.c.bf16 %v373, %v373
  %v406 = vpack.c.bf16 %v374, %v374
  %v407 = vpack.c.bf16 %v375, %v375
  %v408 = vpack.c.bf16 %v376, %v376
  %v409 = vpack.c.bf16 %v377, %v377
  %v410 = vpack.c.bf16 %v378, %v378
  %v411 = vpack.c.bf16 %v379, %v379
  %v412 = vpack.c.bf16 %v380, %v380
  %v413 = vpack.c.bf16 %v381, %v381
  %v414 = vpack.c.bf16 %v382, %v382
  %v415 = vpack.c.bf16 %v383, %v383
  %v416 = vpack.c.bf16 %v384, %v384
  %v417 = vpack.c.bf16 %v385, %v385
  %v418 = vpack.c.bf16 %v386, %v386
  %v419 = vpack.c.bf16 %v387, %v387
  %vm420 = vcmask 257024
  %421 = vst.msk [vmem:[%s4] sm:$0xf] %vm420, %v388
  %422 = vst.msk [vmem:[%s4 + $0x4] sm:$0xf] %vm420, %v389
  %423 = vst.msk [vmem:[%s4 + $0x8] sm:$0xf] %vm420, %v390
  %424 = vst.msk [vmem:[%s4 + $0xc] sm:$0xf] %vm420, %v391
  %425 = vst.msk [vmem:[%s4 + $0x10] sm:$0xf] %vm420, %v392
  %426 = vst.msk [vmem:[%s4 + $0x14] sm:$0xf] %vm420, %v393
  %427 = vst.msk [vmem:[%s4 + $0x18] sm:$0xf] %vm420, %v394
  %428 = vst.msk [vmem:[%s4 + $0x1c] sm:$0xf] %vm420, %v395
  %429 = vst.msk [vmem:[%s4 + $0x20] sm:$0xf] %vm420, %v396
  %430 = vst.msk [vmem:[%s4 + $0x24] sm:$0xf] %vm420, %v397
  %431 = vst.msk [vmem:[%s4 + $0x28] sm:$0xf] %vm420, %v398
  %432 = vst.msk [vmem:[%s4 + $0x2c] sm:$0xf] %vm420, %v399
  %433 = vst.msk [vmem:[%s4 + $0x30] sm:$0xf] %vm420, %v400
  %434 = vst.msk [vmem:[%s4 + $0x34] sm:$0xf] %vm420, %v401
  %435 = vst.msk [vmem:[%s4 + $0x38] sm:$0xf] %vm420, %v402
  %436 = vst.msk [vmem:[%s4 + $0x3c] sm:$0xf] %vm420, %v403
  %437 = vst.msk [vmem:[%s4 + $0x40] sm:$0xf] %vm420, %v404
  %438 = vst.msk [vmem:[%s4 + $0x44] sm:$0xf] %vm420, %v405
  %439 = vst.msk [vmem:[%s4 + $0x48] sm:$0xf] %vm420, %v406
  %440 = vst.msk [vmem:[%s4 + $0x4c] sm:$0xf] %vm420, %v407
  %441 = vst.msk [vmem:[%s4 + $0x50] sm:$0xf] %vm420, %v408
  %442 = vst.msk [vmem:[%s4 + $0x54] sm:$0xf] %vm420, %v409
  %443 = vst.msk [vmem:[%s4 + $0x58] sm:$0xf] %vm420, %v410
  %444 = vst.msk [vmem:[%s4 + $0x5c] sm:$0xf] %vm420, %v411
  %445 = vst.msk [vmem:[%s4 + $0x60] sm:$0xf] %vm420, %v412
  %446 = vst.msk [vmem:[%s4 + $0x64] sm:$0xf] %vm420, %v413
  %447 = vst.msk [vmem:[%s4 + $0x68] sm:$0xf] %vm420, %v414
  %448 = vst.msk [vmem:[%s4 + $0x6c] sm:$0xf] %vm420, %v415
  %449 = vst.msk [vmem:[%s4 + $0x70] sm:$0xf] %vm420, %v416
  %450 = vst.msk [vmem:[%s4 + $0x74] sm:$0xf] %vm420, %v417
  %451 = vst.msk [vmem:[%s4 + $0x78] sm:$0xf] %vm420, %v418
  %452 = vst.msk [vmem:[%s4 + $0x7c] sm:$0xf] %vm420, %v419
  // Predicated region
  $region18: #{a_call__.2} parent=0 // pred_check
    _
  $region19: #{a_call__.2} parent=0 // pred_check_branch
    %454 = sbr.rel (0) target = $region21
  $region20: #{a_call__.2} parent=0 // pred_region
    _
  $region21: #{a_call__.2} parent=0 // pred_fallthru
    _
  // Predicated region
  $region22: #{a_call__.2} parent=0 // pred_check
    _
  $region23: #{a_call__.2} parent=0 // pred_check_branch
    %456 = sbr.rel (0) target = $region25
  $region24: #{a_call__.2} parent=0 // pred_region
    _
  $region25: #{a_call__.2} parent=0 // pred_fallthru
    _

// kernel: a_call__.3
$region0: #{a_call__.3}
  #allocation0 [shape = 'u32[]', space=smem, size = 0x4, offset = 0x4, fixed_abs, tag = 'smem constant byte address 0x4 - core index']
  #allocation1 [shape = 'u32[72,128]{1,0:T(1,128)}', space=vmem, size = 0x9000, scoped, tag = 'internal scratch']
  %s0 = inlined_call_operand.vmem [shape: bf16[2,60,16,32], index: 0, kind: input, shape index: {}]
  %s1 = inlined_call_operand.vmem [shape: bf16[25,4,32,64], index: 1, kind: input, shape index: {}]
  %s2 = inlined_call_operand.vmem [shape: f32[1,1,64], index: 2, kind: input, shape index: {}]
  %s3 = inlined_call_operand.vmem [shape: f32[1,1,64], index: 3, kind: input, shape index: {}]
  %s4 = inlined_call_operand.vmem [shape: bf16[4,64,64], index: 4, kind: input, shape index: {}]
  %s5 = inlined_call_operand.vmem [shape: f32[1,64], index: 5, kind: input, shape index: {}]
  %s6 = inlined_call_operand.vmem [shape: f32[1,64], index: 6, kind: input, shape index: {}]
  %s7 = inlined_call_operand.hbm [shape: f32[2,16,64], index: 7, kind: output, shape index: {}]
  %s8 = sld [smem:[#allocation0]]
  $region61: #{a_call__.3} parent=0
    _
  %s10 = ssub.s32 1, %s8
  %s11 = scalar_select 0, %s10, %s8
  $region1: #{a_call__.3} parent=0
    #allocation2 [shape = 'u8[16384]{0}', space=vmem, size = 0x4000, scoped, tag = 'output window, operand 0']
    #allocation3 [shape = 's32[2]{0}', space=sflag, size = 0x8, scoped, tag = 'scoped memory for a_call__.3']
    %12 = vsyncpa [#allocation3], 0
    %s13 = scalar_lea.sflag [#allocation3], 1
    %14 = vsyncpa %s13, 0
    loop: start=0, step=1, limit=4
    $region2: #{a_call__.3} parent=1 // loop_pre_header
      _
    $region3: #{a_call__.3} parent=1 // loop_header
      %s16 = sphi 0, %s20
      %p17 = scmp.ge.s32.totalorder %s16, 4
      %s23 = sphi 0, %s35
      %s24 = sphi 0, %s31
      %s25 = sphi 0, %s23
      %s26 = sphi 0, %s24
      %s27 = sphi 0, %s25
      %s28 = sphi 0, %s26
      %s40 = sphi 0, %s42
      %s43 = sphi 0, %s40
      %s44 = sphi 0, %s43
      %s60 = sphi 0, %s44
      %s64 = sphi 0, %s64
      %s66 = sphi 0, %s64
      %s67 = sphi 0, %s66
      %s81 = sphi 0, %s67
      %s85 = sphi 0, %s85
      %s87 = sphi 0, %s85
      %s88 = sphi 0, %s87
      %s102 = sphi 0, %s88
      %s106 = sphi 0, %s106
      %s108 = sphi 0, %s106
      %s109 = sphi 0, %s108
      %s123 = sphi 0, %s109
      %s127 = sphi 0, %s127
      %s129 = sphi 0, %s127
      %s130 = sphi 0, %s129
      %s144 = sphi 0, %s130
      %s148 = sphi 0, %s148
      %s150 = sphi 0, %s148
      %s151 = sphi 0, %s150
      %s165 = sphi 0, %s151
      %s169 = sphi 0, %s169
      %s171 = sphi 0, %s169
      %s172 = sphi 0, %s171
      %s186 = sphi 0, %s172
      %s194 = sphi 0, %s196
      %s197 = sphi 0, %s194
      %s198 = sphi 0, %s197
      %s214 = sphi 0, %s198
    $region4: #{a_call__.3} parent=1 // loop_header_branch
      %19 = sbr.rel (%p17) target = $region8
    $region5: #{a_call__.3} parent=1 // loop_body
      %s21 = ssub.s32 %s16, 1
      %s22 = ssub.s32 %s16, 2
      %s29 = sadd.s32 1, %s24
      %p30 = scmp.ge.s32.totalorder %s29, 1
      %s31 = scalar_select %p30, 0, %s29
      %s32 = sadd.s32 1, %s23
      %s33 = scalar_select %p30, %s32, %s23
      %p34 = scmp.ge.s32.totalorder %s33, 2
      %s35 = scalar_select %p34, 0, %s33
      %s36 = ssub.s32 %s23, %s35
      %s37 = ssub.s32 %s24, %s31
      %s38 = sor.u32 %s36, %s37
      %p39 = scmp.eq.s32.totalorder %s38, 0
      %s41 = sadd.s32 %s40, 1
      %s42 = scalar_select %p39, %s40, %s41
      %p45 = pneg %p39
      %p46 = scmp.eq.s32.totalorder %s16, 1
      %p47 = por %p45, %p46
      %p48 = scmp.ne.s32.totalorder %s40, %s43
      %p49 = scmp.eq.s32.totalorder %s16, 0
      %p50 = por %p48, %p49
      %p51 = scmp.ne.s32.totalorder %s40, %s43
      %p52 = scmp.eq.s32.totalorder %s21, 1
      %p53 = por %p51, %p52
      %p54 = scmp.ne.s32.totalorder %s43, %s44
      %p55 = scmp.eq.s32.totalorder %s21, 0
      %p56 = por %p54, %p55
      %p57 = scmp.ne.s32.totalorder %s43, %s44
      %p58 = scmp.eq.s32.totalorder %s22, 1
      %p59 = por %p57, %p58
      %p61 = scmp.ne.s32.totalorder %s44, %s60
      %p62 = scmp.eq.s32.totalorder %s22, 0
      %p63 = por %p61, %p62
      %s65 = sadd.s32 %s64, 1
      %p68 = scmp.eq.s32.totalorder %s16, 1
      %p69 = scmp.ne.s32.totalorder %s64, %s66
      %p70 = scmp.eq.s32.totalorder %s16, 0
      %p71 = por %p69, %p70
      %p72 = scmp.ne.s32.totalorder %s64, %s66
      %p73 = scmp.eq.s32.totalorder %s21, 1
      %p74 = por %p72, %p73
      %p75 = scmp.ne.s32.totalorder %s66, %s67
      %p76 = scmp.eq.s32.totalorder %s21, 0
      %p77 = por %p75, %p76
      %p78 = scmp.ne.s32.totalorder %s66, %s67
      %p79 = scmp.eq.s32.totalorder %s22, 1
      %p80 = por %p78, %p79
      %p82 = scmp.ne.s32.totalorder %s67, %s81
      %p83 = scmp.eq.s32.totalorder %s22, 0
      %p84 = por %p82, %p83
      %s86 = sadd.s32 %s85, 1
      %p89 = scmp.eq.s32.totalorder %s16, 1
      %p90 = scmp.ne.s32.totalorder %s85, %s87
      %p91 = scmp.eq.s32.totalorder %s16, 0
      %p92 = por %p90, %p91
      %p93 = scmp.ne.s32.totalorder %s85, %s87
      %p94 = scmp.eq.s32.totalorder %s21, 1
      %p95 = por %p93, %p94
      %p96 = scmp.ne.s32.totalorder %s87, %s88
      %p97 = scmp.eq.s32.totalorder %s21, 0
      %p98 = por %p96, %p97
      %p99 = scmp.ne.s32.totalorder %s87, %s88
      %p100 = scmp.eq.s32.totalorder %s22, 1
      %p101 = por %p99, %p100
      %p103 = scmp.ne.s32.totalorder %s88, %s102
      %p104 = scmp.eq.s32.totalorder %s22, 0
      %p105 = por %p103, %p104
      %s107 = sadd.s32 %s106, 1
      %p110 = scmp.eq.s32.totalorder %s16, 1
      %p111 = scmp.ne.s32.totalorder %s106, %s108
      %p112 = scmp.eq.s32.totalorder %s16, 0
      %p113 = por %p111, %p112
      %p114 = scmp.ne.s32.totalorder %s106, %s108
      %p115 = scmp.eq.s32.totalorder %s21, 1
      %p116 = por %p114, %p115
      %p117 = scmp.ne.s32.totalorder %s108, %s109
      %p118 = scmp.eq.s32.totalorder %s21, 0
      %p119 = por %p117, %p118
      %p120 = scmp.ne.s32.totalorder %s108, %s109
      %p121 = scmp.eq.s32.totalorder %s22, 1
      %p122 = por %p120, %p121
      %p124 = scmp.ne.s32.totalorder %s109, %s123
      %p125 = scmp.eq.s32.totalorder %s22, 0
      %p126 = por %p124, %p125
      %s128 = sadd.s32 %s127, 1
      %p131 = scmp.eq.s32.totalorder %s16, 1
      %p132 = scmp.ne.s32.totalorder %s127, %s129
      %p133 = scmp.eq.s32.totalorder %s16, 0
      %p134 = por %p132, %p133
      %p135 = scmp.ne.s32.totalorder %s127, %s129
      %p136 = scmp.eq.s32.totalorder %s21, 1
      %p137 = por %p135, %p136
      %p138 = scmp.ne.s32.totalorder %s129, %s130
      %p139 = scmp.eq.s32.totalorder %s21, 0
      %p140 = por %p138, %p139
      %p141 = scmp.ne.s32.totalorder %s129, %s130
      %p142 = scmp.eq.s32.totalorder %s22, 1
      %p143 = por %p141, %p142
      %p145 = scmp.ne.s32.totalorder %s130, %s144
      %p146 = scmp.eq.s32.totalorder %s22, 0
      %p147 = por %p145, %p146
      %s149 = sadd.s32 %s148, 1
      %p152 = scmp.eq.s32.totalorder %s16, 1
      %p153 = scmp.ne.s32.totalorder %s148, %s150
      %p154 = scmp.eq.s32.totalorder %s16, 0
      %p155 = por %p153, %p154
      %p156 = scmp.ne.s32.totalorder %s148, %s150
      %p157 = scmp.eq.s32.totalorder %s21, 1
      %p158 = por %p156, %p157
      %p159 = scmp.ne.s32.totalorder %s150, %s151
      %p160 = scmp.eq.s32.totalorder %s21, 0
      %p161 = por %p159, %p160
      %p162 = scmp.ne.s32.totalorder %s150, %s151
      %p163 = scmp.eq.s32.totalorder %s22, 1
      %p164 = por %p162, %p163
      %p166 = scmp.ne.s32.totalorder %s151, %s165
      %p167 = scmp.eq.s32.totalorder %s22, 0
      %p168 = por %p166, %p167
      %s170 = sadd.s32 %s169, 1
      %p173 = scmp.eq.s32.totalorder %s16, 1
      %p174 = scmp.ne.s32.totalorder %s169, %s171
      %p175 = scmp.eq.s32.totalorder %s16, 0
      %p176 = por %p174, %p175
      %p177 = scmp.ne.s32.totalorder %s169, %s171
      %p178 = scmp.eq.s32.totalorder %s21, 1
      %p179 = por %p177, %p178
      %p180 = scmp.ne.s32.totalorder %s171, %s172
      %p181 = scmp.eq.s32.totalorder %s21, 0
      %p182 = por %p180, %p181
      %p183 = scmp.ne.s32.totalorder %s171, %s172
      %p184 = scmp.eq.s32.totalorder %s22, 1
      %p185 = por %p183, %p184
      %p187 = scmp.ne.s32.totalorder %s172, %s186
      %p188 = scmp.eq.s32.totalorder %s22, 0
      %p189 = por %p187, %p188
      %s190 = ssub.s32 %s23, %s35
      %s191 = ssub.s32 %s24, %s31
      %s192 = sor.u32 %s190, %s191
      %p193 = scmp.eq.s32.totalorder %s192, 0
      %s195 = sadd.s32 %s194, 1
      %s196 = scalar_select %p193, %s194, %s195
      %p199 = pneg %p193
      %p200 = scmp.eq.s32.totalorder %s16, 1
      %p201 = por %p199, %p200
      %p202 = scmp.ne.s32.totalorder %s194, %s197
      %p203 = scmp.eq.s32.totalorder %s16, 0
      %p204 = por %p202, %p203
      %p205 = scmp.ne.s32.totalorder %s194, %s197
      %p206 = scmp.eq.s32.totalorder %s21, 1
      %p207 = por %p205, %p206
      %p208 = scmp.ne.s32.totalorder %s197, %s198
      %p209 = scmp.eq.s32.totalorder %s21, 0
      %p210 = por %p208, %p209
      %p211 = scmp.ne.s32.totalorder %s197, %s198
      %p212 = scmp.eq.s32.totalorder %s22, 1
      %p213 = por %p211, %p212
      %p215 = scmp.ne.s32.totalorder %s198, %s214
      %p216 = scmp.eq.s32.totalorder %s22, 0
      %p217 = por %p215, %p216
      %p218 = scmp.le.s32.totalorder 1, %s16
      %p219 = scmp.lt.s32.totalorder %s16, 3
      %p220 = pnand %p218, %p219
      %p221 = pneg %p220
      // Predicated region
      $region9: #{a_call__.3} parent=5 // pred_check
        _
      $region10: #{a_call__.3} parent=5 // pred_check_branch
        %223 = sbr.rel (%p220) target = $region12
      $region11: #{a_call__.3} parent=5 // pred_region
        %s224 = ssub.s32 %s16, 1
        // Predicated region
        $region13: #{a_call__.3} parent=11 // pred_check
          %p225 = pneg %p77
        $region14: #{a_call__.3} parent=11 // pred_check_branch
          %227 = sbr.rel (%p225) target = $region16
        $region15: #{a_call__.3} parent=11 // pred_region
          _
        $region16: #{a_call__.3} parent=11 // pred_fallthru
          _
        // Predicated region
        $region17: #{a_call__.3} parent=11 // pred_check
          %p228 = pneg %p98
        $region18: #{a_call__.3} parent=11 // pred_check_branch
          %230 = sbr.rel (%p228) target = $region20
        $region19: #{a_call__.3} parent=11 // pred_region
          _
        $region20: #{a_call__.3} parent=11 // pred_fallthru
          _
        // Predicated region
        $region21: #{a_call__.3} parent=11 // pred_check
          %p231 = pneg %p119
        $region22: #{a_call__.3} parent=11 // pred_check_branch
          %233 = sbr.rel (%p231) target = $region24
        $region23: #{a_call__.3} parent=11 // pred_region
          _
        $region24: #{a_call__.3} parent=11 // pred_fallthru
          _
        // Predicated region
        $region25: #{a_call__.3} parent=11 // pred_check
          %p234 = pneg %p140
        $region26: #{a_call__.3} parent=11 // pred_check_branch
          %236 = sbr.rel (%p234) target = $region28
        $region27: #{a_call__.3} parent=11 // pred_region
          _
        $region28: #{a_call__.3} parent=11 // pred_fallthru
          _
        // Predicated region
        $region29: #{a_call__.3} parent=11 // pred_check
          %p237 = pneg %p161
        $region30: #{a_call__.3} parent=11 // pred_check_branch
          %239 = sbr.rel (%p237) target = $region32
        $region31: #{a_call__.3} parent=11 // pred_region
          _
        $region32: #{a_call__.3} parent=11 // pred_fallthru
          _
        // Predicated region
        $region33: #{a_call__.3} parent=11 // pred_check
          %p240 = pneg %p182
        $region34: #{a_call__.3} parent=11 // pred_check_branch
          %242 = sbr.rel (%p240) target = $region36
        $region35: #{a_call__.3} parent=11 // pred_region
          _
        $region36: #{a_call__.3} parent=11 // pred_fallthru
          _
      $region12: #{a_call__.3} parent=5 // pred_fallthru
        _
      %p243 = scmp.lt.s32.totalorder %s16, 2
      // Predicated region
      $region37: #{a_call__.3} parent=5 // pred_check
        %p244 = pneg %p243
      $region38: #{a_call__.3} parent=5 // pred_check_branch
        %246 = sbr.rel (%p244) target = $region40
      $region39: #{a_call__.3} parent=5 // pred_region
        // Predicated region
        $region41: #{a_call__.3} parent=39 // pred_check
          %p247 = pneg %p50
        $region42: #{a_call__.3} parent=39 // pred_check_branch
          %249 = sbr.rel (%p247) target = $region44
        $region43: #{a_call__.3} parent=39 // pred_region
          %s250 = smul.u32 2, %s24
          %p251 = scmp.lt.s32.totalorder %s23, 1
          %s252 = scalar_select %p251, %s23, 1
          %p253 = scmp.lt.s32.totalorder %s250, 1
          %s254 = scalar_select %p253, %s250, 1
          %s255 = smul.addr %s252, 120
          %s256 = sadd.s32 %s254, %s255
          %s257 = smul.addr %s256, 4
          %s258 = scalar_lea.vmem %s0, %s257
          %s259 = smul.u32 2, %s24
        $region44: #{a_call__.3} parent=39 // pred_fallthru
          _
      $region40: #{a_call__.3} parent=5 // pred_fallthru
        _
      %p260 = scmp.le.s32.totalorder 1, %s16
      %p261 = scmp.lt.s32.totalorder %s16, 3
      %p262 = pnand %p260, %p261
      %p263 = pneg %p262
      // Predicated region
      $region45: #{a_call__.3} parent=5 // pred_check
        _
      $region46: #{a_call__.3} parent=5 // pred_check_branch
        %265 = sbr.rel (%p262) target = $region48
      $region47: #{a_call__.3} parent=5 // pred_region
        %s266 = ssub.s32 %s16, 1
        %s267 = smul.u32 2, %s26
        %p268 = scmp.lt.s32.totalorder %s25, 1
        %s269 = scalar_select %p268, %s25, 1
        %p270 = scmp.lt.s32.totalorder %s267, 1
        %s271 = scalar_select %p270, %s267, 1
        %s272 = smul.addr %s269, 120
        %s273 = sadd.s32 %s271, %s272
        %s274 = smul.addr %s273, 4
        %s275 = scalar_lea.vmem %s0, %s274
        %p276 = pneg %p56
        %p277 = pneg %p53
        %p278 = pneg %p77
        %p279 = pneg %p74
        %p280 = pneg %p98
        %p281 = pneg %p95
        %p282 = pneg %p119
        %p283 = pneg %p116
        %p284 = pneg %p140
        %p285 = pneg %p137
        %p286 = pneg %p161
        %p287 = pneg %p158
        %p288 = pneg %p182
        %p289 = pneg %p179
        %p290 = pneg %p210
        %p291 = pneg %p207
        %s292 = sand.u32 %s197, 1
        %s293 = scalar_lea.sflag [#allocation3], %s292
        %s294 = sand.u32 %s197, 1
        %s295 = smul.addr %s294, 16
        %s296 = scalar_lea.vmem [#allocation2], %s295
        %s297 = smul.u32 2, %s26
        %p298 = scmp.lt.s32.totalorder %s25, 1
        %s299 = scalar_select %p298, %s25, 1
        %p300 = scmp.lt.s32.totalorder %s297, 1
        %s301 = scalar_select %p300, %s297, 1
        %s302 = smul.addr %s299, 120
        %s303 = sadd.s32 %s301, %s302
        %s304 = smul.addr %s303, 4
        %s305 = scalar_lea.vmem %s0, %s304
        %s306 = smul.u32 2, %s26
        %s307 = smul.u32 2, %s26
        %v309 = vld [vmem:[%s305] sm:$0xf]
        %v310 = vld [vmem:[%s305 + $0x4] sm:$0xf]
        %v311 = vld [vmem:[%s305 + $0x8] sm:$0xf]
        %v312 = vld [vmem:[%s305 + $0xc] sm:$0xf]
        %v313 = vld [vmem:[%s305 + $0x10] sm:$0xf]
        %v314 = vld [vmem:[%s305 + $0x14] sm:$0xf]
        %v315 = vld [vmem:[%s305 + $0x18] sm:$0xf]
        %v316 = vld [vmem:[%s305 + $0x1c] sm:$0xf]
        %v317 = vld [vmem:[%s305 + $0x20] sm:$0xf]
        %v318 = vld [vmem:[%s305 + $0x24] sm:$0xf]
        %v319 = vld [vmem:[%s305 + $0x28] sm:$0xf]
        %v320 = vld [vmem:[%s305 + $0x2c] sm:$0xf]
        %v321 = vld [vmem:[%s305 + $0x30] sm:$0xf]
        %v322 = vld [vmem:[%s305 + $0x34] sm:$0xf]
        %v323 = vld [vmem:[%s305 + $0x38] sm:$0xf]
        %v324 = vld [vmem:[%s305 + $0x3c] sm:$0xf]
        %v325 = vld [vmem:[%s305 + $0x40] sm:$0xf]
        %v326 = vld [vmem:[%s305 + $0x44] sm:$0xf]
        %v327 = vld [vmem:[%s305 + $0x48] sm:$0xf]
        %v328 = vld [vmem:[%s305 + $0x4c] sm:$0xf]
        %v329 = vld [vmem:[%s305 + $0x50] sm:$0xf]
        %v330 = vld [vmem:[%s305 + $0x54] sm:$0xf]
        %v331 = vld [vmem:[%s305 + $0x60] sm:$0xf]
        %v332 = vld [vmem:[%s305 + $0x64] sm:$0xf]
        %v333 = vld [vmem:[%s305 + $0x68] sm:$0xf]
        %v334 = vld [vmem:[%s305 + $0x6c] sm:$0xf]
        %v335 = vld [vmem:[%s305 + $0x70] sm:$0xf]
        %v336 = vld [vmem:[%s305 + $0x74] sm:$0xf]
        %v337 = vld [vmem:[%s305 + $0x78] sm:$0xf]
        %v338 = vld [vmem:[%s305 + $0x7c] sm:$0xf]
        %v339 = vld [vmem:[%s305 + $0x80] sm:$0xf]
        %v340 = vld [vmem:[%s305 + $0x84] sm:$0xf]
        %v341 = vld [vmem:[%s305 + $0x88] sm:$0xf]
        %v342 = vld [vmem:[%s305 + $0x8c] sm:$0xf]
        %v343 = vld [vmem:[%s305 + $0x90] sm:$0xf]
        %v344 = vld [vmem:[%s305 + $0x94] sm:$0xf]
        %v345 = vld [vmem:[%s305 + $0x98] sm:$0xf]
        %v346 = vld [vmem:[%s305 + $0x9c] sm:$0xf]
        %v347 = vld [vmem:[%s305 + $0xa0] sm:$0xf]
        %v348 = vld [vmem:[%s305 + $0xa4] sm:$0xf]
        %v349 = vld [vmem:[%s305 + $0xa8] sm:$0xf]
        %v350 = vld [vmem:[%s305 + $0xac] sm:$0xf]
        %v351 = vld [vmem:[%s305 + $0xb0] sm:$0xf]
        %v352 = vld [vmem:[%s305 + $0xb4] sm:$0xf]
        %v353 = vld [vmem:[%s305 + $0xc0] sm:$0xf]
        %v354 = vld [vmem:[%s305 + $0xc4] sm:$0xf]
        %v355 = vld [vmem:[%s305 + $0xc8] sm:$0xf]
        %v356 = vld [vmem:[%s305 + $0xcc] sm:$0xf]
        %v357 = vld [vmem:[%s305 + $0xd0] sm:$0xf]
        %v358 = vld [vmem:[%s305 + $0xd4] sm:$0xf]
        %v359 = vld [vmem:[%s305 + $0xd8] sm:$0xf]
        %v360 = vld [vmem:[%s305 + $0xdc] sm:$0xf]
        %v361 = vld [vmem:[%s305 + $0xe0] sm:$0xf]
        %v362 = vld [vmem:[%s305 + $0xe4] sm:$0xf]
        %v363 = vld [vmem:[%s305 + $0xe8] sm:$0xf]
        %v364 = vld [vmem:[%s305 + $0xec] sm:$0xf]
        %v365 = vld [vmem:[%s305 + $0xf0] sm:$0xf]
        %v366 = vld [vmem:[%s305 + $0xf4] sm:$0xf]
        %v367 = vld [vmem:[%s305 + $0xf8] sm:$0xf]
        %v368 = vld [vmem:[%s305 + $0xfc] sm:$0xf]
        %v369 = vld [vmem:[%s305 + $0x100] sm:$0xf]
        %v370 = vld [vmem:[%s305 + $0x104] sm:$0xf]
        %v371 = vld [vmem:[%s305 + $0x108] sm:$0xf]
        %v372 = vld [vmem:[%s305 + $0x10c] sm:$0xf]
        %v373 = vld [vmem:[%s305 + $0x110] sm:$0xf]
        %v374 = vld [vmem:[%s305 + $0x114] sm:$0xf]
        %v375 = vld [vmem:[%s305 + $0x120] sm:$0xf]
        %v376 = vld [vmem:[%s305 + $0x124] sm:$0xf]
        %v377 = vld [vmem:[%s305 + $0x128] sm:$0xf]
        %v378 = vld [vmem:[%s305 + $0x12c] sm:$0xf]
        %v379 = vld [vmem:[%s305 + $0x130] sm:$0xf]
        %v380 = vld [vmem:[%s305 + $0x134] sm:$0xf]
        %v381 = vld [vmem:[%s305 + $0x138] sm:$0xf]
        %v382 = vld [vmem:[%s305 + $0x13c] sm:$0xf]
        %v383 = vld [vmem:[%s305 + $0x140] sm:$0xf]
        %v384 = vld [vmem:[%s305 + $0x144] sm:$0xf]
        %v385 = vld [vmem:[%s305 + $0x148] sm:$0xf]
        %v386 = vld [vmem:[%s305 + $0x14c] sm:$0xf]
        %v387 = vld [vmem:[%s305 + $0x150] sm:$0xf]
        %v388 = vld [vmem:[%s305 + $0x154] sm:$0xf]
        %v389 = vld [vmem:[%s305 + $0x158] sm:$0xf]
        %v390 = vld [vmem:[%s305 + $0x15c] sm:$0xf]
        %v391 = vld [vmem:[%s305 + $0x160] sm:$0xf]
        %v392 = vld [vmem:[%s305 + $0x164] sm:$0xf]
        %v393 = vld [vmem:[%s305 + $0x168] sm:$0xf]
        %v394 = vld [vmem:[%s305 + $0x16c] sm:$0xf]
        %v395 = vld [vmem:[%s305 + $0x170] sm:$0xf]
        %v396 = vld [vmem:[%s305 + $0x174] sm:$0xf]
        %v397 = vld [vmem:[%s305 + $0x180] sm:$0xf]
        %v398 = vld [vmem:[%s305 + $0x184] sm:$0xf]
        %v399 = vld [vmem:[%s305 + $0x188] sm:$0xf]
        %v400 = vld [vmem:[%s305 + $0x18c] sm:$0xf]
        %v401 = vld [vmem:[%s305 + $0x190] sm:$0xf]
        %v402 = vld [vmem:[%s305 + $0x194] sm:$0xf]
        %v403 = vld [vmem:[%s305 + $0x198] sm:$0xf]
        %v404 = vld [vmem:[%s305 + $0x19c] sm:$0xf]
        %v405 = vld [vmem:[%s305 + $0x1a0] sm:$0xf]
        %v406 = vld [vmem:[%s305 + $0x1a4] sm:$0xf]
        %v407 = vld [vmem:[%s305 + $0x1a8] sm:$0xf]
        %v408 = vld [vmem:[%s305 + $0x1ac] sm:$0xf]
        %v409 = vld [vmem:[%s305 + $0x1b0] sm:$0xf]
        %v410 = vld [vmem:[%s305 + $0x1b4] sm:$0xf]
        %v411 = vld [vmem:[%s305 + $0x1b8] sm:$0xf]
        %v412 = vld [vmem:[%s305 + $0x1bc] sm:$0xf]
        %v413 = vld [vmem:[%s305 + $0x1c0] sm:$0xf]
        %v414 = vld [vmem:[%s305 + $0x1c4] sm:$0xf]
        %v415 = vld [vmem:[%s305 + $0x1c8] sm:$0xf]
        %v416 = vld [vmem:[%s305 + $0x1cc] sm:$0xf]
        %v417 = vld [vmem:[%s305 + $0x1d0] sm:$0xf]
        %v418 = vld [vmem:[%s305 + $0x1d4] sm:$0xf]
        %v419 = vld [vmem:[%s1] sm:$0xf]
        %v420 = vld [vmem:[%s1 + $0x4] sm:$0xf]
        %v421 = vld [vmem:[%s1 + $0x8] sm:$0xf]
        %v422 = vld [vmem:[%s1 + $0xc] sm:$0xf]
        %v423 = vld [vmem:[%s1 + $0x10] sm:$0xf]
        %v424 = vld [vmem:[%s1 + $0x14] sm:$0xf]
        %v425 = vld [vmem:[%s1 + $0x18] sm:$0xf]
        %v426 = vld [vmem:[%s1 + $0x1c] sm:$0xf]
        %v427 = vld [vmem:[%s1 + $0x20] sm:$0xf]
        %v428 = vld [vmem:[%s1 + $0x24] sm:$0xf]
        %v429 = vld [vmem:[%s1 + $0x28] sm:$0xf]
        %v430 = vld [vmem:[%s1 + $0x2c] sm:$0xf]
        %v431 = vld [vmem:[%s1 + $0x30] sm:$0xf]
        %v432 = vld [vmem:[%s1 + $0x34] sm:$0xf]
        %v433 = vld [vmem:[%s1 + $0x38] sm:$0xf]
        %v434 = vld [vmem:[%s1 + $0x3c] sm:$0xf]
        %v435 = vld [vmem:[%s1 + $0x40] sm:$0xf]
        %v436 = vld [vmem:[%s1 + $0x44] sm:$0xf]
        %v437 = vld [vmem:[%s1 + $0x48] sm:$0xf]
        %v438 = vld [vmem:[%s1 + $0x4c] sm:$0xf]
        %v439 = vld [vmem:[%s1 + $0x50] sm:$0xf]
        %v440 = vld [vmem:[%s1 + $0x54] sm:$0xf]
        %v441 = vld [vmem:[%s1 + $0x58] sm:$0xf]
        %v442 = vld [vmem:[%s1 + $0x5c] sm:$0xf]
        %v443 = vld [vmem:[%s1 + $0x60] sm:$0xf]
        %v444 = vld [vmem:[%s1 + $0x64] sm:$0xf]
        %v445 = vld [vmem:[%s1 + $0x68] sm:$0xf]
        %v446 = vld [vmem:[%s1 + $0x6c] sm:$0xf]
        %v447 = vld [vmem:[%s1 + $0x70] sm:$0xf]
        %v448 = vld [vmem:[%s1 + $0x74] sm:$0xf]
        %v449 = vld [vmem:[%s1 + $0x78] sm:$0xf]
        %v450 = vld [vmem:[%s1 + $0x7c] sm:$0xf]
        %v451 = vld [vmem:[%s1 + $0x80] sm:$0xf]
        %v452 = vld [vmem:[%s1 + $0x84] sm:$0xf]
        %v453 = vld [vmem:[%s1 + $0x88] sm:$0xf]
        %v454 = vld [vmem:[%s1 + $0x8c] sm:$0xf]
        %v455 = vld [vmem:[%s1 + $0x90] sm:$0xf]
        %v456 = vld [vmem:[%s1 + $0x94] sm:$0xf]
        %v457 = vld [vmem:[%s1 + $0x98] sm:$0xf]
        %v458 = vld [vmem:[%s1 + $0x9c] sm:$0xf]
        %v459 = vld [vmem:[%s1 + $0xa0] sm:$0xf]
        %v460 = vld [vmem:[%s1 + $0xa4] sm:$0xf]
        %v461 = vld [vmem:[%s1 + $0xa8] sm:$0xf]
        %v462 = vld [vmem:[%s1 + $0xac] sm:$0xf]
        %v463 = vld [vmem:[%s1 + $0xb0] sm:$0xf]
        %v464 = vld [vmem:[%s1 + $0xb4] sm:$0xf]
        %v465 = vld [vmem:[%s1 + $0xb8] sm:$0xf]
        %v466 = vld [vmem:[%s1 + $0xbc] sm:$0xf]
        %v467 = vld [vmem:[%s1 + $0xc0] sm:$0xf]
        %v468 = vld [vmem:[%s1 + $0xc4] sm:$0xf]
        %v469 = vld [vmem:[%s1 + $0xc8] sm:$0xf]
        %v470 = vld [vmem:[%s1 + $0xcc] sm:$0xf]
        %v471 = vld [vmem:[%s1 + $0xd0] sm:$0xf]
        %v472 = vld [vmem:[%s1 + $0xd4] sm:$0xf]
        %v473 = vld [vmem:[%s1 + $0xd8] sm:$0xf]
        %v474 = vld [vmem:[%s1 + $0xdc] sm:$0xf]
        %v475 = vld [vmem:[%s1 + $0xe0] sm:$0xf]
        %v476 = vld [vmem:[%s1 + $0xe4] sm:$0xf]
        %v477 = vld [vmem:[%s1 + $0xe8] sm:$0xf]
        %v478 = vld [vmem:[%s1 + $0xec] sm:$0xf]
        %v479 = vld [vmem:[%s1 + $0xf0] sm:$0xf]
        %v480 = vld [vmem:[%s1 + $0xf4] sm:$0xf]
        %v481 = vld [vmem:[%s1 + $0xf8] sm:$0xf]
        %v482 = vld [vmem:[%s1 + $0xfc] sm:$0xf]
        %v483 = vld [vmem:[%s1 + $0x100] sm:$0xf]
        %v484 = vld [vmem:[%s1 + $0x104] sm:$0xf]
        %v485 = vld [vmem:[%s1 + $0x108] sm:$0xf]
        %v486 = vld [vmem:[%s1 + $0x10c] sm:$0xf]
        %v487 = vld [vmem:[%s1 + $0x110] sm:$0xf]
        %v488 = vld [vmem:[%s1 + $0x114] sm:$0xf]
        %v489 = vld [vmem:[%s1 + $0x118] sm:$0xf]
        %v490 = vld [vmem:[%s1 + $0x11c] sm:$0xf]
        %v491 = vld [vmem:[%s1 + $0x120] sm:$0xf]
        %v492 = vld [vmem:[%s1 + $0x124] sm:$0xf]
        %v493 = vld [vmem:[%s1 + $0x128] sm:$0xf]
        %v494 = vld [vmem:[%s1 + $0x12c] sm:$0xf]
        %v495 = vld [vmem:[%s1 + $0x130] sm:$0xf]
        %v496 = vld [vmem:[%s1 + $0x134] sm:$0xf]
        %v497 = vld [vmem:[%s1 + $0x138] sm:$0xf]
        %v498 = vld [vmem:[%s1 + $0x13c] sm:$0xf]
        %v499 = vld [vmem:[%s1 + $0x140] sm:$0xf]
        %v500 = vld [vmem:[%s1 + $0x144] sm:$0xf]
        %v501 = vld [vmem:[%s1 + $0x148] sm:$0xf]
        %v502 = vld [vmem:[%s1 + $0x14c] sm:$0xf]
        %v503 = vld [vmem:[%s1 + $0x150] sm:$0xf]
        %v504 = vld [vmem:[%s1 + $0x154] sm:$0xf]
        %v505 = vld [vmem:[%s1 + $0x158] sm:$0xf]
        %v506 = vld [vmem:[%s1 + $0x15c] sm:$0xf]
        %v507 = vld [vmem:[%s1 + $0x160] sm:$0xf]
        %v508 = vld [vmem:[%s1 + $0x164] sm:$0xf]
        %v509 = vld [vmem:[%s1 + $0x168] sm:$0xf]
        %v510 = vld [vmem:[%s1 + $0x16c] sm:$0xf]
        %v511 = vld [vmem:[%s1 + $0x170] sm:$0xf]
        %v512 = vld [vmem:[%s1 + $0x174] sm:$0xf]
        %v513 = vld [vmem:[%s1 + $0x178] sm:$0xf]
        %v514 = vld [vmem:[%s1 + $0x17c] sm:$0xf]
        %v515 = vld [vmem:[%s1 + $0x180] sm:$0xf]
        %v516 = vld [vmem:[%s1 + $0x184] sm:$0xf]
        %v517 = vld [vmem:[%s1 + $0x188] sm:$0xf]
        %v518 = vld [vmem:[%s1 + $0x18c] sm:$0xf]
        %v519 = vld [vmem:[%s1 + $0x190] sm:$0xf]
        %v520 = vld [vmem:[%s1 + $0x194] sm:$0xf]
        %v521 = vld [vmem:[%s1 + $0x198] sm:$0xf]
        %v522 = vld [vmem:[%s1 + $0x19c] sm:$0xf]
        %v523 = vld [vmem:[%s1 + $0x1a0] sm:$0xf]
        %v524 = vld [vmem:[%s1 + $0x1a4] sm:$0xf]
        %v525 = vld [vmem:[%s1 + $0x1a8] sm:$0xf]
        %v526 = vld [vmem:[%s1 + $0x1ac] sm:$0xf]
        %v527 = vld [vmem:[%s1 + $0x1b0] sm:$0xf]
        %v528 = vld [vmem:[%s1 + $0x1b4] sm:$0xf]
        %v529 = vld [vmem:[%s1 + $0x1b8] sm:$0xf]
        %v530 = vld [vmem:[%s1 + $0x1bc] sm:$0xf]
        %v531 = vld [vmem:[%s1 + $0x1c0] sm:$0xf]
        %v532 = vld [vmem:[%s1 + $0x1c4] sm:$0xf]
        %v533 = vld [vmem:[%s1 + $0x1c8] sm:$0xf]
        %v534 = vld [vmem:[%s1 + $0x1cc] sm:$0xf]
        %v535 = vld [vmem:[%s1 + $0x1d0] sm:$0xf]
        %v536 = vld [vmem:[%s1 + $0x1d4] sm:$0xf]
        %v537 = vld [vmem:[%s1 + $0x1d8] sm:$0xf]
        %v538 = vld [vmem:[%s1 + $0x1dc] sm:$0xf]
        %v539 = vld [vmem:[%s1 + $0x1e0] sm:$0xf]
        %v540 = vld [vmem:[%s1 + $0x1e4] sm:$0xf]
        %v541 = vld [vmem:[%s1 + $0x1e8] sm:$0xf]
        %v542 = vld [vmem:[%s1 + $0x1ec] sm:$0xf]
        %v543 = vld [vmem:[%s1 + $0x1f0] sm:$0xf]
        %v544 = vld [vmem:[%s1 + $0x1f4] sm:$0xf]
        %v545 = vld [vmem:[%s1 + $0x1f8] sm:$0xf]
        %v546 = vld [vmem:[%s1 + $0x1fc] sm:$0xf]
        %v547 = vld [vmem:[%s1 + $0x200] sm:$0xf]
        %v548 = vld [vmem:[%s1 + $0x204] sm:$0xf]
        %v549 = vld [vmem:[%s1 + $0x208] sm:$0xf]
        %v550 = vld [vmem:[%s1 + $0x20c] sm:$0xf]
        %v551 = vld [vmem:[%s1 + $0x210] sm:$0xf]
        %v552 = vld [vmem:[%s1 + $0x214] sm:$0xf]
        %v553 = vld [vmem:[%s1 + $0x218] sm:$0xf]
        %v554 = vld [vmem:[%s1 + $0x21c] sm:$0xf]
        %v555 = vld [vmem:[%s1 + $0x220] sm:$0xf]
        %v556 = vld [vmem:[%s1 + $0x224] sm:$0xf]
        %v557 = vld [vmem:[%s1 + $0x228] sm:$0xf]
        %v558 = vld [vmem:[%s1 + $0x22c] sm:$0xf]
        %v559 = vld [vmem:[%s1 + $0x230] sm:$0xf]
        %v560 = vld [vmem:[%s1 + $0x234] sm:$0xf]
        %v561 = vld [vmem:[%s1 + $0x238] sm:$0xf]
        %v562 = vld [vmem:[%s1 + $0x23c] sm:$0xf]
        %v563 = vld [vmem:[%s1 + $0x240] sm:$0xf]
        %v564 = vld [vmem:[%s1 + $0x244] sm:$0xf]
        %v565 = vld [vmem:[%s1 + $0x248] sm:$0xf]
        %v566 = vld [vmem:[%s1 + $0x24c] sm:$0xf]
        %v567 = vld [vmem:[%s1 + $0x250] sm:$0xf]
        %v568 = vld [vmem:[%s1 + $0x254] sm:$0xf]
        %v569 = vld [vmem:[%s1 + $0x258] sm:$0xf]
        %v570 = vld [vmem:[%s1 + $0x25c] sm:$0xf]
        %v571 = vld [vmem:[%s1 + $0x260] sm:$0xf]
        %v572 = vld [vmem:[%s1 + $0x264] sm:$0xf]
        %v573 = vld [vmem:[%s1 + $0x268] sm:$0xf]
        %v574 = vld [vmem:[%s1 + $0x26c] sm:$0xf]
        %v575 = vld [vmem:[%s1 + $0x270] sm:$0xf]
        %v576 = vld [vmem:[%s1 + $0x274] sm:$0xf]
        %v577 = vld [vmem:[%s1 + $0x278] sm:$0xf]
        %v578 = vld [vmem:[%s1 + $0x27c] sm:$0xf]
        %v579 = vld [vmem:[%s1 + $0x280] sm:$0xf]
        %v580 = vld [vmem:[%s1 + $0x284] sm:$0xf]
        %v581 = vld [vmem:[%s1 + $0x288] sm:$0xf]
        %v582 = vld [vmem:[%s1 + $0x28c] sm:$0xf]
        %v583 = vld [vmem:[%s1 + $0x290] sm:$0xf]
        %v584 = vld [vmem:[%s1 + $0x294] sm:$0xf]
        %v585 = vld [vmem:[%s1 + $0x298] sm:$0xf]
        %v586 = vld [vmem:[%s1 + $0x29c] sm:$0xf]
        %v587 = vld [vmem:[%s1 + $0x2a0] sm:$0xf]
        %v588 = vld [vmem:[%s1 + $0x2a4] sm:$0xf]
        %v589 = vld [vmem:[%s1 + $0x2a8] sm:$0xf]
        %v590 = vld [vmem:[%s1 + $0x2ac] sm:$0xf]
        %v591 = vld [vmem:[%s1 + $0x2b0] sm:$0xf]
        %v592 = vld [vmem:[%s1 + $0x2b4] sm:$0xf]
        %v593 = vld [vmem:[%s1 + $0x2b8] sm:$0xf]
        %v594 = vld [vmem:[%s1 + $0x2bc] sm:$0xf]
        %v595 = vld [vmem:[%s1 + $0x2c0] sm:$0xf]
        %v596 = vld [vmem:[%s1 + $0x2c4] sm:$0xf]
        %v597 = vld [vmem:[%s1 + $0x2c8] sm:$0xf]
        %v598 = vld [vmem:[%s1 + $0x2cc] sm:$0xf]
        %v599 = vld [vmem:[%s1 + $0x2d0] sm:$0xf]
        %v600 = vld [vmem:[%s1 + $0x2d4] sm:$0xf]
        %v601 = vld [vmem:[%s1 + $0x2d8] sm:$0xf]
        %v602 = vld [vmem:[%s1 + $0x2dc] sm:$0xf]
        %v603 = vld [vmem:[%s1 + $0x2e0] sm:$0xf]
        %v604 = vld [vmem:[%s1 + $0x2e4] sm:$0xf]
        %v605 = vld [vmem:[%s1 + $0x2e8] sm:$0xf]
        %v606 = vld [vmem:[%s1 + $0x2ec] sm:$0xf]
        %v607 = vld [vmem:[%s1 + $0x2f0] sm:$0xf]
        %v608 = vld [vmem:[%s1 + $0x2f4] sm:$0xf]
        %v609 = vld [vmem:[%s1 + $0x2f8] sm:$0xf]
        %v610 = vld [vmem:[%s1 + $0x2fc] sm:$0xf]
        %v611 = vld [vmem:[%s1 + $0x300] sm:$0xf]
        %v612 = vld [vmem:[%s1 + $0x304] sm:$0xf]
        %v613 = vld [vmem:[%s1 + $0x308] sm:$0xf]
        %v614 = vld [vmem:[%s1 + $0x30c] sm:$0xf]
        %v615 = vld [vmem:[%s1 + $0x310] sm:$0xf]
        %v616 = vld [vmem:[%s1 + $0x314] sm:$0xf]
        %v617 = vld [vmem:[%s1 + $0x318] sm:$0xf]
        %v618 = vld [vmem:[%s1 + $0x31c] sm:$0xf]
        %v619 = vld [vmem:[%s1 + $0x320] sm:$0xf]
        %v620 = vld [vmem:[%s1 + $0x324] sm:$0xf]
        %v621 = vld [vmem:[%s1 + $0x328] sm:$0xf]
        %v622 = vld [vmem:[%s1 + $0x32c] sm:$0xf]
        %v623 = vld [vmem:[%s1 + $0x330] sm:$0xf]
        %v624 = vld [vmem:[%s1 + $0x334] sm:$0xf]
        %v625 = vld [vmem:[%s1 + $0x338] sm:$0xf]
        %v626 = vld [vmem:[%s1 + $0x33c] sm:$0xf]
        %v627 = vld [vmem:[%s1 + $0x340] sm:$0xf]
        %v628 = vld [vmem:[%s1 + $0x344] sm:$0xf]
        %v629 = vld [vmem:[%s1 + $0x348] sm:$0xf]
        %v630 = vld [vmem:[%s1 + $0x34c] sm:$0xf]
        %v631 = vld [vmem:[%s1 + $0x350] sm:$0xf]
        %v632 = vld [vmem:[%s1 + $0x354] sm:$0xf]
        %v633 = vld [vmem:[%s1 + $0x358] sm:$0xf]
        %v634 = vld [vmem:[%s1 + $0x35c] sm:$0xf]
        %v635 = vld [vmem:[%s1 + $0x360] sm:$0xf]
        %v636 = vld [vmem:[%s1 + $0x364] sm:$0xf]
        %v637 = vld [vmem:[%s1 + $0x368] sm:$0xf]
        %v638 = vld [vmem:[%s1 + $0x36c] sm:$0xf]
        %v639 = vld [vmem:[%s1 + $0x370] sm:$0xf]
        %v640 = vld [vmem:[%s1 + $0x374] sm:$0xf]
        %v641 = vld [vmem:[%s1 + $0x378] sm:$0xf]
        %v642 = vld [vmem:[%s1 + $0x37c] sm:$0xf]
        %v643 = vld [vmem:[%s1 + $0x380] sm:$0xf]
        %v644 = vld [vmem:[%s1 + $0x384] sm:$0xf]
        %v645 = vld [vmem:[%s1 + $0x388] sm:$0xf]
        %v646 = vld [vmem:[%s1 + $0x38c] sm:$0xf]
        %v647 = vld [vmem:[%s1 + $0x390] sm:$0xf]
        %v648 = vld [vmem:[%s1 + $0x394] sm:$0xf]
        %v649 = vld [vmem:[%s1 + $0x398] sm:$0xf]
        %v650 = vld [vmem:[%s1 + $0x39c] sm:$0xf]
        %v651 = vld [vmem:[%s1 + $0x3a0] sm:$0xf]
        %v652 = vld [vmem:[%s1 + $0x3a4] sm:$0xf]
        %v653 = vld [vmem:[%s1 + $0x3a8] sm:$0xf]
        %v654 = vld [vmem:[%s1 + $0x3ac] sm:$0xf]
        %v655 = vld [vmem:[%s1 + $0x3b0] sm:$0xf]
        %v656 = vld [vmem:[%s1 + $0x3b4] sm:$0xf]
        %v657 = vld [vmem:[%s1 + $0x3b8] sm:$0xf]
        %v658 = vld [vmem:[%s1 + $0x3bc] sm:$0xf]
        %v659 = vld [vmem:[%s1 + $0x3c0] sm:$0xf]
        %v660 = vld [vmem:[%s1 + $0x3c4] sm:$0xf]
        %v661 = vld [vmem:[%s1 + $0x3c8] sm:$0xf]
        %v662 = vld [vmem:[%s1 + $0x3cc] sm:$0xf]
        %v663 = vld [vmem:[%s1 + $0x3d0] sm:$0xf]
        %v664 = vld [vmem:[%s1 + $0x3d4] sm:$0xf]
        %v665 = vld [vmem:[%s1 + $0x3d8] sm:$0xf]
        %v666 = vld [vmem:[%s1 + $0x3dc] sm:$0xf]
        %v667 = vld [vmem:[%s1 + $0x3e0] sm:$0xf]
        %v668 = vld [vmem:[%s1 + $0x3e4] sm:$0xf]
        %v669 = vld [vmem:[%s1 + $0x3e8] sm:$0xf]
        %v670 = vld [vmem:[%s1 + $0x3ec] sm:$0xf]
        %v671 = vld [vmem:[%s1 + $0x3f0] sm:$0xf]
        %v672 = vld [vmem:[%s1 + $0x3f4] sm:$0xf]
        %v673 = vld [vmem:[%s1 + $0x3f8] sm:$0xf]
        %v674 = vld [vmem:[%s1 + $0x3fc] sm:$0xf]
        %v675 = vld [vmem:[%s1 + $0x400] sm:$0xf]
        %v676 = vld [vmem:[%s1 + $0x404] sm:$0xf]
        %v677 = vld [vmem:[%s1 + $0x408] sm:$0xf]
        %v678 = vld [vmem:[%s1 + $0x40c] sm:$0xf]
        %v679 = vld [vmem:[%s1 + $0x410] sm:$0xf]
        %v680 = vld [vmem:[%s1 + $0x414] sm:$0xf]
        %v681 = vld [vmem:[%s1 + $0x418] sm:$0xf]
        %v682 = vld [vmem:[%s1 + $0x41c] sm:$0xf]
        %v683 = vld [vmem:[%s1 + $0x420] sm:$0xf]
        %v684 = vld [vmem:[%s1 + $0x424] sm:$0xf]
        %v685 = vld [vmem:[%s1 + $0x428] sm:$0xf]
        %v686 = vld [vmem:[%s1 + $0x42c] sm:$0xf]
        %v687 = vld [vmem:[%s1 + $0x430] sm:$0xf]
        %v688 = vld [vmem:[%s1 + $0x434] sm:$0xf]
        %v689 = vld [vmem:[%s1 + $0x438] sm:$0xf]
        %v690 = vld [vmem:[%s1 + $0x43c] sm:$0xf]
        %v691 = vld [vmem:[%s1 + $0x440] sm:$0xf]
        %v692 = vld [vmem:[%s1 + $0x444] sm:$0xf]
        %v693 = vld [vmem:[%s1 + $0x448] sm:$0xf]
        %v694 = vld [vmem:[%s1 + $0x44c] sm:$0xf]
        %v695 = vld [vmem:[%s1 + $0x450] sm:$0xf]
        %v696 = vld [vmem:[%s1 + $0x454] sm:$0xf]
        %v697 = vld [vmem:[%s1 + $0x458] sm:$0xf]
        %v698 = vld [vmem:[%s1 + $0x45c] sm:$0xf]
        %v699 = vld [vmem:[%s1 + $0x460] sm:$0xf]
        %v700 = vld [vmem:[%s1 + $0x464] sm:$0xf]
        %v701 = vld [vmem:[%s1 + $0x468] sm:$0xf]
        %v702 = vld [vmem:[%s1 + $0x46c] sm:$0xf]
        %v703 = vld [vmem:[%s1 + $0x470] sm:$0xf]
        %v704 = vld [vmem:[%s1 + $0x474] sm:$0xf]
        %v705 = vld [vmem:[%s1 + $0x478] sm:$0xf]
        %v706 = vld [vmem:[%s1 + $0x47c] sm:$0xf]
        %v707 = vld [vmem:[%s1 + $0x480] sm:$0xf]
        %v708 = vld [vmem:[%s1 + $0x484] sm:$0xf]
        %v709 = vld [vmem:[%s1 + $0x488] sm:$0xf]
        %v710 = vld [vmem:[%s1 + $0x48c] sm:$0xf]
        %v711 = vld [vmem:[%s1 + $0x490] sm:$0xf]
        %v712 = vld [vmem:[%s1 + $0x494] sm:$0xf]
        %v713 = vld [vmem:[%s1 + $0x498] sm:$0xf]
        %v714 = vld [vmem:[%s1 + $0x49c] sm:$0xf]
        %v715 = vld [vmem:[%s1 + $0x4a0] sm:$0xf]
        %v716 = vld [vmem:[%s1 + $0x4a4] sm:$0xf]
        %v717 = vld [vmem:[%s1 + $0x4a8] sm:$0xf]
        %v718 = vld [vmem:[%s1 + $0x4ac] sm:$0xf]
        %v719 = vld [vmem:[%s1 + $0x4b0] sm:$0xf]
        %v720 = vld [vmem:[%s1 + $0x4b4] sm:$0xf]
        %v721 = vld [vmem:[%s1 + $0x4b8] sm:$0xf]
        %v722 = vld [vmem:[%s1 + $0x4bc] sm:$0xf]
        %v723 = vld [vmem:[%s1 + $0x4c0] sm:$0xf]
        %v724 = vld [vmem:[%s1 + $0x4c4] sm:$0xf]
        %v725 = vld [vmem:[%s1 + $0x4c8] sm:$0xf]
        %v726 = vld [vmem:[%s1 + $0x4cc] sm:$0xf]
        %v727 = vld [vmem:[%s1 + $0x4d0] sm:$0xf]
        %v728 = vld [vmem:[%s1 + $0x4d4] sm:$0xf]
        %v729 = vld [vmem:[%s1 + $0x4d8] sm:$0xf]
        %v730 = vld [vmem:[%s1 + $0x4dc] sm:$0xf]
        %v731 = vld [vmem:[%s1 + $0x4e0] sm:$0xf]
        %v732 = vld [vmem:[%s1 + $0x4e4] sm:$0xf]
        %v733 = vld [vmem:[%s1 + $0x4e8] sm:$0xf]
        %v734 = vld [vmem:[%s1 + $0x4ec] sm:$0xf]
        %v735 = vld [vmem:[%s1 + $0x4f0] sm:$0xf]
        %v736 = vld [vmem:[%s1 + $0x4f4] sm:$0xf]
        %v737 = vld [vmem:[%s1 + $0x4f8] sm:$0xf]
        %v738 = vld [vmem:[%s1 + $0x4fc] sm:$0xf]
        %v739 = vld [vmem:[%s1 + $0x500] sm:$0xf]
        %v740 = vld [vmem:[%s1 + $0x504] sm:$0xf]
        %v741 = vld [vmem:[%s1 + $0x508] sm:$0xf]
        %v742 = vld [vmem:[%s1 + $0x50c] sm:$0xf]
        %v743 = vld [vmem:[%s1 + $0x510] sm:$0xf]
        %v744 = vld [vmem:[%s1 + $0x514] sm:$0xf]
        %v745 = vld [vmem:[%s1 + $0x518] sm:$0xf]
        %v746 = vld [vmem:[%s1 + $0x51c] sm:$0xf]
        %v747 = vld [vmem:[%s1 + $0x520] sm:$0xf]
        %v748 = vld [vmem:[%s1 + $0x524] sm:$0xf]
        %v749 = vld [vmem:[%s1 + $0x528] sm:$0xf]
        %v750 = vld [vmem:[%s1 + $0x52c] sm:$0xf]
        %v751 = vld [vmem:[%s1 + $0x530] sm:$0xf]
        %v752 = vld [vmem:[%s1 + $0x534] sm:$0xf]
        %v753 = vld [vmem:[%s1 + $0x538] sm:$0xf]
        %v754 = vld [vmem:[%s1 + $0x53c] sm:$0xf]
        %v755 = vld [vmem:[%s1 + $0x540] sm:$0xf]
        %v756 = vld [vmem:[%s1 + $0x544] sm:$0xf]
        %v757 = vld [vmem:[%s1 + $0x548] sm:$0xf]
        %v758 = vld [vmem:[%s1 + $0x54c] sm:$0xf]
        %v759 = vld [vmem:[%s1 + $0x550] sm:$0xf]
        %v760 = vld [vmem:[%s1 + $0x554] sm:$0xf]
        %v761 = vld [vmem:[%s1 + $0x558] sm:$0xf]
        %v762 = vld [vmem:[%s1 + $0x55c] sm:$0xf]
        %v763 = vld [vmem:[%s1 + $0x560] sm:$0xf]
        %v764 = vld [vmem:[%s1 + $0x564] sm:$0xf]
        %v765 = vld [vmem:[%s1 + $0x568] sm:$0xf]
        %v766 = vld [vmem:[%s1 + $0x56c] sm:$0xf]
        %v767 = vld [vmem:[%s1 + $0x570] sm:$0xf]
        %v768 = vld [vmem:[%s1 + $0x574] sm:$0xf]
        %v769 = vld [vmem:[%s1 + $0x578] sm:$0xf]
        %v770 = vld [vmem:[%s1 + $0x57c] sm:$0xf]
        %v771 = vld [vmem:[%s1 + $0x580] sm:$0xf]
        %v772 = vld [vmem:[%s1 + $0x584] sm:$0xf]
        %v773 = vld [vmem:[%s1 + $0x588] sm:$0xf]
        %v774 = vld [vmem:[%s1 + $0x58c] sm:$0xf]
        %v775 = vld [vmem:[%s1 + $0x590] sm:$0xf]
        %v776 = vld [vmem:[%s1 + $0x594] sm:$0xf]
        %v777 = vld [vmem:[%s1 + $0x598] sm:$0xf]
        %v778 = vld [vmem:[%s1 + $0x59c] sm:$0xf]
        %v779 = vld [vmem:[%s1 + $0x5a0] sm:$0xf]
        %v780 = vld [vmem:[%s1 + $0x5a4] sm:$0xf]
        %v781 = vld [vmem:[%s1 + $0x5a8] sm:$0xf]
        %v782 = vld [vmem:[%s1 + $0x5ac] sm:$0xf]
        %v783 = vld [vmem:[%s1 + $0x5b0] sm:$0xf]
        %v784 = vld [vmem:[%s1 + $0x5b4] sm:$0xf]
        %v785 = vld [vmem:[%s1 + $0x5b8] sm:$0xf]
        %v786 = vld [vmem:[%s1 + $0x5bc] sm:$0xf]
        %v787 = vld [vmem:[%s1 + $0x5c0] sm:$0xf]
        %v788 = vld [vmem:[%s1 + $0x5c4] sm:$0xf]
        %v789 = vld [vmem:[%s1 + $0x5c8] sm:$0xf]
        %v790 = vld [vmem:[%s1 + $0x5cc] sm:$0xf]
        %v791 = vld [vmem:[%s1 + $0x5d0] sm:$0xf]
        %v792 = vld [vmem:[%s1 + $0x5d4] sm:$0xf]
        %v793 = vld [vmem:[%s1 + $0x5d8] sm:$0xf]
        %v794 = vld [vmem:[%s1 + $0x5dc] sm:$0xf]
        %v795 = vld [vmem:[%s1 + $0x5e0] sm:$0xf]
        %v796 = vld [vmem:[%s1 + $0x5e4] sm:$0xf]
        %v797 = vld [vmem:[%s1 + $0x5e8] sm:$0xf]
        %v798 = vld [vmem:[%s1 + $0x5ec] sm:$0xf]
        %v799 = vld [vmem:[%s1 + $0x5f0] sm:$0xf]
        %v800 = vld [vmem:[%s1 + $0x5f4] sm:$0xf]
        %v801 = vld [vmem:[%s1 + $0x5f8] sm:$0xf]
        %v802 = vld [vmem:[%s1 + $0x5fc] sm:$0xf]
        %v803 = vld [vmem:[%s1 + $0x600] sm:$0xf]
        %v804 = vld [vmem:[%s1 + $0x604] sm:$0xf]
        %v805 = vld [vmem:[%s1 + $0x608] sm:$0xf]
        %v806 = vld [vmem:[%s1 + $0x60c] sm:$0xf]
        %v807 = vld [vmem:[%s1 + $0x610] sm:$0xf]
        %v808 = vld [vmem:[%s1 + $0x614] sm:$0xf]
        %v809 = vld [vmem:[%s1 + $0x618] sm:$0xf]
        %v810 = vld [vmem:[%s1 + $0x61c] sm:$0xf]
        %v811 = vld [vmem:[%s1 + $0x620] sm:$0xf]
        %v812 = vld [vmem:[%s1 + $0x624] sm:$0xf]
        %v813 = vld [vmem:[%s1 + $0x628] sm:$0xf]
        %v814 = vld [vmem:[%s1 + $0x62c] sm:$0xf]
        %v815 = vld [vmem:[%s1 + $0x630] sm:$0xf]
        %v816 = vld [vmem:[%s1 + $0x634] sm:$0xf]
        %v817 = vld [vmem:[%s1 + $0x638] sm:$0xf]
        %v818 = vld [vmem:[%s1 + $0x63c] sm:$0xf]
        %v819 = vld [vmem:[%s4] sm:$0xf]
        %v820 = vld [vmem:[%s4 + $0x4] sm:$0xf]
        %v821 = vld [vmem:[%s4 + $0x8] sm:$0xf]
        %v822 = vld [vmem:[%s4 + $0xc] sm:$0xf]
        %v823 = vld [vmem:[%s4 + $0x10] sm:$0xf]
        %v824 = vld [vmem:[%s4 + $0x14] sm:$0xf]
        %v825 = vld [vmem:[%s4 + $0x18] sm:$0xf]
        %v826 = vld [vmem:[%s4 + $0x1c] sm:$0xf]
        %v827 = vld [vmem:[%s4 + $0x20] sm:$0xf]
        %v828 = vld [vmem:[%s4 + $0x24] sm:$0xf]
        %v829 = vld [vmem:[%s4 + $0x28] sm:$0xf]
        %v830 = vld [vmem:[%s4 + $0x2c] sm:$0xf]
        %v831 = vld [vmem:[%s4 + $0x30] sm:$0xf]
        %v832 = vld [vmem:[%s4 + $0x34] sm:$0xf]
        %v833 = vld [vmem:[%s4 + $0x38] sm:$0xf]
        %v834 = vld [vmem:[%s4 + $0x3c] sm:$0xf]
        %v835 = vld [vmem:[%s4 + $0x40] sm:$0xf]
        %v836 = vld [vmem:[%s4 + $0x44] sm:$0xf]
        %v837 = vld [vmem:[%s4 + $0x48] sm:$0xf]
        %v838 = vld [vmem:[%s4 + $0x4c] sm:$0xf]
        %v839 = vld [vmem:[%s4 + $0x50] sm:$0xf]
        %v840 = vld [vmem:[%s4 + $0x54] sm:$0xf]
        %v841 = vld [vmem:[%s4 + $0x58] sm:$0xf]
        %v842 = vld [vmem:[%s4 + $0x5c] sm:$0xf]
        %v843 = vld [vmem:[%s4 + $0x60] sm:$0xf]
        %v844 = vld [vmem:[%s4 + $0x64] sm:$0xf]
        %v845 = vld [vmem:[%s4 + $0x68] sm:$0xf]
        %v846 = vld [vmem:[%s4 + $0x6c] sm:$0xf]
        %v847 = vld [vmem:[%s4 + $0x70] sm:$0xf]
        %v848 = vld [vmem:[%s4 + $0x74] sm:$0xf]
        %v849 = vld [vmem:[%s4 + $0x78] sm:$0xf]
        %v850 = vld [vmem:[%s4 + $0x7c] sm:$0xf]
        %v853 = vunpack.c.l.b16 %v331
        %v854 = vunpack.c.l.b16 %v332
        %v855 = vpack.c.b16 %v854, %v853
        %v860 = vunpack.c.l.b16 %v435
        %v861 = vunpack.c.l.b16 %v436
        %v862 = vunpack.c.l.b16 %v437
        %v863 = vunpack.c.l.b16 %v438
        %v864 = vpack.c.b16 %v861, %v860
        %v865 = vpack.c.b16 %v863, %v862
        %vm868 = vcmask 261120
        %v870 = vsel %vm868, %v855, 0
        %872 = vmatpush.bf16.msra.mxu0 0
        %873 = vmatpush.bf16.msra.mxu0 0
        %874 = vmatpush.bf16.msra.mxu0 0
        %875 = vmatpush.bf16.msra.mxu0 0
        %876 = vmatpush.bf16.msra.mxu0 0
        %877 = vmatpush.bf16.msra.mxu0 0
        %878 = vmatpush.bf16.msra.mxu0 %v865
        %879 = vmatpush.bf16.msra.mxu0 %v864
        %880 = vmatmul.bf16.gmra.mxu0 %v870
        %v881 = vpop.f32.mrf.mxu0
        %v882 = vadd.f32 0.0, %v881
        %v883 = vpop.f32.mrf.mxu0
        %v884 = vadd.f32 0.0, %v883
        %885 = vdwg.mxu0
        %v888 = vunpack.c.l.b16 %v333
        %v889 = vunpack.c.l.b16 %v334
        %v890 = vpack.c.b16 %v889, %v888
        %v895 = vunpack.c.l.b16 %v439
        %v896 = vunpack.c.l.b16 %v440
        %v897 = vunpack.c.l.b16 %v441
        %v898 = vunpack.c.l.b16 %v442
        %v899 = vpack.c.b16 %v896, %v895
        %v900 = vpack.c.b16 %v898, %v897
        %v904 = vsel %vm868, %v890, 0
        %906 = vmatpush.bf16.msra.mxu0 0
        %907 = vmatpush.bf16.msra.mxu0 0
        %908 = vmatpush.bf16.msra.mxu0 0
        %909 = vmatpush.bf16.msra.mxu0 0
        %910 = vmatpush.bf16.msra.mxu0 0
        %911 = vmatpush.bf16.msra.mxu0 0
        %912 = vmatpush.bf16.msra.mxu0 %v900
        %913 = vmatpush.bf16.msra.mxu0 %v899
        %914 = vmatmul.bf16.gmra.mxu0 %v904
        %v915 = vpop.f32.mrf.mxu0
        %v916 = vadd.f32 0.0, %v915
        %v917 = vpop.f32.mrf.mxu0
        %v918 = vadd.f32 0.0, %v917
        %919 = vdwg.mxu0
        %v922 = vunpack.c.l.b16 %v335
        %v923 = vunpack.c.l.b16 %v336
        %v924 = vpack.c.b16 %v923, %v922
        %v929 = vunpack.c.l.b16 %v443
        %v930 = vunpack.c.l.b16 %v444
        %v931 = vunpack.c.l.b16 %v445
        %v932 = vunpack.c.l.b16 %v446
        %v933 = vpack.c.b16 %v930, %v929
        %v934 = vpack.c.b16 %v932, %v931
        %v938 = vsel %vm868, %v924, 0
        %940 = vmatpush.bf16.msra.mxu0 0
        %941 = vmatpush.bf16.msra.mxu0 0
        %942 = vmatpush.bf16.msra.mxu0 0
        %943 = vmatpush.bf16.msra.mxu0 0
        %944 = vmatpush.bf16.msra.mxu0 0
        %945 = vmatpush.bf16.msra.mxu0 0
        %946 = vmatpush.bf16.msra.mxu0 %v934
        %947 = vmatpush.bf16.msra.mxu0 %v933
        %948 = vmatmul.bf16.gmra.mxu0 %v938
        %v949 = vpop.f32.mrf.mxu0
        %v950 = vadd.f32 0.0, %v949
        %v951 = vpop.f32.mrf.mxu0
        %v952 = vadd.f32 0.0, %v951
        %953 = vdwg.mxu0
        %v956 = vunpack.c.l.b16 %v337
        %v957 = vunpack.c.l.b16 %v338
        %v958 = vpack.c.b16 %v957, %v956
        %v963 = vunpack.c.l.b16 %v447
        %v964 = vunpack.c.l.b16 %v448
        %v965 = vunpack.c.l.b16 %v449
        %v966 = vunpack.c.l.b16 %v450
        %v967 = vpack.c.b16 %v964, %v963
        %v968 = vpack.c.b16 %v966, %v965
        %v972 = vsel %vm868, %v958, 0
        %974 = vmatpush.bf16.msra.mxu0 0
        %975 = vmatpush.bf16.msra.mxu0 0
        %976 = vmatpush.bf16.msra.mxu0 0
        %977 = vmatpush.bf16.msra.mxu0 0
        %978 = vmatpush.bf16.msra.mxu0 0
        %979 = vmatpush.bf16.msra.mxu0 0
        %980 = vmatpush.bf16.msra.mxu0 %v968
        %981 = vmatpush.bf16.msra.mxu0 %v967
        %982 = vmatmul.bf16.gmra.mxu0 %v972
        %v983 = vpop.f32.mrf.mxu0
        %v984 = vadd.f32 0.0, %v983
        %v985 = vpop.f32.mrf.mxu0
        %v986 = vadd.f32 0.0, %v985
        %987 = vdwg.mxu0
        %v990 = vunpack.c.l.b16 %v309
        %v991 = vunpack.c.l.b16 %v310
        %v992 = vpack.c.b16 %v991, %v990
        %v997 = vunpack.c.l.b16 %v419
        %v998 = vunpack.c.l.b16 %v420
        %v999 = vunpack.c.l.b16 %v421
        %v1000 = vunpack.c.l.b16 %v422
        %v1001 = vpack.c.b16 %v998, %v997
        %v1002 = vpack.c.b16 %v1000, %v999
        %v1006 = vsel %vm868, %v992, 0
        %1008 = vmatpush.bf16.msra.mxu0 0
        %1009 = vmatpush.bf16.msra.mxu0 0
        %1010 = vmatpush.bf16.msra.mxu0 0
        %1011 = vmatpush.bf16.msra.mxu0 0
        %1012 = vmatpush.bf16.msra.mxu0 0
        %1013 = vmatpush.bf16.msra.mxu0 0
        %1014 = vmatpush.bf16.msra.mxu0 %v1002
        %1015 = vmatpush.bf16.msra.mxu0 %v1001
        %1016 = vmatmul.bf16.gmra.mxu0 %v1006
        %v1017 = vpop.f32.mrf.mxu0
        %v1018 = vadd.f32 %v882, %v1017
        %v1019 = vpop.f32.mrf.mxu0
        %v1020 = vadd.f32 %v884, %v1019
        %1021 = vdwg.mxu0
        %v1024 = vunpack.c.l.b16 %v311
        %v1025 = vunpack.c.l.b16 %v312
        %v1026 = vpack.c.b16 %v1025, %v1024
        %v1031 = vunpack.c.l.b16 %v423
        %v1032 = vunpack.c.l.b16 %v424
        %v1033 = vunpack.c.l.b16 %v425
        %v1034 = vunpack.c.l.b16 %v426
        %v1035 = vpack.c.b16 %v1032, %v1031
        %v1036 = vpack.c.b16 %v1034, %v1033
        %v1040 = vsel %vm868, %v1026, 0
        %1042 = vmatpush.bf16.msra.mxu0 0
        %1043 = vmatpush.bf16.msra.mxu0 0
        %1044 = vmatpush.bf16.msra.mxu0 0
        %1045 = vmatpush.bf16.msra.mxu0 0
        %1046 = vmatpush.bf16.msra.mxu0 0
        %1047 = vmatpush.bf16.msra.mxu0 0
        %1048 = vmatpush.bf16.msra.mxu0 %v1036
        %1049 = vmatpush.bf16.msra.mxu0 %v1035
        %1050 = vmatmul.bf16.gmra.mxu0 %v1040
        %v1051 = vpop.f32.mrf.mxu0
        %v1052 = vadd.f32 %v916, %v1051
        %v1053 = vpop.f32.mrf.mxu0
        %v1054 = vadd.f32 %v918, %v1053
        %1055 = vdwg.mxu0
        %v1058 = vunpack.c.l.b16 %v313
        %v1059 = vunpack.c.l.b16 %v314
        %v1060 = vpack.c.b16 %v1059, %v1058
        %v1065 = vunpack.c.l.b16 %v427
        %v1066 = vunpack.c.l.b16 %v428
        %v1067 = vunpack.c.l.b16 %v429
        %v1068 = vunpack.c.l.b16 %v430
        %v1069 = vpack.c.b16 %v1066, %v1065
        %v1070 = vpack.c.b16 %v1068, %v1067
        %v1074 = vsel %vm868, %v1060, 0
        %1076 = vmatpush.bf16.msra.mxu0 0
        %1077 = vmatpush.bf16.msra.mxu0 0
        %1078 = vmatpush.bf16.msra.mxu0 0
        %1079 = vmatpush.bf16.msra.mxu0 0
        %1080 = vmatpush.bf16.msra.mxu0 0
        %1081 = vmatpush.bf16.msra.mxu0 0
        %1082 = vmatpush.bf16.msra.mxu0 %v1070
        %1083 = vmatpush.bf16.msra.mxu0 %v1069
        %1084 = vmatmul.bf16.gmra.mxu0 %v1074
        %v1085 = vpop.f32.mrf.mxu0
        %v1086 = vadd.f32 %v950, %v1085
        %v1087 = vpop.f32.mrf.mxu0
        %v1088 = vadd.f32 %v952, %v1087
        %1089 = vdwg.mxu0
        %v1092 = vunpack.c.l.b16 %v315
        %v1093 = vunpack.c.l.b16 %v316
        %v1094 = vpack.c.b16 %v1093, %v1092
        %v1099 = vunpack.c.l.b16 %v431
        %v1100 = vunpack.c.l.b16 %v432
        %v1101 = vunpack.c.l.b16 %v433
        %v1102 = vunpack.c.l.b16 %v434
        %v1103 = vpack.c.b16 %v1100, %v1099
        %v1104 = vpack.c.b16 %v1102, %v1101
        %v1108 = vsel %vm868, %v1094, 0
        %1110 = vmatpush.bf16.msra.mxu0 0
        %1111 = vmatpush.bf16.msra.mxu0 0
        %1112 = vmatpush.bf16.msra.mxu0 0
        %1113 = vmatpush.bf16.msra.mxu0 0
        %1114 = vmatpush.bf16.msra.mxu0 0
        %1115 = vmatpush.bf16.msra.mxu0 0
        %1116 = vmatpush.bf16.msra.mxu0 %v1104
        %1117 = vmatpush.bf16.msra.mxu0 %v1103
        %1118 = vmatmul.bf16.gmra.mxu0 %v1108
        %v1119 = vpop.f32.mrf.mxu0
        %v1120 = vadd.f32 %v984, %v1119
        %v1121 = vpop.f32.mrf.mxu0
        %v1122 = vadd.f32 %v986, %v1121
        %1123 = vdwg.mxu0
        %v1126 = vunpack.c.l.b16 %v353
        %v1127 = vunpack.c.l.b16 %v354
        %v1128 = vpack.c.b16 %v1127, %v1126
        %v1133 = vunpack.c.l.b16 %v451
        %v1134 = vunpack.c.l.b16 %v452
        %v1135 = vunpack.c.l.b16 %v453
        %v1136 = vunpack.c.l.b16 %v454
        %v1137 = vpack.c.b16 %v1134, %v1133
        %v1138 = vpack.c.b16 %v1136, %v1135
        %v1142 = vsel %vm868, %v1128, 0
        %1144 = vmatpush.bf16.msra.mxu0 0
        %1145 = vmatpush.bf16.msra.mxu0 0
        %1146 = vmatpush.bf16.msra.mxu0 0
        %1147 = vmatpush.bf16.msra.mxu0 0
        %1148 = vmatpush.bf16.msra.mxu0 0
        %1149 = vmatpush.bf16.msra.mxu0 0
        %1150 = vmatpush.bf16.msra.mxu0 %v1138
        %1151 = vmatpush.bf16.msra.mxu0 %v1137
        %1152 = vmatmul.bf16.gmra.mxu0 %v1142
        %v1153 = vpop.f32.mrf.mxu0
        %v1154 = vadd.f32 0.0, %v1153
        %v1155 = vpop.f32.mrf.mxu0
        %v1156 = vadd.f32 0.0, %v1155
        %1157 = vdwg.mxu0
        %v1160 = vunpack.c.l.b16 %v355
        %v1161 = vunpack.c.l.b16 %v356
        %v1162 = vpack.c.b16 %v1161, %v1160
        %v1167 = vunpack.c.l.b16 %v455
        %v1168 = vunpack.c.l.b16 %v456
        %v1169 = vunpack.c.l.b16 %v457
        %v1170 = vunpack.c.l.b16 %v458
        %v1171 = vpack.c.b16 %v1168, %v1167
        %v1172 = vpack.c.b16 %v1170, %v1169
        %v1176 = vsel %vm868, %v1162, 0
        %1178 = vmatpush.bf16.msra.mxu0 0
        %1179 = vmatpush.bf16.msra.mxu0 0
        %1180 = vmatpush.bf16.msra.mxu0 0
        %1181 = vmatpush.bf16.msra.mxu0 0
        %1182 = vmatpush.bf16.msra.mxu0 0
        %1183 = vmatpush.bf16.msra.mxu0 0
        %1184 = vmatpush.bf16.msra.mxu0 %v1172
        %1185 = vmatpush.bf16.msra.mxu0 %v1171
        %1186 = vmatmul.bf16.gmra.mxu0 %v1176
        %v1187 = vpop.f32.mrf.mxu0
        %v1188 = vadd.f32 0.0, %v1187
        %v1189 = vpop.f32.mrf.mxu0
        %v1190 = vadd.f32 0.0, %v1189
        %1191 = vdwg.mxu0
        %v1194 = vunpack.c.l.b16 %v357
        %v1195 = vunpack.c.l.b16 %v358
        %v1196 = vpack.c.b16 %v1195, %v1194
        %v1201 = vunpack.c.l.b16 %v459
        %v1202 = vunpack.c.l.b16 %v460
        %v1203 = vunpack.c.l.b16 %v461
        %v1204 = vunpack.c.l.b16 %v462
        %v1205 = vpack.c.b16 %v1202, %v1201
        %v1206 = vpack.c.b16 %v1204, %v1203
        %v1210 = vsel %vm868, %v1196, 0
        %1212 = vmatpush.bf16.msra.mxu0 0
        %1213 = vmatpush.bf16.msra.mxu0 0
        %1214 = vmatpush.bf16.msra.mxu0 0
        %1215 = vmatpush.bf16.msra.mxu0 0
        %1216 = vmatpush.bf16.msra.mxu0 0
        %1217 = vmatpush.bf16.msra.mxu0 0
        %1218 = vmatpush.bf16.msra.mxu0 %v1206
        %1219 = vmatpush.bf16.msra.mxu0 %v1205
        %1220 = vmatmul.bf16.gmra.mxu0 %v1210
        %v1221 = vpop.f32.mrf.mxu0
        %v1222 = vadd.f32 0.0, %v1221
        %v1223 = vpop.f32.mrf.mxu0
        %v1224 = vadd.f32 0.0, %v1223
        %1225 = vdwg.mxu0
        %v1228 = vunpack.c.l.b16 %v359
        %v1229 = vunpack.c.l.b16 %v360
        %v1230 = vpack.c.b16 %v1229, %v1228
        %v1235 = vunpack.c.l.b16 %v463
        %v1236 = vunpack.c.l.b16 %v464
        %v1237 = vunpack.c.l.b16 %v465
        %v1238 = vunpack.c.l.b16 %v466
        %v1239 = vpack.c.b16 %v1236, %v1235
        %v1240 = vpack.c.b16 %v1238, %v1237
        %v1244 = vsel %vm868, %v1230, 0
        %1246 = vmatpush.bf16.msra.mxu0 0
        %1247 = vmatpush.bf16.msra.mxu0 0
        %1248 = vmatpush.bf16.msra.mxu0 0
        %1249 = vmatpush.bf16.msra.mxu0 0
        %1250 = vmatpush.bf16.msra.mxu0 0
        %1251 = vmatpush.bf16.msra.mxu0 0
        %1252 = vmatpush.bf16.msra.mxu0 %v1240
        %1253 = vmatpush.bf16.msra.mxu0 %v1239
        %1254 = vmatmul.bf16.gmra.mxu0 %v1244
        %v1255 = vpop.f32.mrf.mxu0
        %v1256 = vadd.f32 0.0, %v1255
        %v1257 = vpop.f32.mrf.mxu0
        %v1258 = vadd.f32 0.0, %v1257
        %1259 = vdwg.mxu0
        %v1260 = vadd.f32 %v1018, %v1154
        %v1261 = vadd.f32 %v1020, %v1156
        %v1262 = vadd.f32 %v1052, %v1188
        %v1263 = vadd.f32 %v1054, %v1190
        %v1264 = vadd.f32 %v1086, %v1222
        %v1265 = vadd.f32 %v1088, %v1224
        %v1266 = vadd.f32 %v1120, %v1256
        %v1267 = vadd.f32 %v1122, %v1258
        %v1270 = vunpack.c.l.b16 %v375
        %v1271 = vunpack.c.l.b16 %v376
        %v1272 = vpack.c.b16 %v1271, %v1270
        %v1277 = vunpack.c.l.b16 %v467
        %v1278 = vunpack.c.l.b16 %v468
        %v1279 = vunpack.c.l.b16 %v469
        %v1280 = vunpack.c.l.b16 %v470
        %v1281 = vpack.c.b16 %v1278, %v1277
        %v1282 = vpack.c.b16 %v1280, %v1279
        %v1286 = vsel %vm868, %v1272, 0
        %1288 = vmatpush.bf16.msra.mxu0 0
        %1289 = vmatpush.bf16.msra.mxu0 0
        %1290 = vmatpush.bf16.msra.mxu0 0
        %1291 = vmatpush.bf16.msra.mxu0 0
        %1292 = vmatpush.bf16.msra.mxu0 0
        %1293 = vmatpush.bf16.msra.mxu0 0
        %1294 = vmatpush.bf16.msra.mxu0 %v1282
        %1295 = vmatpush.bf16.msra.mxu0 %v1281
        %1296 = vmatmul.bf16.gmra.mxu0 %v1286
        %v1297 = vpop.f32.mrf.mxu0
        %v1298 = vadd.f32 0.0, %v1297
        %v1299 = vpop.f32.mrf.mxu0
        %v1300 = vadd.f32 0.0, %v1299
        %1301 = vdwg.mxu0
        %v1304 = vunpack.c.l.b16 %v377
        %v1305 = vunpack.c.l.b16 %v378
        %v1306 = vpack.c.b16 %v1305, %v1304
        %v1311 = vunpack.c.l.b16 %v471
        %v1312 = vunpack.c.l.b16 %v472
        %v1313 = vunpack.c.l.b16 %v473
        %v1314 = vunpack.c.l.b16 %v474
        %v1315 = vpack.c.b16 %v1312, %v1311
        %v1316 = vpack.c.b16 %v1314, %v1313
        %v1320 = vsel %vm868, %v1306, 0
        %1322 = vmatpush.bf16.msra.mxu0 0
        %1323 = vmatpush.bf16.msra.mxu0 0
        %1324 = vmatpush.bf16.msra.mxu0 0
        %1325 = vmatpush.bf16.msra.mxu0 0
        %1326 = vmatpush.bf16.msra.mxu0 0
        %1327 = vmatpush.bf16.msra.mxu0 0
        %1328 = vmatpush.bf16.msra.mxu0 %v1316
        %1329 = vmatpush.bf16.msra.mxu0 %v1315
        %1330 = vmatmul.bf16.gmra.mxu0 %v1320
        %v1331 = vpop.f32.mrf.mxu0
        %v1332 = vadd.f32 0.0, %v1331
        %v1333 = vpop.f32.mrf.mxu0
        %v1334 = vadd.f32 0.0, %v1333
        %1335 = vdwg.mxu0
        %v1338 = vunpack.c.l.b16 %v379
        %v1339 = vunpack.c.l.b16 %v380
        %v1340 = vpack.c.b16 %v1339, %v1338
        %v1345 = vunpack.c.l.b16 %v475
        %v1346 = vunpack.c.l.b16 %v476
        %v1347 = vunpack.c.l.b16 %v477
        %v1348 = vunpack.c.l.b16 %v478
        %v1349 = vpack.c.b16 %v1346, %v1345
        %v1350 = vpack.c.b16 %v1348, %v1347
        %v1354 = vsel %vm868, %v1340, 0
        %1356 = vmatpush.bf16.msra.mxu0 0
        %1357 = vmatpush.bf16.msra.mxu0 0
        %1358 = vmatpush.bf16.msra.mxu0 0
        %1359 = vmatpush.bf16.msra.mxu0 0
        %1360 = vmatpush.bf16.msra.mxu0 0
        %1361 = vmatpush.bf16.msra.mxu0 0
        %1362 = vmatpush.bf16.msra.mxu0 %v1350
        %1363 = vmatpush.bf16.msra.mxu0 %v1349
        %1364 = vmatmul.bf16.gmra.mxu0 %v1354
        %v1365 = vpop.f32.mrf.mxu0
        %v1366 = vadd.f32 0.0, %v1365
        %v1367 = vpop.f32.mrf.mxu0
        %v1368 = vadd.f32 0.0, %v1367
        %1369 = vdwg.mxu0
        %v1372 = vunpack.c.l.b16 %v381
        %v1373 = vunpack.c.l.b16 %v382
        %v1374 = vpack.c.b16 %v1373, %v1372
        %v1379 = vunpack.c.l.b16 %v479
        %v1380 = vunpack.c.l.b16 %v480
        %v1381 = vunpack.c.l.b16 %v481
        %v1382 = vunpack.c.l.b16 %v482
        %v1383 = vpack.c.b16 %v1380, %v1379
        %v1384 = vpack.c.b16 %v1382, %v1381
        %v1388 = vsel %vm868, %v1374, 0
        %1390 = vmatpush.bf16.msra.mxu0 0
        %1391 = vmatpush.bf16.msra.mxu0 0
        %1392 = vmatpush.bf16.msra.mxu0 0
        %1393 = vmatpush.bf16.msra.mxu0 0
        %1394 = vmatpush.bf16.msra.mxu0 0
        %1395 = vmatpush.bf16.msra.mxu0 0
        %1396 = vmatpush.bf16.msra.mxu0 %v1384
        %1397 = vmatpush.bf16.msra.mxu0 %v1383
        %1398 = vmatmul.bf16.gmra.mxu0 %v1388
        %v1399 = vpop.f32.mrf.mxu0
        %v1400 = vadd.f32 0.0, %v1399
        %v1401 = vpop.f32.mrf.mxu0
        %v1402 = vadd.f32 0.0, %v1401
        %1403 = vdwg.mxu0
        %v1404 = vadd.f32 %v1260, %v1298
        %v1405 = vadd.f32 %v1261, %v1300
        %v1406 = vadd.f32 %v1262, %v1332
        %v1407 = vadd.f32 %v1263, %v1334
        %v1408 = vadd.f32 %v1264, %v1366
        %v1409 = vadd.f32 %v1265, %v1368
        %v1410 = vadd.f32 %v1266, %v1400
        %v1411 = vadd.f32 %v1267, %v1402
        %v1414 = vunpack.c.l.b16 %v397
        %v1415 = vunpack.c.l.b16 %v398
        %v1416 = vpack.c.b16 %v1415, %v1414
        %v1421 = vunpack.c.l.b16 %v483
        %v1422 = vunpack.c.l.b16 %v484
        %v1423 = vunpack.c.l.b16 %v485
        %v1424 = vunpack.c.l.b16 %v486
        %v1425 = vpack.c.b16 %v1422, %v1421
        %v1426 = vpack.c.b16 %v1424, %v1423
        %v1430 = vsel %vm868, %v1416, 0
        %1432 = vmatpush.bf16.msra.mxu0 0
        %1433 = vmatpush.bf16.msra.mxu0 0
        %1434 = vmatpush.bf16.msra.mxu0 0
        %1435 = vmatpush.bf16.msra.mxu0 0
        %1436 = vmatpush.bf16.msra.mxu0 0
        %1437 = vmatpush.bf16.msra.mxu0 0
        %1438 = vmatpush.bf16.msra.mxu0 %v1426
        %1439 = vmatpush.bf16.msra.mxu0 %v1425
        %1440 = vmatmul.bf16.gmra.mxu0 %v1430
        %v1441 = vpop.f32.mrf.mxu0
        %v1442 = vadd.f32 0.0, %v1441
        %v1443 = vpop.f32.mrf.mxu0
        %v1444 = vadd.f32 0.0, %v1443
        %1445 = vdwg.mxu0
        %v1448 = vunpack.c.l.b16 %v399
        %v1449 = vunpack.c.l.b16 %v400
        %v1450 = vpack.c.b16 %v1449, %v1448
        %v1455 = vunpack.c.l.b16 %v487
        %v1456 = vunpack.c.l.b16 %v488
        %v1457 = vunpack.c.l.b16 %v489
        %v1458 = vunpack.c.l.b16 %v490
        %v1459 = vpack.c.b16 %v1456, %v1455
        %v1460 = vpack.c.b16 %v1458, %v1457
        %v1464 = vsel %vm868, %v1450, 0
        %1466 = vmatpush.bf16.msra.mxu0 0
        %1467 = vmatpush.bf16.msra.mxu0 0
        %1468 = vmatpush.bf16.msra.mxu0 0
        %1469 = vmatpush.bf16.msra.mxu0 0
        %1470 = vmatpush.bf16.msra.mxu0 0
        %1471 = vmatpush.bf16.msra.mxu0 0
        %1472 = vmatpush.bf16.msra.mxu0 %v1460
        %1473 = vmatpush.bf16.msra.mxu0 %v1459
        %1474 = vmatmul.bf16.gmra.mxu0 %v1464
        %v1475 = vpop.f32.mrf.mxu0
        %v1476 = vadd.f32 0.0, %v1475
        %v1477 = vpop.f32.mrf.mxu0
        %v1478 = vadd.f32 0.0, %v1477
        %1479 = vdwg.mxu0
        %v1482 = vunpack.c.l.b16 %v401
        %v1483 = vunpack.c.l.b16 %v402
        %v1484 = vpack.c.b16 %v1483, %v1482
        %v1489 = vunpack.c.l.b16 %v491
        %v1490 = vunpack.c.l.b16 %v492
        %v1491 = vunpack.c.l.b16 %v493
        %v1492 = vunpack.c.l.b16 %v494
        %v1493 = vpack.c.b16 %v1490, %v1489
        %v1494 = vpack.c.b16 %v1492, %v1491
        %v1498 = vsel %vm868, %v1484, 0
        %1500 = vmatpush.bf16.msra.mxu0 0
        %1501 = vmatpush.bf16.msra.mxu0 0
        %1502 = vmatpush.bf16.msra.mxu0 0
        %1503 = vmatpush.bf16.msra.mxu0 0
        %1504 = vmatpush.bf16.msra.mxu0 0
        %1505 = vmatpush.bf16.msra.mxu0 0
        %1506 = vmatpush.bf16.msra.mxu0 %v1494
        %1507 = vmatpush.bf16.msra.mxu0 %v1493
        %1508 = vmatmul.bf16.gmra.mxu0 %v1498
        %v1509 = vpop.f32.mrf.mxu0
        %v1510 = vadd.f32 0.0, %v1509
        %v1511 = vpop.f32.mrf.mxu0
        %v1512 = vadd.f32 0.0, %v1511
        %1513 = vdwg.mxu0
        %v1516 = vunpack.c.l.b16 %v403
        %v1517 = vunpack.c.l.b16 %v404
        %v1518 = vpack.c.b16 %v1517, %v1516
        %v1523 = vunpack.c.l.b16 %v495
        %v1524 = vunpack.c.l.b16 %v496
        %v1525 = vunpack.c.l.b16 %v497
        %v1526 = vunpack.c.l.b16 %v498
        %v1527 = vpack.c.b16 %v1524, %v1523
        %v1528 = vpack.c.b16 %v1526, %v1525
        %v1532 = vsel %vm868, %v1518, 0
        %1534 = vmatpush.bf16.msra.mxu0 0
        %1535 = vmatpush.bf16.msra.mxu0 0
        %1536 = vmatpush.bf16.msra.mxu0 0
        %1537 = vmatpush.bf16.msra.mxu0 0
        %1538 = vmatpush.bf16.msra.mxu0 0
        %1539 = vmatpush.bf16.msra.mxu0 0
        %1540 = vmatpush.bf16.msra.mxu0 %v1528
        %1541 = vmatpush.bf16.msra.mxu0 %v1527
        %1542 = vmatmul.bf16.gmra.mxu0 %v1532
        %v1543 = vpop.f32.mrf.mxu0
        %v1544 = vadd.f32 0.0, %v1543
        %v1545 = vpop.f32.mrf.mxu0
        %v1546 = vadd.f32 0.0, %v1545
        %1547 = vdwg.mxu0
        %v1548 = vadd.f32 %v1404, %v1442
        %v1549 = vadd.f32 %v1405, %v1444
        %v1550 = vadd.f32 %v1406, %v1476
        %v1551 = vadd.f32 %v1407, %v1478
        %v1552 = vadd.f32 %v1408, %v1510
        %v1553 = vadd.f32 %v1409, %v1512
        %v1554 = vadd.f32 %v1410, %v1544
        %v1555 = vadd.f32 %v1411, %v1546
        %v1558 = vunpack.c.l.b16 %v321
        %v1559 = vunpack.c.l.b16 %v322
        %v1560 = vpack.c.b16 %v1559, %v1558
        %v1565 = vunpack.c.l.b16 %v499
        %v1566 = vunpack.c.l.b16 %v500
        %v1567 = vunpack.c.l.b16 %v501
        %v1568 = vunpack.c.l.b16 %v502
        %v1569 = vpack.c.b16 %v1566, %v1565
        %v1570 = vpack.c.b16 %v1568, %v1567
        %v1574 = vsel %vm868, %v1560, 0
        %1576 = vmatpush.bf16.msra.mxu0 0
        %1577 = vmatpush.bf16.msra.mxu0 0
        %1578 = vmatpush.bf16.msra.mxu0 0
        %1579 = vmatpush.bf16.msra.mxu0 0
        %1580 = vmatpush.bf16.msra.mxu0 0
        %1581 = vmatpush.bf16.msra.mxu0 0
        %1582 = vmatpush.bf16.msra.mxu0 %v1570
        %1583 = vmatpush.bf16.msra.mxu0 %v1569
        %1584 = vmatmul.bf16.gmra.mxu0 %v1574
        %v1585 = vpop.f32.mrf.mxu0
        %v1586 = vadd.f32 0.0, %v1585
        %v1587 = vpop.f32.mrf.mxu0
        %v1588 = vadd.f32 0.0, %v1587
        %1589 = vdwg.mxu0
        %v1592 = vunpack.c.l.b16 %v323
        %v1593 = vunpack.c.l.b16 %v324
        %v1594 = vpack.c.b16 %v1593, %v1592
        %v1599 = vunpack.c.l.b16 %v503
        %v1600 = vunpack.c.l.b16 %v504
        %v1601 = vunpack.c.l.b16 %v505
        %v1602 = vunpack.c.l.b16 %v506
        %v1603 = vpack.c.b16 %v1600, %v1599
        %v1604 = vpack.c.b16 %v1602, %v1601
        %v1608 = vsel %vm868, %v1594, 0
        %1610 = vmatpush.bf16.msra.mxu0 0
        %1611 = vmatpush.bf16.msra.mxu0 0
        %1612 = vmatpush.bf16.msra.mxu0 0
        %1613 = vmatpush.bf16.msra.mxu0 0
        %1614 = vmatpush.bf16.msra.mxu0 0
        %1615 = vmatpush.bf16.msra.mxu0 0
        %1616 = vmatpush.bf16.msra.mxu0 %v1604
        %1617 = vmatpush.bf16.msra.mxu0 %v1603
        %1618 = vmatmul.bf16.gmra.mxu0 %v1608
        %v1619 = vpop.f32.mrf.mxu0
        %v1620 = vadd.f32 0.0, %v1619
        %v1621 = vpop.f32.mrf.mxu0
        %v1622 = vadd.f32 0.0, %v1621
        %1623 = vdwg.mxu0
        %v1626 = vunpack.c.l.b16 %v325
        %v1627 = vunpack.c.l.b16 %v326
        %v1628 = vpack.c.b16 %v1627, %v1626
        %v1633 = vunpack.c.l.b16 %v507
        %v1634 = vunpack.c.l.b16 %v508
        %v1635 = vunpack.c.l.b16 %v509
        %v1636 = vunpack.c.l.b16 %v510
        %v1637 = vpack.c.b16 %v1634, %v1633
        %v1638 = vpack.c.b16 %v1636, %v1635
        %v1642 = vsel %vm868, %v1628, 0
        %1644 = vmatpush.bf16.msra.mxu0 0
        %1645 = vmatpush.bf16.msra.mxu0 0
        %1646 = vmatpush.bf16.msra.mxu0 0
        %1647 = vmatpush.bf16.msra.mxu0 0
        %1648 = vmatpush.bf16.msra.mxu0 0
        %1649 = vmatpush.bf16.msra.mxu0 0
        %1650 = vmatpush.bf16.msra.mxu0 %v1638
        %1651 = vmatpush.bf16.msra.mxu0 %v1637
        %1652 = vmatmul.bf16.gmra.mxu0 %v1642
        %v1653 = vpop.f32.mrf.mxu0
        %v1654 = vadd.f32 0.0, %v1653
        %v1655 = vpop.f32.mrf.mxu0
        %v1656 = vadd.f32 0.0, %v1655
        %1657 = vdwg.mxu0
        %v1660 = vunpack.c.l.b16 %v327
        %v1661 = vunpack.c.l.b16 %v328
        %v1662 = vpack.c.b16 %v1661, %v1660
        %v1667 = vunpack.c.l.b16 %v511
        %v1668 = vunpack.c.l.b16 %v512
        %v1669 = vunpack.c.l.b16 %v513
        %v1670 = vunpack.c.l.b16 %v514
        %v1671 = vpack.c.b16 %v1668, %v1667
        %v1672 = vpack.c.b16 %v1670, %v1669
        %v1676 = vsel %vm868, %v1662, 0
        %1678 = vmatpush.bf16.msra.mxu0 0
        %1679 = vmatpush.bf16.msra.mxu0 0
        %1680 = vmatpush.bf16.msra.mxu0 0
        %1681 = vmatpush.bf16.msra.mxu0 0
        %1682 = vmatpush.bf16.msra.mxu0 0
        %1683 = vmatpush.bf16.msra.mxu0 0
        %1684 = vmatpush.bf16.msra.mxu0 %v1672
        %1685 = vmatpush.bf16.msra.mxu0 %v1671
        %1686 = vmatmul.bf16.gmra.mxu0 %v1676
        %v1687 = vpop.f32.mrf.mxu0
        %v1688 = vadd.f32 0.0, %v1687
        %v1689 = vpop.f32.mrf.mxu0
        %v1690 = vadd.f32 0.0, %v1689
        %1691 = vdwg.mxu0
        %v1692 = vadd.f32 %v1548, %v1586
        %v1693 = vadd.f32 %v1549, %v1588
        %v1694 = vadd.f32 %v1550, %v1620
        %v1695 = vadd.f32 %v1551, %v1622
        %v1696 = vadd.f32 %v1552, %v1654
        %v1697 = vadd.f32 %v1553, %v1656
        %v1698 = vadd.f32 %v1554, %v1688
        %v1699 = vadd.f32 %v1555, %v1690
        %v1702 = vunpack.c.l.b16 %v343
        %v1703 = vunpack.c.l.b16 %v344
        %v1704 = vpack.c.b16 %v1703, %v1702
        %v1709 = vunpack.c.l.b16 %v515
        %v1710 = vunpack.c.l.b16 %v516
        %v1711 = vunpack.c.l.b16 %v517
        %v1712 = vunpack.c.l.b16 %v518
        %v1713 = vpack.c.b16 %v1710, %v1709
        %v1714 = vpack.c.b16 %v1712, %v1711
        %v1718 = vsel %vm868, %v1704, 0
        %1720 = vmatpush.bf16.msra.mxu0 0
        %1721 = vmatpush.bf16.msra.mxu0 0
        %1722 = vmatpush.bf16.msra.mxu0 0
        %1723 = vmatpush.bf16.msra.mxu0 0
        %1724 = vmatpush.bf16.msra.mxu0 0
        %1725 = vmatpush.bf16.msra.mxu0 0
        %1726 = vmatpush.bf16.msra.mxu0 %v1714
        %1727 = vmatpush.bf16.msra.mxu0 %v1713
        %1728 = vmatmul.bf16.gmra.mxu0 %v1718
        %v1729 = vpop.f32.mrf.mxu0
        %v1730 = vadd.f32 0.0, %v1729
        %v1731 = vpop.f32.mrf.mxu0
        %v1732 = vadd.f32 0.0, %v1731
        %1733 = vdwg.mxu0
        %v1736 = vunpack.c.l.b16 %v345
        %v1737 = vunpack.c.l.b16 %v346
        %v1738 = vpack.c.b16 %v1737, %v1736
        %v1743 = vunpack.c.l.b16 %v519
        %v1744 = vunpack.c.l.b16 %v520
        %v1745 = vunpack.c.l.b16 %v521
        %v1746 = vunpack.c.l.b16 %v522
        %v1747 = vpack.c.b16 %v1744, %v1743
        %v1748 = vpack.c.b16 %v1746, %v1745
        %v1752 = vsel %vm868, %v1738, 0
        %1754 = vmatpush.bf16.msra.mxu0 0
        %1755 = vmatpush.bf16.msra.mxu0 0
        %1756 = vmatpush.bf16.msra.mxu0 0
        %1757 = vmatpush.bf16.msra.mxu0 0
        %1758 = vmatpush.bf16.msra.mxu0 0
        %1759 = vmatpush.bf16.msra.mxu0 0
        %1760 = vmatpush.bf16.msra.mxu0 %v1748
        %1761 = vmatpush.bf16.msra.mxu0 %v1747
        %1762 = vmatmul.bf16.gmra.mxu0 %v1752
        %v1763 = vpop.f32.mrf.mxu0
        %v1764 = vadd.f32 0.0, %v1763
        %v1765 = vpop.f32.mrf.mxu0
        %v1766 = vadd.f32 0.0, %v1765
        %1767 = vdwg.mxu0
        %v1770 = vunpack.c.l.b16 %v347
        %v1771 = vunpack.c.l.b16 %v348
        %v1772 = vpack.c.b16 %v1771, %v1770
        %v1777 = vunpack.c.l.b16 %v523
        %v1778 = vunpack.c.l.b16 %v524
        %v1779 = vunpack.c.l.b16 %v525
        %v1780 = vunpack.c.l.b16 %v526
        %v1781 = vpack.c.b16 %v1778, %v1777
        %v1782 = vpack.c.b16 %v1780, %v1779
        %v1786 = vsel %vm868, %v1772, 0
        %1788 = vmatpush.bf16.msra.mxu0 0
        %1789 = vmatpush.bf16.msra.mxu0 0
        %1790 = vmatpush.bf16.msra.mxu0 0
        %1791 = vmatpush.bf16.msra.mxu0 0
        %1792 = vmatpush.bf16.msra.mxu0 0
        %1793 = vmatpush.bf16.msra.mxu0 0
        %1794 = vmatpush.bf16.msra.mxu0 %v1782
        %1795 = vmatpush.bf16.msra.mxu0 %v1781
        %1796 = vmatmul.bf16.gmra.mxu0 %v1786
        %v1797 = vpop.f32.mrf.mxu0
        %v1798 = vadd.f32 0.0, %v1797
        %v1799 = vpop.f32.mrf.mxu0
        %v1800 = vadd.f32 0.0, %v1799
        %1801 = vdwg.mxu0
        %v1804 = vunpack.c.l.b16 %v349
        %v1805 = vunpack.c.l.b16 %v350
        %v1806 = vpack.c.b16 %v1805, %v1804
        %v1811 = vunpack.c.l.b16 %v527
        %v1812 = vunpack.c.l.b16 %v528
        %v1813 = vunpack.c.l.b16 %v529
        %v1814 = vunpack.c.l.b16 %v530
        %v1815 = vpack.c.b16 %v1812, %v1811
        %v1816 = vpack.c.b16 %v1814, %v1813
        %v1820 = vsel %vm868, %v1806, 0
        %1822 = vmatpush.bf16.msra.mxu0 0
        %1823 = vmatpush.bf16.msra.mxu0 0
        %1824 = vmatpush.bf16.msra.mxu0 0
        %1825 = vmatpush.bf16.msra.mxu0 0
        %1826 = vmatpush.bf16.msra.mxu0 0
        %1827 = vmatpush.bf16.msra.mxu0 0
        %1828 = vmatpush.bf16.msra.mxu0 %v1816
        %1829 = vmatpush.bf16.msra.mxu0 %v1815
        %1830 = vmatmul.bf16.gmra.mxu0 %v1820
        %v1831 = vpop.f32.mrf.mxu0
        %v1832 = vadd.f32 0.0, %v1831
        %v1833 = vpop.f32.mrf.mxu0
        %v1834 = vadd.f32 0.0, %v1833
        %1835 = vdwg.mxu0
        %v1836 = vadd.f32 %v1692, %v1730
        %v1837 = vadd.f32 %v1693, %v1732
        %v1838 = vadd.f32 %v1694, %v1764
        %v1839 = vadd.f32 %v1695, %v1766
        %v1840 = vadd.f32 %v1696, %v1798
        %v1841 = vadd.f32 %v1697, %v1800
        %v1842 = vadd.f32 %v1698, %v1832
        %v1843 = vadd.f32 %v1699, %v1834
        %v1846 = vunpack.c.l.b16 %v365
        %v1847 = vunpack.c.l.b16 %v366
        %v1848 = vpack.c.b16 %v1847, %v1846
        %v1853 = vunpack.c.l.b16 %v531
        %v1854 = vunpack.c.l.b16 %v532
        %v1855 = vunpack.c.l.b16 %v533
        %v1856 = vunpack.c.l.b16 %v534
        %v1857 = vpack.c.b16 %v1854, %v1853
        %v1858 = vpack.c.b16 %v1856, %v1855
        %v1862 = vsel %vm868, %v1848, 0
        %1864 = vmatpush.bf16.msra.mxu0 0
        %1865 = vmatpush.bf16.msra.mxu0 0
        %1866 = vmatpush.bf16.msra.mxu0 0
        %1867 = vmatpush.bf16.msra.mxu0 0
        %1868 = vmatpush.bf16.msra.mxu0 0
        %1869 = vmatpush.bf16.msra.mxu0 0
        %1870 = vmatpush.bf16.msra.mxu0 %v1858
        %1871 = vmatpush.bf16.msra.mxu0 %v1857
        %1872 = vmatmul.bf16.gmra.mxu0 %v1862
        %v1873 = vpop.f32.mrf.mxu0
        %v1874 = vadd.f32 0.0, %v1873
        %v1875 = vpop.f32.mrf.mxu0
        %v1876 = vadd.f32 0.0, %v1875
        %1877 = vdwg.mxu0
        %v1880 = vunpack.c.l.b16 %v367
        %v1881 = vunpack.c.l.b16 %v368
        %v1882 = vpack.c.b16 %v1881, %v1880
        %v1887 = vunpack.c.l.b16 %v535
        %v1888 = vunpack.c.l.b16 %v536
        %v1889 = vunpack.c.l.b16 %v537
        %v1890 = vunpack.c.l.b16 %v538
        %v1891 = vpack.c.b16 %v1888, %v1887
        %v1892 = vpack.c.b16 %v1890, %v1889
        %v1896 = vsel %vm868, %v1882, 0
        %1898 = vmatpush.bf16.msra.mxu0 0
        %1899 = vmatpush.bf16.msra.mxu0 0
        %1900 = vmatpush.bf16.msra.mxu0 0
        %1901 = vmatpush.bf16.msra.mxu0 0
        %1902 = vmatpush.bf16.msra.mxu0 0
        %1903 = vmatpush.bf16.msra.mxu0 0
        %1904 = vmatpush.bf16.msra.mxu0 %v1892
        %1905 = vmatpush.bf16.msra.mxu0 %v1891
        %1906 = vmatmul.bf16.gmra.mxu0 %v1896
        %v1907 = vpop.f32.mrf.mxu0
        %v1908 = vadd.f32 0.0, %v1907
        %v1909 = vpop.f32.mrf.mxu0
        %v1910 = vadd.f32 0.0, %v1909
        %1911 = vdwg.mxu0
        %v1914 = vunpack.c.l.b16 %v369
        %v1915 = vunpack.c.l.b16 %v370
        %v1916 = vpack.c.b16 %v1915, %v1914
        %v1921 = vunpack.c.l.b16 %v539
        %v1922 = vunpack.c.l.b16 %v540
        %v1923 = vunpack.c.l.b16 %v541
        %v1924 = vunpack.c.l.b16 %v542
        %v1925 = vpack.c.b16 %v1922, %v1921
        %v1926 = vpack.c.b16 %v1924, %v1923
        %v1930 = vsel %vm868, %v1916, 0
        %1932 = vmatpush.bf16.msra.mxu0 0
        %1933 = vmatpush.bf16.msra.mxu0 0
        %1934 = vmatpush.bf16.msra.mxu0 0
        %1935 = vmatpush.bf16.msra.mxu0 0
        %1936 = vmatpush.bf16.msra.mxu0 0
        %1937 = vmatpush.bf16.msra.mxu0 0
        %1938 = vmatpush.bf16.msra.mxu0 %v1926
        %1939 = vmatpush.bf16.msra.mxu0 %v1925
        %1940 = vmatmul.bf16.gmra.mxu0 %v1930
        %v1941 = vpop.f32.mrf.mxu0
        %v1942 = vadd.f32 0.0, %v1941
        %v1943 = vpop.f32.mrf.mxu0
        %v1944 = vadd.f32 0.0, %v1943
        %1945 = vdwg.mxu0
        %v1948 = vunpack.c.l.b16 %v371
        %v1949 = vunpack.c.l.b16 %v372
        %v1950 = vpack.c.b16 %v1949, %v1948
        %v1955 = vunpack.c.l.b16 %v543
        %v1956 = vunpack.c.l.b16 %v544
        %v1957 = vunpack.c.l.b16 %v545
        %v1958 = vunpack.c.l.b16 %v546
        %v1959 = vpack.c.b16 %v1956, %v1955
        %v1960 = vpack.c.b16 %v1958, %v1957
        %v1964 = vsel %vm868, %v1950, 0
        %1966 = vmatpush.bf16.msra.mxu0 0
        %1967 = vmatpush.bf16.msra.mxu0 0
        %1968 = vmatpush.bf16.msra.mxu0 0
        %1969 = vmatpush.bf16.msra.mxu0 0
        %1970 = vmatpush.bf16.msra.mxu0 0
        %1971 = vmatpush.bf16.msra.mxu0 0
        %1972 = vmatpush.bf16.msra.mxu0 %v1960
        %1973 = vmatpush.bf16.msra.mxu0 %v1959
        %1974 = vmatmul.bf16.gmra.mxu0 %v1964
        %v1975 = vpop.f32.mrf.mxu0
        %v1976 = vadd.f32 0.0, %v1975
        %v1977 = vpop.f32.mrf.mxu0
        %v1978 = vadd.f32 0.0, %v1977
        %1979 = vdwg.mxu0
        %v1980 = vadd.f32 %v1836, %v1874
        %v1981 = vadd.f32 %v1837, %v1876
        %v1982 = vadd.f32 %v1838, %v1908
        %v1983 = vadd.f32 %v1839, %v1910
        %v1984 = vadd.f32 %v1840, %v1942
        %v1985 = vadd.f32 %v1841, %v1944
        %v1986 = vadd.f32 %v1842, %v1976
        %v1987 = vadd.f32 %v1843, %v1978
        %v1990 = vunpack.c.l.b16 %v387
        %v1991 = vunpack.c.l.b16 %v388
        %v1992 = vpack.c.b16 %v1991, %v1990
        %v1997 = vunpack.c.l.b16 %v547
        %v1998 = vunpack.c.l.b16 %v548
        %v1999 = vunpack.c.l.b16 %v549
        %v2000 = vunpack.c.l.b16 %v550
        %v2001 = vpack.c.b16 %v1998, %v1997
        %v2002 = vpack.c.b16 %v2000, %v1999
        %v2006 = vsel %vm868, %v1992, 0
        %2008 = vmatpush.bf16.msra.mxu0 0
        %2009 = vmatpush.bf16.msra.mxu0 0
        %2010 = vmatpush.bf16.msra.mxu0 0
        %2011 = vmatpush.bf16.msra.mxu0 0
        %2012 = vmatpush.bf16.msra.mxu0 0
        %2013 = vmatpush.bf16.msra.mxu0 0
        %2014 = vmatpush.bf16.msra.mxu0 %v2002
        %2015 = vmatpush.bf16.msra.mxu0 %v2001
        %2016 = vmatmul.bf16.gmra.mxu0 %v2006
        %v2017 = vpop.f32.mrf.mxu0
        %v2018 = vadd.f32 0.0, %v2017
        %v2019 = vpop.f32.mrf.mxu0
        %v2020 = vadd.f32 0.0, %v2019
        %2021 = vdwg.mxu0
        %v2024 = vunpack.c.l.b16 %v389
        %v2025 = vunpack.c.l.b16 %v390
        %v2026 = vpack.c.b16 %v2025, %v2024
        %v2031 = vunpack.c.l.b16 %v551
        %v2032 = vunpack.c.l.b16 %v552
        %v2033 = vunpack.c.l.b16 %v553
        %v2034 = vunpack.c.l.b16 %v554
        %v2035 = vpack.c.b16 %v2032, %v2031
        %v2036 = vpack.c.b16 %v2034, %v2033
        %v2040 = vsel %vm868, %v2026, 0
        %2042 = vmatpush.bf16.msra.mxu0 0
        %2043 = vmatpush.bf16.msra.mxu0 0
        %2044 = vmatpush.bf16.msra.mxu0 0
        %2045 = vmatpush.bf16.msra.mxu0 0
        %2046 = vmatpush.bf16.msra.mxu0 0
        %2047 = vmatpush.bf16.msra.mxu0 0
        %2048 = vmatpush.bf16.msra.mxu0 %v2036
        %2049 = vmatpush.bf16.msra.mxu0 %v2035
        %2050 = vmatmul.bf16.gmra.mxu0 %v2040
        %v2051 = vpop.f32.mrf.mxu0
        %v2052 = vadd.f32 0.0, %v2051
        %v2053 = vpop.f32.mrf.mxu0
        %v2054 = vadd.f32 0.0, %v2053
        %2055 = vdwg.mxu0
        %v2058 = vunpack.c.l.b16 %v391
        %v2059 = vunpack.c.l.b16 %v392
        %v2060 = vpack.c.b16 %v2059, %v2058
        %v2065 = vunpack.c.l.b16 %v555
        %v2066 = vunpack.c.l.b16 %v556
        %v2067 = vunpack.c.l.b16 %v557
        %v2068 = vunpack.c.l.b16 %v558
        %v2069 = vpack.c.b16 %v2066, %v2065
        %v2070 = vpack.c.b16 %v2068, %v2067
        %v2074 = vsel %vm868, %v2060, 0
        %2076 = vmatpush.bf16.msra.mxu0 0
        %2077 = vmatpush.bf16.msra.mxu0 0
        %2078 = vmatpush.bf16.msra.mxu0 0
        %2079 = vmatpush.bf16.msra.mxu0 0
        %2080 = vmatpush.bf16.msra.mxu0 0
        %2081 = vmatpush.bf16.msra.mxu0 0
        %2082 = vmatpush.bf16.msra.mxu0 %v2070
        %2083 = vmatpush.bf16.msra.mxu0 %v2069
        %2084 = vmatmul.bf16.gmra.mxu0 %v2074
        %v2085 = vpop.f32.mrf.mxu0
        %v2086 = vadd.f32 0.0, %v2085
        %v2087 = vpop.f32.mrf.mxu0
        %v2088 = vadd.f32 0.0, %v2087
        %2089 = vdwg.mxu0
        %v2092 = vunpack.c.l.b16 %v393
        %v2093 = vunpack.c.l.b16 %v394
        %v2094 = vpack.c.b16 %v2093, %v2092
        %v2099 = vunpack.c.l.b16 %v559
        %v2100 = vunpack.c.l.b16 %v560
        %v2101 = vunpack.c.l.b16 %v561
        %v2102 = vunpack.c.l.b16 %v562
        %v2103 = vpack.c.b16 %v2100, %v2099
        %v2104 = vpack.c.b16 %v2102, %v2101
        %v2108 = vsel %vm868, %v2094, 0
        %2110 = vmatpush.bf16.msra.mxu0 0
        %2111 = vmatpush.bf16.msra.mxu0 0
        %2112 = vmatpush.bf16.msra.mxu0 0
        %2113 = vmatpush.bf16.msra.mxu0 0
        %2114 = vmatpush.bf16.msra.mxu0 0
        %2115 = vmatpush.bf16.msra.mxu0 0
        %2116 = vmatpush.bf16.msra.mxu0 %v2104
        %2117 = vmatpush.bf16.msra.mxu0 %v2103
        %2118 = vmatmul.bf16.gmra.mxu0 %v2108
        %v2119 = vpop.f32.mrf.mxu0
        %v2120 = vadd.f32 0.0, %v2119
        %v2121 = vpop.f32.mrf.mxu0
        %v2122 = vadd.f32 0.0, %v2121
        %2123 = vdwg.mxu0
        %v2124 = vadd.f32 %v1980, %v2018
        %v2125 = vadd.f32 %v1981, %v2020
        %v2126 = vadd.f32 %v1982, %v2052
        %v2127 = vadd.f32 %v1983, %v2054
        %v2128 = vadd.f32 %v1984, %v2086
        %v2129 = vadd.f32 %v1985, %v2088
        %v2130 = vadd.f32 %v1986, %v2120
        %v2131 = vadd.f32 %v1987, %v2122
        %v2134 = vunpack.c.l.b16 %v409
        %v2135 = vunpack.c.l.b16 %v410
        %v2136 = vpack.c.b16 %v2135, %v2134
        %v2141 = vunpack.c.l.b16 %v563
        %v2142 = vunpack.c.l.b16 %v564
        %v2143 = vunpack.c.l.b16 %v565
        %v2144 = vunpack.c.l.b16 %v566
        %v2145 = vpack.c.b16 %v2142, %v2141
        %v2146 = vpack.c.b16 %v2144, %v2143
        %v2150 = vsel %vm868, %v2136, 0
        %2152 = vmatpush.bf16.msra.mxu0 0
        %2153 = vmatpush.bf16.msra.mxu0 0
        %2154 = vmatpush.bf16.msra.mxu0 0
        %2155 = vmatpush.bf16.msra.mxu0 0
        %2156 = vmatpush.bf16.msra.mxu0 0
        %2157 = vmatpush.bf16.msra.mxu0 0
        %2158 = vmatpush.bf16.msra.mxu0 %v2146
        %2159 = vmatpush.bf16.msra.mxu0 %v2145
        %2160 = vmatmul.bf16.gmra.mxu0 %v2150
        %v2161 = vpop.f32.mrf.mxu0
        %v2162 = vadd.f32 0.0, %v2161
        %v2163 = vpop.f32.mrf.mxu0
        %v2164 = vadd.f32 0.0, %v2163
        %2165 = vdwg.mxu0
        %v2168 = vunpack.c.l.b16 %v411
        %v2169 = vunpack.c.l.b16 %v412
        %v2170 = vpack.c.b16 %v2169, %v2168
        %v2175 = vunpack.c.l.b16 %v567
        %v2176 = vunpack.c.l.b16 %v568
        %v2177 = vunpack.c.l.b16 %v569
        %v2178 = vunpack.c.l.b16 %v570
        %v2179 = vpack.c.b16 %v2176, %v2175
        %v2180 = vpack.c.b16 %v2178, %v2177
        %v2184 = vsel %vm868, %v2170, 0
        %2186 = vmatpush.bf16.msra.mxu0 0
        %2187 = vmatpush.bf16.msra.mxu0 0
        %2188 = vmatpush.bf16.msra.mxu0 0
        %2189 = vmatpush.bf16.msra.mxu0 0
        %2190 = vmatpush.bf16.msra.mxu0 0
        %2191 = vmatpush.bf16.msra.mxu0 0
        %2192 = vmatpush.bf16.msra.mxu0 %v2180
        %2193 = vmatpush.bf16.msra.mxu0 %v2179
        %2194 = vmatmul.bf16.gmra.mxu0 %v2184
        %v2195 = vpop.f32.mrf.mxu0
        %v2196 = vadd.f32 0.0, %v2195
        %v2197 = vpop.f32.mrf.mxu0
        %v2198 = vadd.f32 0.0, %v2197
        %2199 = vdwg.mxu0
        %v2202 = vunpack.c.l.b16 %v413
        %v2203 = vunpack.c.l.b16 %v414
        %v2204 = vpack.c.b16 %v2203, %v2202
        %v2209 = vunpack.c.l.b16 %v571
        %v2210 = vunpack.c.l.b16 %v572
        %v2211 = vunpack.c.l.b16 %v573
        %v2212 = vunpack.c.l.b16 %v574
        %v2213 = vpack.c.b16 %v2210, %v2209
        %v2214 = vpack.c.b16 %v2212, %v2211
        %v2218 = vsel %vm868, %v2204, 0
        %2220 = vmatpush.bf16.msra.mxu0 0
        %2221 = vmatpush.bf16.msra.mxu0 0
        %2222 = vmatpush.bf16.msra.mxu0 0
        %2223 = vmatpush.bf16.msra.mxu0 0
        %2224 = vmatpush.bf16.msra.mxu0 0
        %2225 = vmatpush.bf16.msra.mxu0 0
        %2226 = vmatpush.bf16.msra.mxu0 %v2214
        %2227 = vmatpush.bf16.msra.mxu0 %v2213
        %2228 = vmatmul.bf16.gmra.mxu0 %v2218
        %v2229 = vpop.f32.mrf.mxu0
        %v2230 = vadd.f32 0.0, %v2229
        %v2231 = vpop.f32.mrf.mxu0
        %v2232 = vadd.f32 0.0, %v2231
        %2233 = vdwg.mxu0
        %v2236 = vunpack.c.l.b16 %v415
        %v2237 = vunpack.c.l.b16 %v416
        %v2238 = vpack.c.b16 %v2237, %v2236
        %v2243 = vunpack.c.l.b16 %v575
        %v2244 = vunpack.c.l.b16 %v576
        %v2245 = vunpack.c.l.b16 %v577
        %v2246 = vunpack.c.l.b16 %v578
        %v2247 = vpack.c.b16 %v2244, %v2243
        %v2248 = vpack.c.b16 %v2246, %v2245
        %v2252 = vsel %vm868, %v2238, 0
        %2254 = vmatpush.bf16.msra.mxu0 0
        %2255 = vmatpush.bf16.msra.mxu0 0
        %2256 = vmatpush.bf16.msra.mxu0 0
        %2257 = vmatpush.bf16.msra.mxu0 0
        %2258 = vmatpush.bf16.msra.mxu0 0
        %2259 = vmatpush.bf16.msra.mxu0 0
        %2260 = vmatpush.bf16.msra.mxu0 %v2248
        %2261 = vmatpush.bf16.msra.mxu0 %v2247
        %2262 = vmatmul.bf16.gmra.mxu0 %v2252
        %v2263 = vpop.f32.mrf.mxu0
        %v2264 = vadd.f32 0.0, %v2263
        %v2265 = vpop.f32.mrf.mxu0
        %v2266 = vadd.f32 0.0, %v2265
        %2267 = vdwg.mxu0
        %v2268 = vadd.f32 %v2124, %v2162
        %v2269 = vadd.f32 %v2125, %v2164
        %v2270 = vadd.f32 %v2126, %v2196
        %v2271 = vadd.f32 %v2127, %v2198
        %v2272 = vadd.f32 %v2128, %v2230
        %v2273 = vadd.f32 %v2129, %v2232
        %v2274 = vadd.f32 %v2130, %v2264
        %v2275 = vadd.f32 %v2131, %v2266
        %v2280 = vunpack.c.l.b16 %v579
        %v2281 = vunpack.c.l.b16 %v580
        %v2282 = vunpack.c.l.b16 %v581
        %v2283 = vunpack.c.l.b16 %v582
        %v2284 = vpack.c.b16 %v2281, %v2280
        %v2285 = vpack.c.b16 %v2283, %v2282
        %2288 = vmatpush.bf16.msra.mxu0 0
        %2289 = vmatpush.bf16.msra.mxu0 0
        %2290 = vmatpush.bf16.msra.mxu0 0
        %2291 = vmatpush.bf16.msra.mxu0 0
        %2292 = vmatpush.bf16.msra.mxu0 0
        %2293 = vmatpush.bf16.msra.mxu0 0
        %2294 = vmatpush.bf16.msra.mxu0 %v2285
        %2295 = vmatpush.bf16.msra.mxu0 %v2284
        %2296 = vmatmul.bf16.gmra.mxu0 %v1040
        %v2297 = vpop.f32.mrf.mxu0
        %v2298 = vadd.f32 0.0, %v2297
        %v2299 = vpop.f32.mrf.mxu0
        %v2300 = vadd.f32 0.0, %v2299
        %2301 = vdwg.mxu0
        %v2306 = vunpack.c.l.b16 %v583
        %v2307 = vunpack.c.l.b16 %v584
        %v2308 = vunpack.c.l.b16 %v585
        %v2309 = vunpack.c.l.b16 %v586
        %v2310 = vpack.c.b16 %v2307, %v2306
        %v2311 = vpack.c.b16 %v2309, %v2308
        %2314 = vmatpush.bf16.msra.mxu0 0
        %2315 = vmatpush.bf16.msra.mxu0 0
        %2316 = vmatpush.bf16.msra.mxu0 0
        %2317 = vmatpush.bf16.msra.mxu0 0
        %2318 = vmatpush.bf16.msra.mxu0 0
        %2319 = vmatpush.bf16.msra.mxu0 0
        %2320 = vmatpush.bf16.msra.mxu0 %v2311
        %2321 = vmatpush.bf16.msra.mxu0 %v2310
        %2322 = vmatmul.bf16.gmra.mxu0 %v1074
        %v2323 = vpop.f32.mrf.mxu0
        %v2324 = vadd.f32 0.0, %v2323
        %v2325 = vpop.f32.mrf.mxu0
        %v2326 = vadd.f32 0.0, %v2325
        %2327 = vdwg.mxu0
        %v2332 = vunpack.c.l.b16 %v587
        %v2333 = vunpack.c.l.b16 %v588
        %v2334 = vunpack.c.l.b16 %v589
        %v2335 = vunpack.c.l.b16 %v590
        %v2336 = vpack.c.b16 %v2333, %v2332
        %v2337 = vpack.c.b16 %v2335, %v2334
        %2340 = vmatpush.bf16.msra.mxu0 0
        %2341 = vmatpush.bf16.msra.mxu0 0
        %2342 = vmatpush.bf16.msra.mxu0 0
        %2343 = vmatpush.bf16.msra.mxu0 0
        %2344 = vmatpush.bf16.msra.mxu0 0
        %2345 = vmatpush.bf16.msra.mxu0 0
        %2346 = vmatpush.bf16.msra.mxu0 %v2337
        %2347 = vmatpush.bf16.msra.mxu0 %v2336
        %2348 = vmatmul.bf16.gmra.mxu0 %v1108
        %v2349 = vpop.f32.mrf.mxu0
        %v2350 = vadd.f32 0.0, %v2349
        %v2351 = vpop.f32.mrf.mxu0
        %v2352 = vadd.f32 0.0, %v2351
        %2353 = vdwg.mxu0
        %v2356 = vunpack.c.l.b16 %v317
        %v2357 = vunpack.c.l.b16 %v318
        %v2358 = vpack.c.b16 %v2357, %v2356
        %v2363 = vunpack.c.l.b16 %v591
        %v2364 = vunpack.c.l.b16 %v592
        %v2365 = vunpack.c.l.b16 %v593
        %v2366 = vunpack.c.l.b16 %v594
        %v2367 = vpack.c.b16 %v2364, %v2363
        %v2368 = vpack.c.b16 %v2366, %v2365
        %v2372 = vsel %vm868, %v2358, 0
        %2374 = vmatpush.bf16.msra.mxu0 0
        %2375 = vmatpush.bf16.msra.mxu0 0
        %2376 = vmatpush.bf16.msra.mxu0 0
        %2377 = vmatpush.bf16.msra.mxu0 0
        %2378 = vmatpush.bf16.msra.mxu0 0
        %2379 = vmatpush.bf16.msra.mxu0 0
        %2380 = vmatpush.bf16.msra.mxu0 %v2368
        %2381 = vmatpush.bf16.msra.mxu0 %v2367
        %2382 = vmatmul.bf16.gmra.mxu0 %v2372
        %v2383 = vpop.f32.mrf.mxu0
        %v2384 = vadd.f32 0.0, %v2383
        %v2385 = vpop.f32.mrf.mxu0
        %v2386 = vadd.f32 0.0, %v2385
        %2387 = vdwg.mxu0
        %v2388 = vadd.f32 %v2268, %v2298
        %v2389 = vadd.f32 %v2269, %v2300
        %v2390 = vadd.f32 %v2270, %v2324
        %v2391 = vadd.f32 %v2271, %v2326
        %v2392 = vadd.f32 %v2272, %v2350
        %v2393 = vadd.f32 %v2273, %v2352
        %v2394 = vadd.f32 %v2274, %v2384
        %v2395 = vadd.f32 %v2275, %v2386
        %v2400 = vunpack.c.l.b16 %v595
        %v2401 = vunpack.c.l.b16 %v596
        %v2402 = vunpack.c.l.b16 %v597
        %v2403 = vunpack.c.l.b16 %v598
        %v2404 = vpack.c.b16 %v2401, %v2400
        %v2405 = vpack.c.b16 %v2403, %v2402
        %2408 = vmatpush.bf16.msra.mxu0 0
        %2409 = vmatpush.bf16.msra.mxu0 0
        %2410 = vmatpush.bf16.msra.mxu0 0
        %2411 = vmatpush.bf16.msra.mxu0 0
        %2412 = vmatpush.bf16.msra.mxu0 0
        %2413 = vmatpush.bf16.msra.mxu0 0
        %2414 = vmatpush.bf16.msra.mxu0 %v2405
        %2415 = vmatpush.bf16.msra.mxu0 %v2404
        %2416 = vmatmul.bf16.gmra.mxu0 %v904
        %v2417 = vpop.f32.mrf.mxu0
        %v2418 = vadd.f32 0.0, %v2417
        %v2419 = vpop.f32.mrf.mxu0
        %v2420 = vadd.f32 0.0, %v2419
        %2421 = vdwg.mxu0
        %v2426 = vunpack.c.l.b16 %v599
        %v2427 = vunpack.c.l.b16 %v600
        %v2428 = vunpack.c.l.b16 %v601
        %v2429 = vunpack.c.l.b16 %v602
        %v2430 = vpack.c.b16 %v2427, %v2426
        %v2431 = vpack.c.b16 %v2429, %v2428
        %2434 = vmatpush.bf16.msra.mxu0 0
        %2435 = vmatpush.bf16.msra.mxu0 0
        %2436 = vmatpush.bf16.msra.mxu0 0
        %2437 = vmatpush.bf16.msra.mxu0 0
        %2438 = vmatpush.bf16.msra.mxu0 0
        %2439 = vmatpush.bf16.msra.mxu0 0
        %2440 = vmatpush.bf16.msra.mxu0 %v2431
        %2441 = vmatpush.bf16.msra.mxu0 %v2430
        %2442 = vmatmul.bf16.gmra.mxu0 %v938
        %v2443 = vpop.f32.mrf.mxu0
        %v2444 = vadd.f32 0.0, %v2443
        %v2445 = vpop.f32.mrf.mxu0
        %v2446 = vadd.f32 0.0, %v2445
        %2447 = vdwg.mxu0
        %v2452 = vunpack.c.l.b16 %v603
        %v2453 = vunpack.c.l.b16 %v604
        %v2454 = vunpack.c.l.b16 %v605
        %v2455 = vunpack.c.l.b16 %v606
        %v2456 = vpack.c.b16 %v2453, %v2452
        %v2457 = vpack.c.b16 %v2455, %v2454
        %2460 = vmatpush.bf16.msra.mxu0 0
        %2461 = vmatpush.bf16.msra.mxu0 0
        %2462 = vmatpush.bf16.msra.mxu0 0
        %2463 = vmatpush.bf16.msra.mxu0 0
        %2464 = vmatpush.bf16.msra.mxu0 0
        %2465 = vmatpush.bf16.msra.mxu0 0
        %2466 = vmatpush.bf16.msra.mxu0 %v2457
        %2467 = vmatpush.bf16.msra.mxu0 %v2456
        %2468 = vmatmul.bf16.gmra.mxu0 %v972
        %v2469 = vpop.f32.mrf.mxu0
        %v2470 = vadd.f32 0.0, %v2469
        %v2471 = vpop.f32.mrf.mxu0
        %v2472 = vadd.f32 0.0, %v2471
        %2473 = vdwg.mxu0
        %v2476 = vunpack.c.l.b16 %v339
        %v2477 = vunpack.c.l.b16 %v340
        %v2478 = vpack.c.b16 %v2477, %v2476
        %v2483 = vunpack.c.l.b16 %v607
        %v2484 = vunpack.c.l.b16 %v608
        %v2485 = vunpack.c.l.b16 %v609
        %v2486 = vunpack.c.l.b16 %v610
        %v2487 = vpack.c.b16 %v2484, %v2483
        %v2488 = vpack.c.b16 %v2486, %v2485
        %v2492 = vsel %vm868, %v2478, 0
        %2494 = vmatpush.bf16.msra.mxu0 0
        %2495 = vmatpush.bf16.msra.mxu0 0
        %2496 = vmatpush.bf16.msra.mxu0 0
        %2497 = vmatpush.bf16.msra.mxu0 0
        %2498 = vmatpush.bf16.msra.mxu0 0
        %2499 = vmatpush.bf16.msra.mxu0 0
        %2500 = vmatpush.bf16.msra.mxu0 %v2488
        %2501 = vmatpush.bf16.msra.mxu0 %v2487
        %2502 = vmatmul.bf16.gmra.mxu0 %v2492
        %v2503 = vpop.f32.mrf.mxu0
        %v2504 = vadd.f32 0.0, %v2503
        %v2505 = vpop.f32.mrf.mxu0
        %v2506 = vadd.f32 0.0, %v2505
        %2507 = vdwg.mxu0
        %v2508 = vadd.f32 %v2388, %v2418
        %v2509 = vadd.f32 %v2389, %v2420
        %v2510 = vadd.f32 %v2390, %v2444
        %v2511 = vadd.f32 %v2391, %v2446
        %v2512 = vadd.f32 %v2392, %v2470
        %v2513 = vadd.f32 %v2393, %v2472
        %v2514 = vadd.f32 %v2394, %v2504
        %v2515 = vadd.f32 %v2395, %v2506
        %v2520 = vunpack.c.l.b16 %v611
        %v2521 = vunpack.c.l.b16 %v612
        %v2522 = vunpack.c.l.b16 %v613
        %v2523 = vunpack.c.l.b16 %v614
        %v2524 = vpack.c.b16 %v2521, %v2520
        %v2525 = vpack.c.b16 %v2523, %v2522
        %2528 = vmatpush.bf16.msra.mxu0 0
        %2529 = vmatpush.bf16.msra.mxu0 0
        %2530 = vmatpush.bf16.msra.mxu0 0
        %2531 = vmatpush.bf16.msra.mxu0 0
        %2532 = vmatpush.bf16.msra.mxu0 0
        %2533 = vmatpush.bf16.msra.mxu0 0
        %2534 = vmatpush.bf16.msra.mxu0 %v2525
        %2535 = vmatpush.bf16.msra.mxu0 %v2524
        %2536 = vmatmul.bf16.gmra.mxu0 %v1176
        %v2537 = vpop.f32.mrf.mxu0
        %v2538 = vadd.f32 0.0, %v2537
        %v2539 = vpop.f32.mrf.mxu0
        %v2540 = vadd.f32 0.0, %v2539
        %2541 = vdwg.mxu0
        %v2546 = vunpack.c.l.b16 %v615
        %v2547 = vunpack.c.l.b16 %v616
        %v2548 = vunpack.c.l.b16 %v617
        %v2549 = vunpack.c.l.b16 %v618
        %v2550 = vpack.c.b16 %v2547, %v2546
        %v2551 = vpack.c.b16 %v2549, %v2548
        %2554 = vmatpush.bf16.msra.mxu0 0
        %2555 = vmatpush.bf16.msra.mxu0 0
        %2556 = vmatpush.bf16.msra.mxu0 0
        %2557 = vmatpush.bf16.msra.mxu0 0
        %2558 = vmatpush.bf16.msra.mxu0 0
        %2559 = vmatpush.bf16.msra.mxu0 0
        %2560 = vmatpush.bf16.msra.mxu0 %v2551
        %2561 = vmatpush.bf16.msra.mxu0 %v2550
        %2562 = vmatmul.bf16.gmra.mxu0 %v1210
        %v2563 = vpop.f32.mrf.mxu0
        %v2564 = vadd.f32 0.0, %v2563
        %v2565 = vpop.f32.mrf.mxu0
        %v2566 = vadd.f32 0.0, %v2565
        %2567 = vdwg.mxu0
        %v2572 = vunpack.c.l.b16 %v619
        %v2573 = vunpack.c.l.b16 %v620
        %v2574 = vunpack.c.l.b16 %v621
        %v2575 = vunpack.c.l.b16 %v622
        %v2576 = vpack.c.b16 %v2573, %v2572
        %v2577 = vpack.c.b16 %v2575, %v2574
        %2580 = vmatpush.bf16.msra.mxu0 0
        %2581 = vmatpush.bf16.msra.mxu0 0
        %2582 = vmatpush.bf16.msra.mxu0 0
        %2583 = vmatpush.bf16.msra.mxu0 0
        %2584 = vmatpush.bf16.msra.mxu0 0
        %2585 = vmatpush.bf16.msra.mxu0 0
        %2586 = vmatpush.bf16.msra.mxu0 %v2577
        %2587 = vmatpush.bf16.msra.mxu0 %v2576
        %2588 = vmatmul.bf16.gmra.mxu0 %v1244
        %v2589 = vpop.f32.mrf.mxu0
        %v2590 = vadd.f32 0.0, %v2589
        %v2591 = vpop.f32.mrf.mxu0
        %v2592 = vadd.f32 0.0, %v2591
        %2593 = vdwg.mxu0
        %v2596 = vunpack.c.l.b16 %v361
        %v2597 = vunpack.c.l.b16 %v362
        %v2598 = vpack.c.b16 %v2597, %v2596
        %v2603 = vunpack.c.l.b16 %v623
        %v2604 = vunpack.c.l.b16 %v624
        %v2605 = vunpack.c.l.b16 %v625
        %v2606 = vunpack.c.l.b16 %v626
        %v2607 = vpack.c.b16 %v2604, %v2603
        %v2608 = vpack.c.b16 %v2606, %v2605
        %v2612 = vsel %vm868, %v2598, 0
        %2614 = vmatpush.bf16.msra.mxu0 0
        %2615 = vmatpush.bf16.msra.mxu0 0
        %2616 = vmatpush.bf16.msra.mxu0 0
        %2617 = vmatpush.bf16.msra.mxu0 0
        %2618 = vmatpush.bf16.msra.mxu0 0
        %2619 = vmatpush.bf16.msra.mxu0 0
        %2620 = vmatpush.bf16.msra.mxu0 %v2608
        %2621 = vmatpush.bf16.msra.mxu0 %v2607
        %2622 = vmatmul.bf16.gmra.mxu0 %v2612
        %v2623 = vpop.f32.mrf.mxu0
        %v2624 = vadd.f32 0.0, %v2623
        %v2625 = vpop.f32.mrf.mxu0
        %v2626 = vadd.f32 0.0, %v2625
        %2627 = vdwg.mxu0
        %v2628 = vadd.f32 %v2508, %v2538
        %v2629 = vadd.f32 %v2509, %v2540
        %v2630 = vadd.f32 %v2510, %v2564
        %v2631 = vadd.f32 %v2511, %v2566
        %v2632 = vadd.f32 %v2512, %v2590
        %v2633 = vadd.f32 %v2513, %v2592
        %v2634 = vadd.f32 %v2514, %v2624
        %v2635 = vadd.f32 %v2515, %v2626
        %v2640 = vunpack.c.l.b16 %v627
        %v2641 = vunpack.c.l.b16 %v628
        %v2642 = vunpack.c.l.b16 %v629
        %v2643 = vunpack.c.l.b16 %v630
        %v2644 = vpack.c.b16 %v2641, %v2640
        %v2645 = vpack.c.b16 %v2643, %v2642
        %2648 = vmatpush.bf16.msra.mxu0 0
        %2649 = vmatpush.bf16.msra.mxu0 0
        %2650 = vmatpush.bf16.msra.mxu0 0
        %2651 = vmatpush.bf16.msra.mxu0 0
        %2652 = vmatpush.bf16.msra.mxu0 0
        %2653 = vmatpush.bf16.msra.mxu0 0
        %2654 = vmatpush.bf16.msra.mxu0 %v2645
        %2655 = vmatpush.bf16.msra.mxu0 %v2644
        %2656 = vmatmul.bf16.gmra.mxu0 %v1320
        %v2657 = vpop.f32.mrf.mxu0
        %v2658 = vadd.f32 0.0, %v2657
        %v2659 = vpop.f32.mrf.mxu0
        %v2660 = vadd.f32 0.0, %v2659
        %2661 = vdwg.mxu0
        %v2666 = vunpack.c.l.b16 %v631
        %v2667 = vunpack.c.l.b16 %v632
        %v2668 = vunpack.c.l.b16 %v633
        %v2669 = vunpack.c.l.b16 %v634
        %v2670 = vpack.c.b16 %v2667, %v2666
        %v2671 = vpack.c.b16 %v2669, %v2668
        %2674 = vmatpush.bf16.msra.mxu0 0
        %2675 = vmatpush.bf16.msra.mxu0 0
        %2676 = vmatpush.bf16.msra.mxu0 0
        %2677 = vmatpush.bf16.msra.mxu0 0
        %2678 = vmatpush.bf16.msra.mxu0 0
        %2679 = vmatpush.bf16.msra.mxu0 0
        %2680 = vmatpush.bf16.msra.mxu0 %v2671
        %2681 = vmatpush.bf16.msra.mxu0 %v2670
        %2682 = vmatmul.bf16.gmra.mxu0 %v1354
        %v2683 = vpop.f32.mrf.mxu0
        %v2684 = vadd.f32 0.0, %v2683
        %v2685 = vpop.f32.mrf.mxu0
        %v2686 = vadd.f32 0.0, %v2685
        %2687 = vdwg.mxu0
        %v2692 = vunpack.c.l.b16 %v635
        %v2693 = vunpack.c.l.b16 %v636
        %v2694 = vunpack.c.l.b16 %v637
        %v2695 = vunpack.c.l.b16 %v638
        %v2696 = vpack.c.b16 %v2693, %v2692
        %v2697 = vpack.c.b16 %v2695, %v2694
        %2700 = vmatpush.bf16.msra.mxu0 0
        %2701 = vmatpush.bf16.msra.mxu0 0
        %2702 = vmatpush.bf16.msra.mxu0 0
        %2703 = vmatpush.bf16.msra.mxu0 0
        %2704 = vmatpush.bf16.msra.mxu0 0
        %2705 = vmatpush.bf16.msra.mxu0 0
        %2706 = vmatpush.bf16.msra.mxu0 %v2697
        %2707 = vmatpush.bf16.msra.mxu0 %v2696
        %2708 = vmatmul.bf16.gmra.mxu0 %v1388
        %v2709 = vpop.f32.mrf.mxu0
        %v2710 = vadd.f32 0.0, %v2709
        %v2711 = vpop.f32.mrf.mxu0
        %v2712 = vadd.f32 0.0, %v2711
        %2713 = vdwg.mxu0
        %v2716 = vunpack.c.l.b16 %v383
        %v2717 = vunpack.c.l.b16 %v384
        %v2718 = vpack.c.b16 %v2717, %v2716
        %v2723 = vunpack.c.l.b16 %v639
        %v2724 = vunpack.c.l.b16 %v640
        %v2725 = vunpack.c.l.b16 %v641
        %v2726 = vunpack.c.l.b16 %v642
        %v2727 = vpack.c.b16 %v2724, %v2723
        %v2728 = vpack.c.b16 %v2726, %v2725
        %v2732 = vsel %vm868, %v2718, 0
        %2734 = vmatpush.bf16.msra.mxu0 0
        %2735 = vmatpush.bf16.msra.mxu0 0
        %2736 = vmatpush.bf16.msra.mxu0 0
        %2737 = vmatpush.bf16.msra.mxu0 0
        %2738 = vmatpush.bf16.msra.mxu0 0
        %2739 = vmatpush.bf16.msra.mxu0 0
        %2740 = vmatpush.bf16.msra.mxu0 %v2728
        %2741 = vmatpush.bf16.msra.mxu0 %v2727
        %2742 = vmatmul.bf16.gmra.mxu0 %v2732
        %v2743 = vpop.f32.mrf.mxu0
        %v2744 = vadd.f32 0.0, %v2743
        %v2745 = vpop.f32.mrf.mxu0
        %v2746 = vadd.f32 0.0, %v2745
        %2747 = vdwg.mxu0
        %v2748 = vadd.f32 %v2628, %v2658
        %v2749 = vadd.f32 %v2629, %v2660
        %v2750 = vadd.f32 %v2630, %v2684
        %v2751 = vadd.f32 %v2631, %v2686
        %v2752 = vadd.f32 %v2632, %v2710
        %v2753 = vadd.f32 %v2633, %v2712
        %v2754 = vadd.f32 %v2634, %v2744
        %v2755 = vadd.f32 %v2635, %v2746
        %v2760 = vunpack.c.l.b16 %v643
        %v2761 = vunpack.c.l.b16 %v644
        %v2762 = vunpack.c.l.b16 %v645
        %v2763 = vunpack.c.l.b16 %v646
        %v2764 = vpack.c.b16 %v2761, %v2760
        %v2765 = vpack.c.b16 %v2763, %v2762
        %2768 = vmatpush.bf16.msra.mxu0 0
        %2769 = vmatpush.bf16.msra.mxu0 0
        %2770 = vmatpush.bf16.msra.mxu0 0
        %2771 = vmatpush.bf16.msra.mxu0 0
        %2772 = vmatpush.bf16.msra.mxu0 0
        %2773 = vmatpush.bf16.msra.mxu0 0
        %2774 = vmatpush.bf16.msra.mxu0 %v2765
        %2775 = vmatpush.bf16.msra.mxu0 %v2764
        %2776 = vmatmul.bf16.gmra.mxu0 %v1464
        %v2777 = vpop.f32.mrf.mxu0
        %v2778 = vadd.f32 0.0, %v2777
        %v2779 = vpop.f32.mrf.mxu0
        %v2780 = vadd.f32 0.0, %v2779
        %2781 = vdwg.mxu0
        %v2786 = vunpack.c.l.b16 %v647
        %v2787 = vunpack.c.l.b16 %v648
        %v2788 = vunpack.c.l.b16 %v649
        %v2789 = vunpack.c.l.b16 %v650
        %v2790 = vpack.c.b16 %v2787, %v2786
        %v2791 = vpack.c.b16 %v2789, %v2788
        %2794 = vmatpush.bf16.msra.mxu0 0
        %2795 = vmatpush.bf16.msra.mxu0 0
        %2796 = vmatpush.bf16.msra.mxu0 0
        %2797 = vmatpush.bf16.msra.mxu0 0
        %2798 = vmatpush.bf16.msra.mxu0 0
        %2799 = vmatpush.bf16.msra.mxu0 0
        %2800 = vmatpush.bf16.msra.mxu0 %v2791
        %2801 = vmatpush.bf16.msra.mxu0 %v2790
        %2802 = vmatmul.bf16.gmra.mxu0 %v1498
        %v2803 = vpop.f32.mrf.mxu0
        %v2804 = vadd.f32 0.0, %v2803
        %v2805 = vpop.f32.mrf.mxu0
        %v2806 = vadd.f32 0.0, %v2805
        %2807 = vdwg.mxu0
        %v2812 = vunpack.c.l.b16 %v651
        %v2813 = vunpack.c.l.b16 %v652
        %v2814 = vunpack.c.l.b16 %v653
        %v2815 = vunpack.c.l.b16 %v654
        %v2816 = vpack.c.b16 %v2813, %v2812
        %v2817 = vpack.c.b16 %v2815, %v2814
        %2820 = vmatpush.bf16.msra.mxu0 0
        %2821 = vmatpush.bf16.msra.mxu0 0
        %2822 = vmatpush.bf16.msra.mxu0 0
        %2823 = vmatpush.bf16.msra.mxu0 0
        %2824 = vmatpush.bf16.msra.mxu0 0
        %2825 = vmatpush.bf16.msra.mxu0 0
        %2826 = vmatpush.bf16.msra.mxu0 %v2817
        %2827 = vmatpush.bf16.msra.mxu0 %v2816
        %2828 = vmatmul.bf16.gmra.mxu0 %v1532
        %v2829 = vpop.f32.mrf.mxu0
        %v2830 = vadd.f32 0.0, %v2829
        %v2831 = vpop.f32.mrf.mxu0
        %v2832 = vadd.f32 0.0, %v2831
        %2833 = vdwg.mxu0
        %v2836 = vunpack.c.l.b16 %v405
        %v2837 = vunpack.c.l.b16 %v406
        %v2838 = vpack.c.b16 %v2837, %v2836
        %v2843 = vunpack.c.l.b16 %v655
        %v2844 = vunpack.c.l.b16 %v656
        %v2845 = vunpack.c.l.b16 %v657
        %v2846 = vunpack.c.l.b16 %v658
        %v2847 = vpack.c.b16 %v2844, %v2843
        %v2848 = vpack.c.b16 %v2846, %v2845
        %v2852 = vsel %vm868, %v2838, 0
        %2854 = vmatpush.bf16.msra.mxu0 0
        %2855 = vmatpush.bf16.msra.mxu0 0
        %2856 = vmatpush.bf16.msra.mxu0 0
        %2857 = vmatpush.bf16.msra.mxu0 0
        %2858 = vmatpush.bf16.msra.mxu0 0
        %2859 = vmatpush.bf16.msra.mxu0 0
        %2860 = vmatpush.bf16.msra.mxu0 %v2848
        %2861 = vmatpush.bf16.msra.mxu0 %v2847
        %2862 = vmatmul.bf16.gmra.mxu0 %v2852
        %v2863 = vpop.f32.mrf.mxu0
        %v2864 = vadd.f32 0.0, %v2863
        %v2865 = vpop.f32.mrf.mxu0
        %v2866 = vadd.f32 0.0, %v2865
        %2867 = vdwg.mxu0
        %v2868 = vadd.f32 %v2748, %v2778
        %v2869 = vadd.f32 %v2749, %v2780
        %v2870 = vadd.f32 %v2750, %v2804
        %v2871 = vadd.f32 %v2751, %v2806
        %v2872 = vadd.f32 %v2752, %v2830
        %v2873 = vadd.f32 %v2753, %v2832
        %v2874 = vadd.f32 %v2754, %v2864
        %v2875 = vadd.f32 %v2755, %v2866
        %v2880 = vunpack.c.l.b16 %v659
        %v2881 = vunpack.c.l.b16 %v660
        %v2882 = vunpack.c.l.b16 %v661
        %v2883 = vunpack.c.l.b16 %v662
        %v2884 = vpack.c.b16 %v2881, %v2880
        %v2885 = vpack.c.b16 %v2883, %v2882
        %2888 = vmatpush.bf16.msra.mxu0 0
        %2889 = vmatpush.bf16.msra.mxu0 0
        %2890 = vmatpush.bf16.msra.mxu0 0
        %2891 = vmatpush.bf16.msra.mxu0 0
        %2892 = vmatpush.bf16.msra.mxu0 0
        %2893 = vmatpush.bf16.msra.mxu0 0
        %2894 = vmatpush.bf16.msra.mxu0 %v2885
        %2895 = vmatpush.bf16.msra.mxu0 %v2884
        %2896 = vmatmul.bf16.gmra.mxu0 %v1608
        %v2897 = vpop.f32.mrf.mxu0
        %v2898 = vadd.f32 0.0, %v2897
        %v2899 = vpop.f32.mrf.mxu0
        %v2900 = vadd.f32 0.0, %v2899
        %2901 = vdwg.mxu0
        %v2906 = vunpack.c.l.b16 %v663
        %v2907 = vunpack.c.l.b16 %v664
        %v2908 = vunpack.c.l.b16 %v665
        %v2909 = vunpack.c.l.b16 %v666
        %v2910 = vpack.c.b16 %v2907, %v2906
        %v2911 = vpack.c.b16 %v2909, %v2908
        %2914 = vmatpush.bf16.msra.mxu0 0
        %2915 = vmatpush.bf16.msra.mxu0 0
        %2916 = vmatpush.bf16.msra.mxu0 0
        %2917 = vmatpush.bf16.msra.mxu0 0
        %2918 = vmatpush.bf16.msra.mxu0 0
        %2919 = vmatpush.bf16.msra.mxu0 0
        %2920 = vmatpush.bf16.msra.mxu0 %v2911
        %2921 = vmatpush.bf16.msra.mxu0 %v2910
        %2922 = vmatmul.bf16.gmra.mxu0 %v1642
        %v2923 = vpop.f32.mrf.mxu0
        %v2924 = vadd.f32 0.0, %v2923
        %v2925 = vpop.f32.mrf.mxu0
        %v2926 = vadd.f32 0.0, %v2925
        %2927 = vdwg.mxu0
        %v2932 = vunpack.c.l.b16 %v667
        %v2933 = vunpack.c.l.b16 %v668
        %v2934 = vunpack.c.l.b16 %v669
        %v2935 = vunpack.c.l.b16 %v670
        %v2936 = vpack.c.b16 %v2933, %v2932
        %v2937 = vpack.c.b16 %v2935, %v2934
        %2940 = vmatpush.bf16.msra.mxu0 0
        %2941 = vmatpush.bf16.msra.mxu0 0
        %2942 = vmatpush.bf16.msra.mxu0 0
        %2943 = vmatpush.bf16.msra.mxu0 0
        %2944 = vmatpush.bf16.msra.mxu0 0
        %2945 = vmatpush.bf16.msra.mxu0 0
        %2946 = vmatpush.bf16.msra.mxu0 %v2937
        %2947 = vmatpush.bf16.msra.mxu0 %v2936
        %2948 = vmatmul.bf16.gmra.mxu0 %v1676
        %v2949 = vpop.f32.mrf.mxu0
        %v2950 = vadd.f32 0.0, %v2949
        %v2951 = vpop.f32.mrf.mxu0
        %v2952 = vadd.f32 0.0, %v2951
        %2953 = vdwg.mxu0
        %v2956 = vunpack.c.l.b16 %v329
        %v2957 = vunpack.c.l.b16 %v330
        %v2958 = vpack.c.b16 %v2957, %v2956
        %v2963 = vunpack.c.l.b16 %v671
        %v2964 = vunpack.c.l.b16 %v672
        %v2965 = vunpack.c.l.b16 %v673
        %v2966 = vunpack.c.l.b16 %v674
        %v2967 = vpack.c.b16 %v2964, %v2963
        %v2968 = vpack.c.b16 %v2966, %v2965
        %v2972 = vsel %vm868, %v2958, 0
        %2974 = vmatpush.bf16.msra.mxu0 0
        %2975 = vmatpush.bf16.msra.mxu0 0
        %2976 = vmatpush.bf16.msra.mxu0 0
        %2977 = vmatpush.bf16.msra.mxu0 0
        %2978 = vmatpush.bf16.msra.mxu0 0
        %2979 = vmatpush.bf16.msra.mxu0 0
        %2980 = vmatpush.bf16.msra.mxu0 %v2968
        %2981 = vmatpush.bf16.msra.mxu0 %v2967
        %2982 = vmatmul.bf16.gmra.mxu0 %v2972
        %v2983 = vpop.f32.mrf.mxu0
        %v2984 = vadd.f32 0.0, %v2983
        %v2985 = vpop.f32.mrf.mxu0
        %v2986 = vadd.f32 0.0, %v2985
        %2987 = vdwg.mxu0
        %v2988 = vadd.f32 %v2868, %v2898
        %v2989 = vadd.f32 %v2869, %v2900
        %v2990 = vadd.f32 %v2870, %v2924
        %v2991 = vadd.f32 %v2871, %v2926
        %v2992 = vadd.f32 %v2872, %v2950
        %v2993 = vadd.f32 %v2873, %v2952
        %v2994 = vadd.f32 %v2874, %v2984
        %v2995 = vadd.f32 %v2875, %v2986
        %v3000 = vunpack.c.l.b16 %v675
        %v3001 = vunpack.c.l.b16 %v676
        %v3002 = vunpack.c.l.b16 %v677
        %v3003 = vunpack.c.l.b16 %v678
        %v3004 = vpack.c.b16 %v3001, %v3000
        %v3005 = vpack.c.b16 %v3003, %v3002
        %3008 = vmatpush.bf16.msra.mxu0 0
        %3009 = vmatpush.bf16.msra.mxu0 0
        %3010 = vmatpush.bf16.msra.mxu0 0
        %3011 = vmatpush.bf16.msra.mxu0 0
        %3012 = vmatpush.bf16.msra.mxu0 0
        %3013 = vmatpush.bf16.msra.mxu0 0
        %3014 = vmatpush.bf16.msra.mxu0 %v3005
        %3015 = vmatpush.bf16.msra.mxu0 %v3004
        %3016 = vmatmul.bf16.gmra.mxu0 %v1752
        %v3017 = vpop.f32.mrf.mxu0
        %v3018 = vadd.f32 0.0, %v3017
        %v3019 = vpop.f32.mrf.mxu0
        %v3020 = vadd.f32 0.0, %v3019
        %3021 = vdwg.mxu0
        %v3026 = vunpack.c.l.b16 %v679
        %v3027 = vunpack.c.l.b16 %v680
        %v3028 = vunpack.c.l.b16 %v681
        %v3029 = vunpack.c.l.b16 %v682
        %v3030 = vpack.c.b16 %v3027, %v3026
        %v3031 = vpack.c.b16 %v3029, %v3028
        %3034 = vmatpush.bf16.msra.mxu0 0
        %3035 = vmatpush.bf16.msra.mxu0 0
        %3036 = vmatpush.bf16.msra.mxu0 0
        %3037 = vmatpush.bf16.msra.mxu0 0
        %3038 = vmatpush.bf16.msra.mxu0 0
        %3039 = vmatpush.bf16.msra.mxu0 0
        %3040 = vmatpush.bf16.msra.mxu0 %v3031
        %3041 = vmatpush.bf16.msra.mxu0 %v3030
        %3042 = vmatmul.bf16.gmra.mxu0 %v1786
        %v3043 = vpop.f32.mrf.mxu0
        %v3044 = vadd.f32 0.0, %v3043
        %v3045 = vpop.f32.mrf.mxu0
        %v3046 = vadd.f32 0.0, %v3045
        %3047 = vdwg.mxu0
        %v3052 = vunpack.c.l.b16 %v683
        %v3053 = vunpack.c.l.b16 %v684
        %v3054 = vunpack.c.l.b16 %v685
        %v3055 = vunpack.c.l.b16 %v686
        %v3056 = vpack.c.b16 %v3053, %v3052
        %v3057 = vpack.c.b16 %v3055, %v3054
        %3060 = vmatpush.bf16.msra.mxu0 0
        %3061 = vmatpush.bf16.msra.mxu0 0
        %3062 = vmatpush.bf16.msra.mxu0 0
        %3063 = vmatpush.bf16.msra.mxu0 0
        %3064 = vmatpush.bf16.msra.mxu0 0
        %3065 = vmatpush.bf16.msra.mxu0 0
        %3066 = vmatpush.bf16.msra.mxu0 %v3057
        %3067 = vmatpush.bf16.msra.mxu0 %v3056
        %3068 = vmatmul.bf16.gmra.mxu0 %v1820
        %v3069 = vpop.f32.mrf.mxu0
        %v3070 = vadd.f32 0.0, %v3069
        %v3071 = vpop.f32.mrf.mxu0
        %v3072 = vadd.f32 0.0, %v3071
        %3073 = vdwg.mxu0
        %v3076 = vunpack.c.l.b16 %v351
        %v3077 = vunpack.c.l.b16 %v352
        %v3078 = vpack.c.b16 %v3077, %v3076
        %v3083 = vunpack.c.l.b16 %v687
        %v3084 = vunpack.c.l.b16 %v688
        %v3085 = vunpack.c.l.b16 %v689
        %v3086 = vunpack.c.l.b16 %v690
        %v3087 = vpack.c.b16 %v3084, %v3083
        %v3088 = vpack.c.b16 %v3086, %v3085
        %v3092 = vsel %vm868, %v3078, 0
        %3094 = vmatpush.bf16.msra.mxu0 0
        %3095 = vmatpush.bf16.msra.mxu0 0
        %3096 = vmatpush.bf16.msra.mxu0 0
        %3097 = vmatpush.bf16.msra.mxu0 0
        %3098 = vmatpush.bf16.msra.mxu0 0
        %3099 = vmatpush.bf16.msra.mxu0 0
        %3100 = vmatpush.bf16.msra.mxu0 %v3088
        %3101 = vmatpush.bf16.msra.mxu0 %v3087
        %3102 = vmatmul.bf16.gmra.mxu0 %v3092
        %v3103 = vpop.f32.mrf.mxu0
        %v3104 = vadd.f32 0.0, %v3103
        %v3105 = vpop.f32.mrf.mxu0
        %v3106 = vadd.f32 0.0, %v3105
        %3107 = vdwg.mxu0
        %v3108 = vadd.f32 %v2988, %v3018
        %v3109 = vadd.f32 %v2989, %v3020
        %v3110 = vadd.f32 %v2990, %v3044
        %v3111 = vadd.f32 %v2991, %v3046
        %v3112 = vadd.f32 %v2992, %v3070
        %v3113 = vadd.f32 %v2993, %v3072
        %v3114 = vadd.f32 %v2994, %v3104
        %v3115 = vadd.f32 %v2995, %v3106
        %v3120 = vunpack.c.l.b16 %v691
        %v3121 = vunpack.c.l.b16 %v692
        %v3122 = vunpack.c.l.b16 %v693
        %v3123 = vunpack.c.l.b16 %v694
        %v3124 = vpack.c.b16 %v3121, %v3120
        %v3125 = vpack.c.b16 %v3123, %v3122
        %3128 = vmatpush.bf16.msra.mxu0 0
        %3129 = vmatpush.bf16.msra.mxu0 0
        %3130 = vmatpush.bf16.msra.mxu0 0
        %3131 = vmatpush.bf16.msra.mxu0 0
        %3132 = vmatpush.bf16.msra.mxu0 0
        %3133 = vmatpush.bf16.msra.mxu0 0
        %3134 = vmatpush.bf16.msra.mxu0 %v3125
        %3135 = vmatpush.bf16.msra.mxu0 %v3124
        %3136 = vmatmul.bf16.gmra.mxu0 %v1896
        %v3137 = vpop.f32.mrf.mxu0
        %v3138 = vadd.f32 0.0, %v3137
        %v3139 = vpop.f32.mrf.mxu0
        %v3140 = vadd.f32 0.0, %v3139
        %3141 = vdwg.mxu0
        %v3146 = vunpack.c.l.b16 %v695
        %v3147 = vunpack.c.l.b16 %v696
        %v3148 = vunpack.c.l.b16 %v697
        %v3149 = vunpack.c.l.b16 %v698
        %v3150 = vpack.c.b16 %v3147, %v3146
        %v3151 = vpack.c.b16 %v3149, %v3148
        %3154 = vmatpush.bf16.msra.mxu0 0
        %3155 = vmatpush.bf16.msra.mxu0 0
        %3156 = vmatpush.bf16.msra.mxu0 0
        %3157 = vmatpush.bf16.msra.mxu0 0
        %3158 = vmatpush.bf16.msra.mxu0 0
        %3159 = vmatpush.bf16.msra.mxu0 0
        %3160 = vmatpush.bf16.msra.mxu0 %v3151
        %3161 = vmatpush.bf16.msra.mxu0 %v3150
        %3162 = vmatmul.bf16.gmra.mxu0 %v1930
        %v3163 = vpop.f32.mrf.mxu0
        %v3164 = vadd.f32 0.0, %v3163
        %v3165 = vpop.f32.mrf.mxu0
        %v3166 = vadd.f32 0.0, %v3165
        %3167 = vdwg.mxu0
        %v3172 = vunpack.c.l.b16 %v699
        %v3173 = vunpack.c.l.b16 %v700
        %v3174 = vunpack.c.l.b16 %v701
        %v3175 = vunpack.c.l.b16 %v702
        %v3176 = vpack.c.b16 %v3173, %v3172
        %v3177 = vpack.c.b16 %v3175, %v3174
        %3180 = vmatpush.bf16.msra.mxu0 0
        %3181 = vmatpush.bf16.msra.mxu0 0
        %3182 = vmatpush.bf16.msra.mxu0 0
        %3183 = vmatpush.bf16.msra.mxu0 0
        %3184 = vmatpush.bf16.msra.mxu0 0
        %3185 = vmatpush.bf16.msra.mxu0 0
        %3186 = vmatpush.bf16.msra.mxu0 %v3177
        %3187 = vmatpush.bf16.msra.mxu0 %v3176
        %3188 = vmatmul.bf16.gmra.mxu0 %v1964
        %v3189 = vpop.f32.mrf.mxu0
        %v3190 = vadd.f32 0.0, %v3189
        %v3191 = vpop.f32.mrf.mxu0
        %v3192 = vadd.f32 0.0, %v3191
        %3193 = vdwg.mxu0
        %v3196 = vunpack.c.l.b16 %v373
        %v3197 = vunpack.c.l.b16 %v374
        %v3198 = vpack.c.b16 %v3197, %v3196
        %v3203 = vunpack.c.l.b16 %v703
        %v3204 = vunpack.c.l.b16 %v704
        %v3205 = vunpack.c.l.b16 %v705
        %v3206 = vunpack.c.l.b16 %v706
        %v3207 = vpack.c.b16 %v3204, %v3203
        %v3208 = vpack.c.b16 %v3206, %v3205
        %v3212 = vsel %vm868, %v3198, 0
        %3214 = vmatpush.bf16.msra.mxu0 0
        %3215 = vmatpush.bf16.msra.mxu0 0
        %3216 = vmatpush.bf16.msra.mxu0 0
        %3217 = vmatpush.bf16.msra.mxu0 0
        %3218 = vmatpush.bf16.msra.mxu0 0
        %3219 = vmatpush.bf16.msra.mxu0 0
        %3220 = vmatpush.bf16.msra.mxu0 %v3208
        %3221 = vmatpush.bf16.msra.mxu0 %v3207
        %3222 = vmatmul.bf16.gmra.mxu0 %v3212
        %v3223 = vpop.f32.mrf.mxu0
        %v3224 = vadd.f32 0.0, %v3223
        %v3225 = vpop.f32.mrf.mxu0
        %v3226 = vadd.f32 0.0, %v3225
        %3227 = vdwg.mxu0
        %v3228 = vadd.f32 %v3108, %v3138
        %v3229 = vadd.f32 %v3109, %v3140
        %v3230 = vadd.f32 %v3110, %v3164
        %v3231 = vadd.f32 %v3111, %v3166
        %v3232 = vadd.f32 %v3112, %v3190
        %v3233 = vadd.f32 %v3113, %v3192
        %v3234 = vadd.f32 %v3114, %v3224
        %v3235 = vadd.f32 %v3115, %v3226
        %v3240 = vunpack.c.l.b16 %v707
        %v3241 = vunpack.c.l.b16 %v708
        %v3242 = vunpack.c.l.b16 %v709
        %v3243 = vunpack.c.l.b16 %v710
        %v3244 = vpack.c.b16 %v3241, %v3240
        %v3245 = vpack.c.b16 %v3243, %v3242
        %3248 = vmatpush.bf16.msra.mxu0 0
        %3249 = vmatpush.bf16.msra.mxu0 0
        %3250 = vmatpush.bf16.msra.mxu0 0
        %3251 = vmatpush.bf16.msra.mxu0 0
        %3252 = vmatpush.bf16.msra.mxu0 0
        %3253 = vmatpush.bf16.msra.mxu0 0
        %3254 = vmatpush.bf16.msra.mxu0 %v3245
        %3255 = vmatpush.bf16.msra.mxu0 %v3244
        %3256 = vmatmul.bf16.gmra.mxu0 %v2040
        %v3257 = vpop.f32.mrf.mxu0
        %v3258 = vadd.f32 0.0, %v3257
        %v3259 = vpop.f32.mrf.mxu0
        %v3260 = vadd.f32 0.0, %v3259
        %3261 = vdwg.mxu0
        %v3266 = vunpack.c.l.b16 %v711
        %v3267 = vunpack.c.l.b16 %v712
        %v3268 = vunpack.c.l.b16 %v713
        %v3269 = vunpack.c.l.b16 %v714
        %v3270 = vpack.c.b16 %v3267, %v3266
        %v3271 = vpack.c.b16 %v3269, %v3268
        %3274 = vmatpush.bf16.msra.mxu0 0
        %3275 = vmatpush.bf16.msra.mxu0 0
        %3276 = vmatpush.bf16.msra.mxu0 0
        %3277 = vmatpush.bf16.msra.mxu0 0
        %3278 = vmatpush.bf16.msra.mxu0 0
        %3279 = vmatpush.bf16.msra.mxu0 0
        %3280 = vmatpush.bf16.msra.mxu0 %v3271
        %3281 = vmatpush.bf16.msra.mxu0 %v3270
        %3282 = vmatmul.bf16.gmra.mxu0 %v2074
        %v3283 = vpop.f32.mrf.mxu0
        %v3284 = vadd.f32 0.0, %v3283
        %v3285 = vpop.f32.mrf.mxu0
        %v3286 = vadd.f32 0.0, %v3285
        %3287 = vdwg.mxu0
        %v3292 = vunpack.c.l.b16 %v715
        %v3293 = vunpack.c.l.b16 %v716
        %v3294 = vunpack.c.l.b16 %v717
        %v3295 = vunpack.c.l.b16 %v718
        %v3296 = vpack.c.b16 %v3293, %v3292
        %v3297 = vpack.c.b16 %v3295, %v3294
        %3300 = vmatpush.bf16.msra.mxu0 0
        %3301 = vmatpush.bf16.msra.mxu0 0
        %3302 = vmatpush.bf16.msra.mxu0 0
        %3303 = vmatpush.bf16.msra.mxu0 0
        %3304 = vmatpush.bf16.msra.mxu0 0
        %3305 = vmatpush.bf16.msra.mxu0 0
        %3306 = vmatpush.bf16.msra.mxu0 %v3297
        %3307 = vmatpush.bf16.msra.mxu0 %v3296
        %3308 = vmatmul.bf16.gmra.mxu0 %v2108
        %v3309 = vpop.f32.mrf.mxu0
        %v3310 = vadd.f32 0.0, %v3309
        %v3311 = vpop.f32.mrf.mxu0
        %v3312 = vadd.f32 0.0, %v3311
        %3313 = vdwg.mxu0
        %v3316 = vunpack.c.l.b16 %v395
        %v3317 = vunpack.c.l.b16 %v396
        %v3318 = vpack.c.b16 %v3317, %v3316
        %v3323 = vunpack.c.l.b16 %v719
        %v3324 = vunpack.c.l.b16 %v720
        %v3325 = vunpack.c.l.b16 %v721
        %v3326 = vunpack.c.l.b16 %v722
        %v3327 = vpack.c.b16 %v3324, %v3323
        %v3328 = vpack.c.b16 %v3326, %v3325
        %v3332 = vsel %vm868, %v3318, 0
        %3334 = vmatpush.bf16.msra.mxu0 0
        %3335 = vmatpush.bf16.msra.mxu0 0
        %3336 = vmatpush.bf16.msra.mxu0 0
        %3337 = vmatpush.bf16.msra.mxu0 0
        %3338 = vmatpush.bf16.msra.mxu0 0
        %3339 = vmatpush.bf16.msra.mxu0 0
        %3340 = vmatpush.bf16.msra.mxu0 %v3328
        %3341 = vmatpush.bf16.msra.mxu0 %v3327
        %3342 = vmatmul.bf16.gmra.mxu0 %v3332
        %v3343 = vpop.f32.mrf.mxu0
        %v3344 = vadd.f32 0.0, %v3343
        %v3345 = vpop.f32.mrf.mxu0
        %v3346 = vadd.f32 0.0, %v3345
        %3347 = vdwg.mxu0
        %v3348 = vadd.f32 %v3228, %v3258
        %v3349 = vadd.f32 %v3229, %v3260
        %v3350 = vadd.f32 %v3230, %v3284
        %v3351 = vadd.f32 %v3231, %v3286
        %v3352 = vadd.f32 %v3232, %v3310
        %v3353 = vadd.f32 %v3233, %v3312
        %v3354 = vadd.f32 %v3234, %v3344
        %v3355 = vadd.f32 %v3235, %v3346
        %v3360 = vunpack.c.l.b16 %v723
        %v3361 = vunpack.c.l.b16 %v724
        %v3362 = vunpack.c.l.b16 %v725
        %v3363 = vunpack.c.l.b16 %v726
        %v3364 = vpack.c.b16 %v3361, %v3360
        %v3365 = vpack.c.b16 %v3363, %v3362
        %3368 = vmatpush.bf16.msra.mxu0 0
        %3369 = vmatpush.bf16.msra.mxu0 0
        %3370 = vmatpush.bf16.msra.mxu0 0
        %3371 = vmatpush.bf16.msra.mxu0 0
        %3372 = vmatpush.bf16.msra.mxu0 0
        %3373 = vmatpush.bf16.msra.mxu0 0
        %3374 = vmatpush.bf16.msra.mxu0 %v3365
        %3375 = vmatpush.bf16.msra.mxu0 %v3364
        %3376 = vmatmul.bf16.gmra.mxu0 %v2184
        %v3377 = vpop.f32.mrf.mxu0
        %v3378 = vadd.f32 0.0, %v3377
        %v3379 = vpop.f32.mrf.mxu0
        %v3380 = vadd.f32 0.0, %v3379
        %3381 = vdwg.mxu0
        %v3386 = vunpack.c.l.b16 %v727
        %v3387 = vunpack.c.l.b16 %v728
        %v3388 = vunpack.c.l.b16 %v729
        %v3389 = vunpack.c.l.b16 %v730
        %v3390 = vpack.c.b16 %v3387, %v3386
        %v3391 = vpack.c.b16 %v3389, %v3388
        %3394 = vmatpush.bf16.msra.mxu0 0
        %3395 = vmatpush.bf16.msra.mxu0 0
        %3396 = vmatpush.bf16.msra.mxu0 0
        %3397 = vmatpush.bf16.msra.mxu0 0
        %3398 = vmatpush.bf16.msra.mxu0 0
        %3399 = vmatpush.bf16.msra.mxu0 0
        %3400 = vmatpush.bf16.msra.mxu0 %v3391
        %3401 = vmatpush.bf16.msra.mxu0 %v3390
        %3402 = vmatmul.bf16.gmra.mxu0 %v2218
        %v3403 = vpop.f32.mrf.mxu0
        %v3404 = vadd.f32 0.0, %v3403
        %v3405 = vpop.f32.mrf.mxu0
        %v3406 = vadd.f32 0.0, %v3405
        %3407 = vdwg.mxu0
        %v3412 = vunpack.c.l.b16 %v731
        %v3413 = vunpack.c.l.b16 %v732
        %v3414 = vunpack.c.l.b16 %v733
        %v3415 = vunpack.c.l.b16 %v734
        %v3416 = vpack.c.b16 %v3413, %v3412
        %v3417 = vpack.c.b16 %v3415, %v3414
        %3420 = vmatpush.bf16.msra.mxu0 0
        %3421 = vmatpush.bf16.msra.mxu0 0
        %3422 = vmatpush.bf16.msra.mxu0 0
        %3423 = vmatpush.bf16.msra.mxu0 0
        %3424 = vmatpush.bf16.msra.mxu0 0
        %3425 = vmatpush.bf16.msra.mxu0 0
        %3426 = vmatpush.bf16.msra.mxu0 %v3417
        %3427 = vmatpush.bf16.msra.mxu0 %v3416
        %3428 = vmatmul.bf16.gmra.mxu0 %v2252
        %v3429 = vpop.f32.mrf.mxu0
        %v3430 = vadd.f32 0.0, %v3429
        %v3431 = vpop.f32.mrf.mxu0
        %v3432 = vadd.f32 0.0, %v3431
        %3433 = vdwg.mxu0
        %v3436 = vunpack.c.l.b16 %v417
        %v3437 = vunpack.c.l.b16 %v418
        %v3438 = vpack.c.b16 %v3437, %v3436
        %v3443 = vunpack.c.l.b16 %v735
        %v3444 = vunpack.c.l.b16 %v736
        %v3445 = vunpack.c.l.b16 %v737
        %v3446 = vunpack.c.l.b16 %v738
        %v3447 = vpack.c.b16 %v3444, %v3443
        %v3448 = vpack.c.b16 %v3446, %v3445
        %v3452 = vsel %vm868, %v3438, 0
        %3454 = vmatpush.bf16.msra.mxu0 0
        %3455 = vmatpush.bf16.msra.mxu0 0
        %3456 = vmatpush.bf16.msra.mxu0 0
        %3457 = vmatpush.bf16.msra.mxu0 0
        %3458 = vmatpush.bf16.msra.mxu0 0
        %3459 = vmatpush.bf16.msra.mxu0 0
        %3460 = vmatpush.bf16.msra.mxu0 %v3448
        %3461 = vmatpush.bf16.msra.mxu0 %v3447
        %3462 = vmatmul.bf16.gmra.mxu0 %v3452
        %v3463 = vpop.f32.mrf.mxu0
        %v3464 = vadd.f32 0.0, %v3463
        %v3465 = vpop.f32.mrf.mxu0
        %v3466 = vadd.f32 0.0, %v3465
        %3467 = vdwg.mxu0
        %v3468 = vadd.f32 %v3348, %v3378
        %v3469 = vadd.f32 %v3349, %v3380
        %v3470 = vadd.f32 %v3350, %v3404
        %v3471 = vadd.f32 %v3351, %v3406
        %v3472 = vadd.f32 %v3352, %v3430
        %v3473 = vadd.f32 %v3353, %v3432
        %v3474 = vadd.f32 %v3354, %v3464
        %v3475 = vadd.f32 %v3355, %v3466
        %v3480 = vunpack.c.l.b16 %v739
        %v3481 = vunpack.c.l.b16 %v740
        %v3482 = vunpack.c.l.b16 %v741
        %v3483 = vunpack.c.l.b16 %v742
        %v3484 = vpack.c.b16 %v3481, %v3480
        %v3485 = vpack.c.b16 %v3483, %v3482
        %3488 = vmatpush.bf16.msra.mxu0 0
        %3489 = vmatpush.bf16.msra.mxu0 0
        %3490 = vmatpush.bf16.msra.mxu0 0
        %3491 = vmatpush.bf16.msra.mxu0 0
        %3492 = vmatpush.bf16.msra.mxu0 0
        %3493 = vmatpush.bf16.msra.mxu0 0
        %3494 = vmatpush.bf16.msra.mxu0 %v3485
        %3495 = vmatpush.bf16.msra.mxu0 %v3484
        %3496 = vmatmul.bf16.gmra.mxu0 %v1074
        %v3497 = vpop.f32.mrf.mxu0
        %v3498 = vadd.f32 0.0, %v3497
        %v3499 = vpop.f32.mrf.mxu0
        %v3500 = vadd.f32 0.0, %v3499
        %3501 = vdwg.mxu0
        %v3506 = vunpack.c.l.b16 %v743
        %v3507 = vunpack.c.l.b16 %v744
        %v3508 = vunpack.c.l.b16 %v745
        %v3509 = vunpack.c.l.b16 %v746
        %v3510 = vpack.c.b16 %v3507, %v3506
        %v3511 = vpack.c.b16 %v3509, %v3508
        %3514 = vmatpush.bf16.msra.mxu0 0
        %3515 = vmatpush.bf16.msra.mxu0 0
        %3516 = vmatpush.bf16.msra.mxu0 0
        %3517 = vmatpush.bf16.msra.mxu0 0
        %3518 = vmatpush.bf16.msra.mxu0 0
        %3519 = vmatpush.bf16.msra.mxu0 0
        %3520 = vmatpush.bf16.msra.mxu0 %v3511
        %3521 = vmatpush.bf16.msra.mxu0 %v3510
        %3522 = vmatmul.bf16.gmra.mxu0 %v1108
        %v3523 = vpop.f32.mrf.mxu0
        %v3524 = vadd.f32 0.0, %v3523
        %v3525 = vpop.f32.mrf.mxu0
        %v3526 = vadd.f32 0.0, %v3525
        %3527 = vdwg.mxu0
        %v3532 = vunpack.c.l.b16 %v747
        %v3533 = vunpack.c.l.b16 %v748
        %v3534 = vunpack.c.l.b16 %v749
        %v3535 = vunpack.c.l.b16 %v750
        %v3536 = vpack.c.b16 %v3533, %v3532
        %v3537 = vpack.c.b16 %v3535, %v3534
        %3540 = vmatpush.bf16.msra.mxu0 0
        %3541 = vmatpush.bf16.msra.mxu0 0
        %3542 = vmatpush.bf16.msra.mxu0 0
        %3543 = vmatpush.bf16.msra.mxu0 0
        %3544 = vmatpush.bf16.msra.mxu0 0
        %3545 = vmatpush.bf16.msra.mxu0 0
        %3546 = vmatpush.bf16.msra.mxu0 %v3537
        %3547 = vmatpush.bf16.msra.mxu0 %v3536
        %3548 = vmatmul.bf16.gmra.mxu0 %v2372
        %v3549 = vpop.f32.mrf.mxu0
        %v3550 = vadd.f32 0.0, %v3549
        %v3551 = vpop.f32.mrf.mxu0
        %v3552 = vadd.f32 0.0, %v3551
        %3553 = vdwg.mxu0
        %v3556 = vunpack.c.l.b16 %v319
        %v3557 = vunpack.c.l.b16 %v320
        %v3558 = vpack.c.b16 %v3557, %v3556
        %v3563 = vunpack.c.l.b16 %v751
        %v3564 = vunpack.c.l.b16 %v752
        %v3565 = vunpack.c.l.b16 %v753
        %v3566 = vunpack.c.l.b16 %v754
        %v3567 = vpack.c.b16 %v3564, %v3563
        %v3568 = vpack.c.b16 %v3566, %v3565
        %v3572 = vsel %vm868, %v3558, 0
        %3574 = vmatpush.bf16.msra.mxu0 0
        %3575 = vmatpush.bf16.msra.mxu0 0
        %3576 = vmatpush.bf16.msra.mxu0 0
        %3577 = vmatpush.bf16.msra.mxu0 0
        %3578 = vmatpush.bf16.msra.mxu0 0
        %3579 = vmatpush.bf16.msra.mxu0 0
        %3580 = vmatpush.bf16.msra.mxu0 %v3568
        %3581 = vmatpush.bf16.msra.mxu0 %v3567
        %3582 = vmatmul.bf16.gmra.mxu0 %v3572
        %v3583 = vpop.f32.mrf.mxu0
        %v3584 = vadd.f32 0.0, %v3583
        %v3585 = vpop.f32.mrf.mxu0
        %v3586 = vadd.f32 0.0, %v3585
        %3587 = vdwg.mxu0
        %v3588 = vadd.f32 %v3468, %v3498
        %v3589 = vadd.f32 %v3469, %v3500
        %v3590 = vadd.f32 %v3470, %v3524
        %v3591 = vadd.f32 %v3471, %v3526
        %v3592 = vadd.f32 %v3472, %v3550
        %v3593 = vadd.f32 %v3473, %v3552
        %v3594 = vadd.f32 %v3474, %v3584
        %v3595 = vadd.f32 %v3475, %v3586
        %v3600 = vunpack.c.l.b16 %v755
        %v3601 = vunpack.c.l.b16 %v756
        %v3602 = vunpack.c.l.b16 %v757
        %v3603 = vunpack.c.l.b16 %v758
        %v3604 = vpack.c.b16 %v3601, %v3600
        %v3605 = vpack.c.b16 %v3603, %v3602
        %3608 = vmatpush.bf16.msra.mxu0 0
        %3609 = vmatpush.bf16.msra.mxu0 0
        %3610 = vmatpush.bf16.msra.mxu0 0
        %3611 = vmatpush.bf16.msra.mxu0 0
        %3612 = vmatpush.bf16.msra.mxu0 0
        %3613 = vmatpush.bf16.msra.mxu0 0
        %3614 = vmatpush.bf16.msra.mxu0 %v3605
        %3615 = vmatpush.bf16.msra.mxu0 %v3604
        %3616 = vmatmul.bf16.gmra.mxu0 %v938
        %v3617 = vpop.f32.mrf.mxu0
        %v3618 = vadd.f32 0.0, %v3617
        %v3619 = vpop.f32.mrf.mxu0
        %v3620 = vadd.f32 0.0, %v3619
        %3621 = vdwg.mxu0
        %v3626 = vunpack.c.l.b16 %v759
        %v3627 = vunpack.c.l.b16 %v760
        %v3628 = vunpack.c.l.b16 %v761
        %v3629 = vunpack.c.l.b16 %v762
        %v3630 = vpack.c.b16 %v3627, %v3626
        %v3631 = vpack.c.b16 %v3629, %v3628
        %3634 = vmatpush.bf16.msra.mxu0 0
        %3635 = vmatpush.bf16.msra.mxu0 0
        %3636 = vmatpush.bf16.msra.mxu0 0
        %3637 = vmatpush.bf16.msra.mxu0 0
        %3638 = vmatpush.bf16.msra.mxu0 0
        %3639 = vmatpush.bf16.msra.mxu0 0
        %3640 = vmatpush.bf16.msra.mxu0 %v3631
        %3641 = vmatpush.bf16.msra.mxu0 %v3630
        %3642 = vmatmul.bf16.gmra.mxu0 %v972
        %v3643 = vpop.f32.mrf.mxu0
        %v3644 = vadd.f32 0.0, %v3643
        %v3645 = vpop.f32.mrf.mxu0
        %v3646 = vadd.f32 0.0, %v3645
        %3647 = vdwg.mxu0
        %v3652 = vunpack.c.l.b16 %v763
        %v3653 = vunpack.c.l.b16 %v764
        %v3654 = vunpack.c.l.b16 %v765
        %v3655 = vunpack.c.l.b16 %v766
        %v3656 = vpack.c.b16 %v3653, %v3652
        %v3657 = vpack.c.b16 %v3655, %v3654
        %3660 = vmatpush.bf16.msra.mxu0 0
        %3661 = vmatpush.bf16.msra.mxu0 0
        %3662 = vmatpush.bf16.msra.mxu0 0
        %3663 = vmatpush.bf16.msra.mxu0 0
        %3664 = vmatpush.bf16.msra.mxu0 0
        %3665 = vmatpush.bf16.msra.mxu0 0
        %3666 = vmatpush.bf16.msra.mxu0 %v3657
        %3667 = vmatpush.bf16.msra.mxu0 %v3656
        %3668 = vmatmul.bf16.gmra.mxu0 %v2492
        %v3669 = vpop.f32.mrf.mxu0
        %v3670 = vadd.f32 0.0, %v3669
        %v3671 = vpop.f32.mrf.mxu0
        %v3672 = vadd.f32 0.0, %v3671
        %3673 = vdwg.mxu0
        %v3676 = vunpack.c.l.b16 %v341
        %v3677 = vunpack.c.l.b16 %v342
        %v3678 = vpack.c.b16 %v3677, %v3676
        %v3683 = vunpack.c.l.b16 %v767
        %v3684 = vunpack.c.l.b16 %v768
        %v3685 = vunpack.c.l.b16 %v769
        %v3686 = vunpack.c.l.b16 %v770
        %v3687 = vpack.c.b16 %v3684, %v3683
        %v3688 = vpack.c.b16 %v3686, %v3685
        %v3692 = vsel %vm868, %v3678, 0
        %3694 = vmatpush.bf16.msra.mxu0 0
        %3695 = vmatpush.bf16.msra.mxu0 0
        %3696 = vmatpush.bf16.msra.mxu0 0
        %3697 = vmatpush.bf16.msra.mxu0 0
        %3698 = vmatpush.bf16.msra.mxu0 0
        %3699 = vmatpush.bf16.msra.mxu0 0
        %3700 = vmatpush.bf16.msra.mxu0 %v3688
        %3701 = vmatpush.bf16.msra.mxu0 %v3687
        %3702 = vmatmul.bf16.gmra.mxu0 %v3692
        %v3703 = vpop.f32.mrf.mxu0
        %v3704 = vadd.f32 0.0, %v3703
        %v3705 = vpop.f32.mrf.mxu0
        %v3706 = vadd.f32 0.0, %v3705
        %3707 = vdwg.mxu0
        %v3708 = vadd.f32 %v3588, %v3618
        %v3709 = vadd.f32 %v3589, %v3620
        %v3710 = vadd.f32 %v3590, %v3644
        %v3711 = vadd.f32 %v3591, %v3646
        %v3712 = vadd.f32 %v3592, %v3670
        %v3713 = vadd.f32 %v3593, %v3672
        %v3714 = vadd.f32 %v3594, %v3704
        %v3715 = vadd.f32 %v3595, %v3706
        %v3720 = vunpack.c.l.b16 %v771
        %v3721 = vunpack.c.l.b16 %v772
        %v3722 = vunpack.c.l.b16 %v773
        %v3723 = vunpack.c.l.b16 %v774
        %v3724 = vpack.c.b16 %v3721, %v3720
        %v3725 = vpack.c.b16 %v3723, %v3722
        %3728 = vmatpush.bf16.msra.mxu0 0
        %3729 = vmatpush.bf16.msra.mxu0 0
        %3730 = vmatpush.bf16.msra.mxu0 0
        %3731 = vmatpush.bf16.msra.mxu0 0
        %3732 = vmatpush.bf16.msra.mxu0 0
        %3733 = vmatpush.bf16.msra.mxu0 0
        %3734 = vmatpush.bf16.msra.mxu0 %v3725
        %3735 = vmatpush.bf16.msra.mxu0 %v3724
        %3736 = vmatmul.bf16.gmra.mxu0 %v1210
        %v3737 = vpop.f32.mrf.mxu0
        %v3738 = vadd.f32 0.0, %v3737
        %v3739 = vpop.f32.mrf.mxu0
        %v3740 = vadd.f32 0.0, %v3739
        %3741 = vdwg.mxu0
        %v3746 = vunpack.c.l.b16 %v775
        %v3747 = vunpack.c.l.b16 %v776
        %v3748 = vunpack.c.l.b16 %v777
        %v3749 = vunpack.c.l.b16 %v778
        %v3750 = vpack.c.b16 %v3747, %v3746
        %v3751 = vpack.c.b16 %v3749, %v3748
        %3754 = vmatpush.bf16.msra.mxu0 0
        %3755 = vmatpush.bf16.msra.mxu0 0
        %3756 = vmatpush.bf16.msra.mxu0 0
        %3757 = vmatpush.bf16.msra.mxu0 0
        %3758 = vmatpush.bf16.msra.mxu0 0
        %3759 = vmatpush.bf16.msra.mxu0 0
        %3760 = vmatpush.bf16.msra.mxu0 %v3751
        %3761 = vmatpush.bf16.msra.mxu0 %v3750
        %3762 = vmatmul.bf16.gmra.mxu0 %v1244
        %v3763 = vpop.f32.mrf.mxu0
        %v3764 = vadd.f32 0.0, %v3763
        %v3765 = vpop.f32.mrf.mxu0
        %v3766 = vadd.f32 0.0, %v3765
        %3767 = vdwg.mxu0
        %v3772 = vunpack.c.l.b16 %v779
        %v3773 = vunpack.c.l.b16 %v780
        %v3774 = vunpack.c.l.b16 %v781
        %v3775 = vunpack.c.l.b16 %v782
        %v3776 = vpack.c.b16 %v3773, %v3772
        %v3777 = vpack.c.b16 %v3775, %v3774
        %3780 = vmatpush.bf16.msra.mxu0 0
        %3781 = vmatpush.bf16.msra.mxu0 0
        %3782 = vmatpush.bf16.msra.mxu0 0
        %3783 = vmatpush.bf16.msra.mxu0 0
        %3784 = vmatpush.bf16.msra.mxu0 0
        %3785 = vmatpush.bf16.msra.mxu0 0
        %3786 = vmatpush.bf16.msra.mxu0 %v3777
        %3787 = vmatpush.bf16.msra.mxu0 %v3776
        %3788 = vmatmul.bf16.gmra.mxu0 %v2612
        %v3789 = vpop.f32.mrf.mxu0
        %v3790 = vadd.f32 0.0, %v3789
        %v3791 = vpop.f32.mrf.mxu0
        %v3792 = vadd.f32 0.0, %v3791
        %3793 = vdwg.mxu0
        %v3796 = vunpack.c.l.b16 %v363
        %v3797 = vunpack.c.l.b16 %v364
        %v3798 = vpack.c.b16 %v3797, %v3796
        %v3803 = vunpack.c.l.b16 %v783
        %v3804 = vunpack.c.l.b16 %v784
        %v3805 = vunpack.c.l.b16 %v785
        %v3806 = vunpack.c.l.b16 %v786
        %v3807 = vpack.c.b16 %v3804, %v3803
        %v3808 = vpack.c.b16 %v3806, %v3805
        %v3812 = vsel %vm868, %v3798, 0
        %3814 = vmatpush.bf16.msra.mxu0 0
        %3815 = vmatpush.bf16.msra.mxu0 0
        %3816 = vmatpush.bf16.msra.mxu0 0
        %3817 = vmatpush.bf16.msra.mxu0 0
        %3818 = vmatpush.bf16.msra.mxu0 0
        %3819 = vmatpush.bf16.msra.mxu0 0
        %3820 = vmatpush.bf16.msra.mxu0 %v3808
        %3821 = vmatpush.bf16.msra.mxu0 %v3807
        %3822 = vmatmul.bf16.gmra.mxu0 %v3812
        %v3823 = vpop.f32.mrf.mxu0
        %v3824 = vadd.f32 0.0, %v3823
        %v3825 = vpop.f32.mrf.mxu0
        %v3826 = vadd.f32 0.0, %v3825
        %3827 = vdwg.mxu0
        %v3828 = vadd.f32 %v3708, %v3738
        %v3829 = vadd.f32 %v3709, %v3740
        %v3830 = vadd.f32 %v3710, %v3764
        %v3831 = vadd.f32 %v3711, %v3766
        %v3832 = vadd.f32 %v3712, %v3790
        %v3833 = vadd.f32 %v3713, %v3792
        %v3834 = vadd.f32 %v3714, %v3824
        %v3835 = vadd.f32 %v3715, %v3826
        %v3840 = vunpack.c.l.b16 %v787
        %v3841 = vunpack.c.l.b16 %v788
        %v3842 = vunpack.c.l.b16 %v789
        %v3843 = vunpack.c.l.b16 %v790
        %v3844 = vpack.c.b16 %v3841, %v3840
        %v3845 = vpack.c.b16 %v3843, %v3842
        %3848 = vmatpush.bf16.msra.mxu0 0
        %3849 = vmatpush.bf16.msra.mxu0 0
        %3850 = vmatpush.bf16.msra.mxu0 0
        %3851 = vmatpush.bf16.msra.mxu0 0
        %3852 = vmatpush.bf16.msra.mxu0 0
        %3853 = vmatpush.bf16.msra.mxu0 0
        %3854 = vmatpush.bf16.msra.mxu0 %v3845
        %3855 = vmatpush.bf16.msra.mxu0 %v3844
        %3856 = vmatmul.bf16.gmra.mxu0 %v1354
        %v3857 = vpop.f32.mrf.mxu0
        %v3858 = vadd.f32 0.0, %v3857
        %v3859 = vpop.f32.mrf.mxu0
        %v3860 = vadd.f32 0.0, %v3859
        %3861 = vdwg.mxu0
        %v3866 = vunpack.c.l.b16 %v791
        %v3867 = vunpack.c.l.b16 %v792
        %v3868 = vunpack.c.l.b16 %v793
        %v3869 = vunpack.c.l.b16 %v794
        %v3870 = vpack.c.b16 %v3867, %v3866
        %v3871 = vpack.c.b16 %v3869, %v3868
        %3874 = vmatpush.bf16.msra.mxu0 0
        %3875 = vmatpush.bf16.msra.mxu0 0
        %3876 = vmatpush.bf16.msra.mxu0 0
        %3877 = vmatpush.bf16.msra.mxu0 0
        %3878 = vmatpush.bf16.msra.mxu0 0
        %3879 = vmatpush.bf16.msra.mxu0 0
        %3880 = vmatpush.bf16.msra.mxu0 %v3871
        %3881 = vmatpush.bf16.msra.mxu0 %v3870
        %3882 = vmatmul.bf16.gmra.mxu0 %v1388
        %v3883 = vpop.f32.mrf.mxu0
        %v3884 = vadd.f32 0.0, %v3883
        %v3885 = vpop.f32.mrf.mxu0
        %v3886 = vadd.f32 0.0, %v3885
        %3887 = vdwg.mxu0
        %v3892 = vunpack.c.l.b16 %v795
        %v3893 = vunpack.c.l.b16 %v796
        %v3894 = vunpack.c.l.b16 %v797
        %v3895 = vunpack.c.l.b16 %v798
        %v3896 = vpack.c.b16 %v3893, %v3892
        %v3897 = vpack.c.b16 %v3895, %v3894
        %3900 = vmatpush.bf16.msra.mxu0 0
        %3901 = vmatpush.bf16.msra.mxu0 0
        %3902 = vmatpush.bf16.msra.mxu0 0
        %3903 = vmatpush.bf16.msra.mxu0 0
        %3904 = vmatpush.bf16.msra.mxu0 0
        %3905 = vmatpush.bf16.msra.mxu0 0
        %3906 = vmatpush.bf16.msra.mxu0 %v3897
        %3907 = vmatpush.bf16.msra.mxu0 %v3896
        %3908 = vmatmul.bf16.gmra.mxu0 %v2732
        %v3909 = vpop.f32.mrf.mxu0
        %v3910 = vadd.f32 0.0, %v3909
        %v3911 = vpop.f32.mrf.mxu0
        %v3912 = vadd.f32 0.0, %v3911
        %3913 = vdwg.mxu0
        %v3916 = vunpack.c.l.b16 %v385
        %v3917 = vunpack.c.l.b16 %v386
        %v3918 = vpack.c.b16 %v3917, %v3916
        %v3923 = vunpack.c.l.b16 %v799
        %v3924 = vunpack.c.l.b16 %v800
        %v3925 = vunpack.c.l.b16 %v801
        %v3926 = vunpack.c.l.b16 %v802
        %v3927 = vpack.c.b16 %v3924, %v3923
        %v3928 = vpack.c.b16 %v3926, %v3925
        %v3932 = vsel %vm868, %v3918, 0
        %3934 = vmatpush.bf16.msra.mxu0 0
        %3935 = vmatpush.bf16.msra.mxu0 0
        %3936 = vmatpush.bf16.msra.mxu0 0
        %3937 = vmatpush.bf16.msra.mxu0 0
        %3938 = vmatpush.bf16.msra.mxu0 0
        %3939 = vmatpush.bf16.msra.mxu0 0
        %3940 = vmatpush.bf16.msra.mxu0 %v3928
        %3941 = vmatpush.bf16.msra.mxu0 %v3927
        %3942 = vmatmul.bf16.gmra.mxu0 %v3932
        %v3943 = vpop.f32.mrf.mxu0
        %v3944 = vadd.f32 0.0, %v3943
        %v3945 = vpop.f32.mrf.mxu0
        %v3946 = vadd.f32 0.0, %v3945
        %3947 = vdwg.mxu0
        %v3948 = vadd.f32 %v3828, %v3858
        %v3949 = vadd.f32 %v3829, %v3860
        %v3950 = vadd.f32 %v3830, %v3884
        %v3951 = vadd.f32 %v3831, %v3886
        %v3952 = vadd.f32 %v3832, %v3910
        %v3953 = vadd.f32 %v3833, %v3912
        %v3954 = vadd.f32 %v3834, %v3944
        %v3955 = vadd.f32 %v3835, %v3946
        %v3960 = vunpack.c.l.b16 %v803
        %v3961 = vunpack.c.l.b16 %v804
        %v3962 = vunpack.c.l.b16 %v805
        %v3963 = vunpack.c.l.b16 %v806
        %v3964 = vpack.c.b16 %v3961, %v3960
        %v3965 = vpack.c.b16 %v3963, %v3962
        %3968 = vmatpush.bf16.msra.mxu0 0
        %3969 = vmatpush.bf16.msra.mxu0 0
        %3970 = vmatpush.bf16.msra.mxu0 0
        %3971 = vmatpush.bf16.msra.mxu0 0
        %3972 = vmatpush.bf16.msra.mxu0 0
        %3973 = vmatpush.bf16.msra.mxu0 0
        %3974 = vmatpush.bf16.msra.mxu0 %v3965
        %3975 = vmatpush.bf16.msra.mxu0 %v3964
        %3976 = vmatmul.bf16.gmra.mxu0 %v1498
        %v3977 = vpop.f32.mrf.mxu0
        %v3978 = vadd.f32 0.0, %v3977
        %v3979 = vpop.f32.mrf.mxu0
        %v3980 = vadd.f32 0.0, %v3979
        %3981 = vdwg.mxu0
        %v3986 = vunpack.c.l.b16 %v807
        %v3987 = vunpack.c.l.b16 %v808
        %v3988 = vunpack.c.l.b16 %v809
        %v3989 = vunpack.c.l.b16 %v810
        %v3990 = vpack.c.b16 %v3987, %v3986
        %v3991 = vpack.c.b16 %v3989, %v3988
        %3994 = vmatpush.bf16.msra.mxu0 0
        %3995 = vmatpush.bf16.msra.mxu0 0
        %3996 = vmatpush.bf16.msra.mxu0 0
        %3997 = vmatpush.bf16.msra.mxu0 0
        %3998 = vmatpush.bf16.msra.mxu0 0
        %3999 = vmatpush.bf16.msra.mxu0 0
        %4000 = vmatpush.bf16.msra.mxu0 %v3991
        %4001 = vmatpush.bf16.msra.mxu0 %v3990
        %4002 = vmatmul.bf16.gmra.mxu0 %v1532
        %v4003 = vpop.f32.mrf.mxu0
        %v4004 = vadd.f32 0.0, %v4003
        %v4005 = vpop.f32.mrf.mxu0
        %v4006 = vadd.f32 0.0, %v4005
        %4007 = vdwg.mxu0
        %v4012 = vunpack.c.l.b16 %v811
        %v4013 = vunpack.c.l.b16 %v812
        %v4014 = vunpack.c.l.b16 %v813
        %v4015 = vunpack.c.l.b16 %v814
        %v4016 = vpack.c.b16 %v4013, %v4012
        %v4017 = vpack.c.b16 %v4015, %v4014
        %4020 = vmatpush.bf16.msra.mxu0 0
        %4021 = vmatpush.bf16.msra.mxu0 0
        %4022 = vmatpush.bf16.msra.mxu0 0
        %4023 = vmatpush.bf16.msra.mxu0 0
        %4024 = vmatpush.bf16.msra.mxu0 0
        %4025 = vmatpush.bf16.msra.mxu0 0
        %4026 = vmatpush.bf16.msra.mxu0 %v4017
        %4027 = vmatpush.bf16.msra.mxu0 %v4016
        %4028 = vmatmul.bf16.gmra.mxu0 %v2852
        %v4029 = vpop.f32.mrf.mxu0
        %v4030 = vadd.f32 0.0, %v4029
        %v4031 = vpop.f32.mrf.mxu0
        %v4032 = vadd.f32 0.0, %v4031
        %4033 = vdwg.mxu0
        %v4036 = vunpack.c.l.b16 %v407
        %v4037 = vunpack.c.l.b16 %v408
        %v4038 = vpack.c.b16 %v4037, %v4036
        %v4043 = vunpack.c.l.b16 %v815
        %v4044 = vunpack.c.l.b16 %v816
        %v4045 = vunpack.c.l.b16 %v817
        %v4046 = vunpack.c.l.b16 %v818
        %v4047 = vpack.c.b16 %v4044, %v4043
        %v4048 = vpack.c.b16 %v4046, %v4045
        %v4052 = vsel %vm868, %v4038, 0
        %4054 = vmatpush.bf16.msra.mxu0 0
        %4055 = vmatpush.bf16.msra.mxu0 0
        %4056 = vmatpush.bf16.msra.mxu0 0
        %4057 = vmatpush.bf16.msra.mxu0 0
        %4058 = vmatpush.bf16.msra.mxu0 0
        %4059 = vmatpush.bf16.msra.mxu0 0
        %4060 = vmatpush.bf16.msra.mxu0 %v4048
        %4061 = vmatpush.bf16.msra.mxu0 %v4047
        %4062 = vmatmul.bf16.gmra.mxu0 %v4052
        %v4063 = vpop.f32.mrf.mxu0
        %v4064 = vadd.f32 0.0, %v4063
        %v4065 = vpop.f32.mrf.mxu0
        %v4066 = vadd.f32 0.0, %v4065
        %4067 = vdwg.mxu0
        %v4068 = vadd.f32 %v3948, %v3978
        %v4069 = vadd.f32 %v3949, %v3980
        %v4070 = vadd.f32 %v3950, %v4004
        %v4071 = vadd.f32 %v3951, %v4006
        %v4072 = vadd.f32 %v3952, %v4030
        %v4073 = vadd.f32 %v3953, %v4032
        %v4074 = vadd.f32 %v3954, %v4064
        %v4075 = vadd.f32 %v3955, %v4066
        %v4076 = vld [vmem:[%s2] sm:$0x1]
        %v4078 = vperm.slane %v4076, 0
        %v4080 = vmul.f32 %v4068, %v4078
        %v4081 = vmul.f32 %v4069, %v4078
        %v4082 = vmul.f32 %v4070, %v4078
        %v4083 = vmul.f32 %v4071, %v4078
        %v4084 = vmul.f32 %v4072, %v4078
        %v4085 = vmul.f32 %v4073, %v4078
        %v4086 = vmul.f32 %v4074, %v4078
        %v4087 = vmul.f32 %v4075, %v4078
        %v4088 = vld [vmem:[%s3] sm:$0x1]
        %v4090 = vperm.slane %v4088, 0
        %v4092 = vadd.f32 %v4080, %v4090
        %v4093 = vadd.f32 %v4081, %v4090
        %v4094 = vadd.f32 %v4082, %v4090
        %v4095 = vadd.f32 %v4083, %v4090
        %v4096 = vadd.f32 %v4084, %v4090
        %v4097 = vadd.f32 %v4085, %v4090
        %v4098 = vadd.f32 %v4086, %v4090
        %v4099 = vadd.f32 %v4087, %v4090
        %v4100 = vmax.f32 %v4092, 0.0
        %v4101 = vmax.f32 %v4093, 0.0
        %v4102 = vmax.f32 %v4094, 0.0
        %v4103 = vmax.f32 %v4095, 0.0
        %v4104 = vmax.f32 %v4096, 0.0
        %v4105 = vmax.f32 %v4097, 0.0
        %v4106 = vmax.f32 %v4098, 0.0
        %v4107 = vmax.f32 %v4099, 0.0
        %v4108 = vpack.c.bf16 %v4100, %v4100
        %v4109 = vpack.c.bf16 %v4101, %v4101
        %v4110 = vpack.c.bf16 %v4102, %v4102
        %v4111 = vpack.c.bf16 %v4103, %v4103
        %v4112 = vpack.c.bf16 %v4104, %v4104
        %v4113 = vpack.c.bf16 %v4105, %v4105
        %v4114 = vpack.c.bf16 %v4106, %v4106
        %v4115 = vpack.c.bf16 %v4107, %v4107
        %v4118 = vunpack.c.l.b16 %v4110
        %v4119 = vunpack.c.l.b16 %v4111
        %v4120 = vpack.c.b16 %v4119, %v4118
        %v4129 = vunpack.c.l.b16 %v827
        %v4130 = vunpack.c.l.b16 %v828
        %v4131 = vunpack.c.l.b16 %v829
        %v4132 = vunpack.c.l.b16 %v830
        %v4133 = vunpack.c.l.b16 %v831
        %v4134 = vunpack.c.l.b16 %v832
        %v4135 = vunpack.c.l.b16 %v833
        %v4136 = vunpack.c.l.b16 %v834
        %v4137 = vpack.c.b16 %v4130, %v4129
        %v4138 = vpack.c.b16 %v4132, %v4131
        %v4139 = vpack.c.b16 %v4134, %v4133
        %v4140 = vpack.c.b16 %v4136, %v4135
        %vm4145 = vcmask 523264
        %v4147 = vsel %vm4145, %v4120, 0
        %4149 = vmatpush.bf16.msra.mxu0 0
        %4150 = vmatpush.bf16.msra.mxu0 0
        %4151 = vmatpush.bf16.msra.mxu0 0
        %4152 = vmatpush.bf16.msra.mxu0 0
        %4153 = vmatpush.bf16.msra.mxu0 %v4140
        %4154 = vmatpush.bf16.msra.mxu0 %v4139
        %4155 = vmatpush.bf16.msra.mxu0 %v4138
        %4156 = vmatpush.bf16.msra.mxu0 %v4137
        %4157 = vmatmul.bf16.gmra.mxu0 %v4147
        %v4158 = vpop.f32.mrf.mxu0
        %v4159 = vadd.f32 0.0, %v4158
        %v4160 = vpop.f32.mrf.mxu0
        %v4161 = vadd.f32 0.0, %v4160
        %4162 = vdwg.mxu0
        %v4165 = vunpack.c.l.b16 %v4108
        %v4166 = vunpack.c.l.b16 %v4109
        %v4167 = vpack.c.b16 %v4166, %v4165
        %v4176 = vunpack.c.l.b16 %v819
        %v4177 = vunpack.c.l.b16 %v820
        %v4178 = vunpack.c.l.b16 %v821
        %v4179 = vunpack.c.l.b16 %v822
        %v4180 = vunpack.c.l.b16 %v823
        %v4181 = vunpack.c.l.b16 %v824
        %v4182 = vunpack.c.l.b16 %v825
        %v4183 = vunpack.c.l.b16 %v826
        %v4184 = vpack.c.b16 %v4177, %v4176
        %v4185 = vpack.c.b16 %v4179, %v4178
        %v4186 = vpack.c.b16 %v4181, %v4180
        %v4187 = vpack.c.b16 %v4183, %v4182
        %v4193 = vsel %vm4145, %v4167, 0
        %4195 = vmatpush.bf16.msra.mxu0 0
        %4196 = vmatpush.bf16.msra.mxu0 0
        %4197 = vmatpush.bf16.msra.mxu0 0
        %4198 = vmatpush.bf16.msra.mxu0 0
        %4199 = vmatpush.bf16.msra.mxu0 %v4187
        %4200 = vmatpush.bf16.msra.mxu0 %v4186
        %4201 = vmatpush.bf16.msra.mxu0 %v4185
        %4202 = vmatpush.bf16.msra.mxu0 %v4184
        %4203 = vmatmul.bf16.gmra.mxu0 %v4193
        %v4204 = vpop.f32.mrf.mxu0
        %v4205 = vadd.f32 %v4159, %v4204
        %v4206 = vpop.f32.mrf.mxu0
        %v4207 = vadd.f32 %v4161, %v4206
        %4208 = vdwg.mxu0
        %v4211 = vunpack.c.l.b16 %v4112
        %v4212 = vunpack.c.l.b16 %v4113
        %v4213 = vpack.c.b16 %v4212, %v4211
        %v4222 = vunpack.c.l.b16 %v835
        %v4223 = vunpack.c.l.b16 %v836
        %v4224 = vunpack.c.l.b16 %v837
        %v4225 = vunpack.c.l.b16 %v838
        %v4226 = vunpack.c.l.b16 %v839
        %v4227 = vunpack.c.l.b16 %v840
        %v4228 = vunpack.c.l.b16 %v841
        %v4229 = vunpack.c.l.b16 %v842
        %v4230 = vpack.c.b16 %v4223, %v4222
        %v4231 = vpack.c.b16 %v4225, %v4224
        %v4232 = vpack.c.b16 %v4227, %v4226
        %v4233 = vpack.c.b16 %v4229, %v4228
        %v4239 = vsel %vm4145, %v4213, 0
        %4241 = vmatpush.bf16.msra.mxu0 0
        %4242 = vmatpush.bf16.msra.mxu0 0
        %4243 = vmatpush.bf16.msra.mxu0 0
        %4244 = vmatpush.bf16.msra.mxu0 0
        %4245 = vmatpush.bf16.msra.mxu0 %v4233
        %4246 = vmatpush.bf16.msra.mxu0 %v4232
        %4247 = vmatpush.bf16.msra.mxu0 %v4231
        %4248 = vmatpush.bf16.msra.mxu0 %v4230
        %4249 = vmatmul.bf16.gmra.mxu0 %v4239
        %v4250 = vpop.f32.mrf.mxu0
        %v4251 = vadd.f32 0.0, %v4250
        %v4252 = vpop.f32.mrf.mxu0
        %v4253 = vadd.f32 0.0, %v4252
        %4254 = vdwg.mxu0
        %v4255 = vadd.f32 %v4205, %v4251
        %v4256 = vadd.f32 %v4207, %v4253
        %v4259 = vunpack.c.l.b16 %v4114
        %v4260 = vunpack.c.l.b16 %v4115
        %v4261 = vpack.c.b16 %v4260, %v4259
        %v4270 = vunpack.c.l.b16 %v843
        %v4271 = vunpack.c.l.b16 %v844
        %v4272 = vunpack.c.l.b16 %v845
        %v4273 = vunpack.c.l.b16 %v846
        %v4274 = vunpack.c.l.b16 %v847
        %v4275 = vunpack.c.l.b16 %v848
        %v4276 = vunpack.c.l.b16 %v849
        %v4277 = vunpack.c.l.b16 %v850
        %v4278 = vpack.c.b16 %v4271, %v4270
        %v4279 = vpack.c.b16 %v4273, %v4272
        %v4280 = vpack.c.b16 %v4275, %v4274
        %v4281 = vpack.c.b16 %v4277, %v4276
        %v4287 = vsel %vm4145, %v4261, 0
        %4289 = vmatpush.bf16.msra.mxu0 0
        %4290 = vmatpush.bf16.msra.mxu0 0
        %4291 = vmatpush.bf16.msra.mxu0 0
        %4292 = vmatpush.bf16.msra.mxu0 0
        %4293 = vmatpush.bf16.msra.mxu0 %v4281
        %4294 = vmatpush.bf16.msra.mxu0 %v4280
        %4295 = vmatpush.bf16.msra.mxu0 %v4279
        %4296 = vmatpush.bf16.msra.mxu0 %v4278
        %4297 = vmatmul.bf16.gmra.mxu0 %v4287
        %v4298 = vpop.f32.mrf.mxu0
        %v4299 = vadd.f32 0.0, %v4298
        %v4300 = vpop.f32.mrf.mxu0
        %v4301 = vadd.f32 0.0, %v4300
        %4302 = vdwg.mxu0
        %v4303 = vadd.f32 %v4255, %v4299
        %v4304 = vadd.f32 %v4256, %v4301
        %v4305 = vld [vmem:[%s5] sm:$0x1]
        %v4307 = vperm.slane %v4305, 0
        %v4309 = vmul.f32 %v4303, %v4307
        %v4310 = vmul.f32 %v4304, %v4307
        %v4311 = vld [vmem:[%s6] sm:$0x1]
        %v4313 = vperm.slane %v4311, 0
        %v4315 = vadd.f32 %v4309, %v4313
        %v4316 = vadd.f32 %v4310, %v4313
        %v4317 = vmax.f32 %v4315, 0.0
        %v4318 = vmax.f32 %v4316, 0.0
        %4319 = vst.msk [vmem:[%s296] sm:$0xff] %vm4145, %v4317
        %4320 = vst.msk [vmem:[%s296 + $0x8] sm:$0xff] %vm4145, %v4318
        %s4321 = sand.u32 %s197, 1
        %s4322 = scalar_lea.sflag [#allocation3], %s4321
        %s4323 = sand.u32 %s197, 1
        %s4324 = smul.addr %s4323, 16
        %s4325 = scalar_lea.vmem [#allocation2], %s4324
        // Predicated region
        $region49: #{a_call__.3} parent=47 // pred_check
          %p4326 = pneg %p207
        $region50: #{a_call__.3} parent=47 // pred_check_branch
          %4328 = sbr.rel (%p4326) target = $region52
        $region51: #{a_call__.3} parent=47 // pred_region
          %s4329 = smul.u32 2, %s26
          %4331 = vsyncadd %s4322, 0
          %s4332 = smul.addr %s25, 2
          %s4333 = sadd.s32 %s4329, %s4332
          %s4334 = smul.addr %s4333, 8
          %s4335 = scalar_lea.hbm %s7, %s4334
          %s4336 = sshll.u32 %s4325, 4
          %s4337 = int_to_ptr.vmem [resolvable:$true] %s4336
          %s4338 = sshll.u32 %s4335, 4
          %s4339 = int_to_ptr.hbm [resolvable:$true] %s4338
          %4344 = dma.vmem_to_hbm [thread:$0]  %s4337, 256, %s4339, %s4322, 128, 128, 8
        $region52: #{a_call__.3} parent=47 // pred_fallthru
          _
      $region48: #{a_call__.3} parent=5 // pred_fallthru
        _
      %p4345 = scmp.le.s32.totalorder 2, %s16
      // Predicated region
      $region53: #{a_call__.3} parent=5 // pred_check
        %p4346 = pneg %p4345
      $region54: #{a_call__.3} parent=5 // pred_check_branch
        %4348 = sbr.rel (%p4346) target = $region56
      $region55: #{a_call__.3} parent=5 // pred_region
        %s4349 = ssub.s32 %s16, 2
        // Predicated region
        $region57: #{a_call__.3} parent=55 // pred_check
          %p4350 = pneg %p213
        $region58: #{a_call__.3} parent=55 // pred_check_branch
          %4352 = sbr.rel (%p4350) target = $region60
        $region59: #{a_call__.3} parent=55 // pred_region
          %s4353 = sand.u32 %s198, 1
          %s4354 = scalar_lea.sflag [#allocation3], %s4353
          %s4355 = sand.u32 %s198, 1
          %s4356 = smul.addr %s4355, 16
          %s4357 = scalar_lea.vmem [#allocation2], %s4356
          %4359 = dma.done %s4354, 256
        $region60: #{a_call__.3} parent=55 // pred_fallthru
          _
      $region56: #{a_call__.3} parent=5 // pred_fallthru
        _
    $region6: #{a_call__.3} parent=1 // loop_footer
      %s20 = sadd.s32 1, %s16
    $region7: #{a_call__.3} parent=1 // loop_footer_branch
      %15 = sbr.rel target = $region3
    $region8: #{a_call__.3} parent=1 // loop_exit
      _
    %4360 = vsyncpa [#allocation3], 1
    %s4361 = scalar_lea.sflag [#allocation3], 1
    %4362 = vsyncpa %s4361, 1

</llo_original>
